<compile_context>
chip_gen: v6e
topology: v6e:2x2x1
jax: 0.10.0
libtpu: 0.0.40
codegen_flags: <defaults>
</compile_context>

<pallas_src>
import jax
import jax.numpy as jnp
from jax import lax
from jax.experimental import pallas as pl
from jax.experimental.pallas import tpu as pltpu

HIDDEN = 128                   # hidden_dim (module default)
HIDDEN2 = HIDDEN // 2          # 64
NUM_COMPONENTS = 5
P = 2 * NUM_COMPONENTS         # 10 outputs per projection
LIB_SIZE = 20
LIB_PAD = 32                   # embedding rows padded 21 -> 32
OUT_PAD = 128                  # lane-dense output slab width (60 cols used)
NUM_GIN_LAYERS = 3
BIAS_ROWS = 16                 # packed bias slab (9 rows used, pad to 16)

MM_DTYPE = jnp.bfloat16        # MXU input dtype (f32 accumulation)
GRAPHS_PER_BLOCK = 16          # graphs fused per grid step


# ---------------------------------------------------------------------------
# Fused forward kernel (one grid step = GRAPHS_PER_BLOCK graphs)
# ---------------------------------------------------------------------------
def fused_kernel(ids_ref, src_ref, dst_ref, emb_ref,
                 gw1_ref, gw2_ref, hw1_ref, hw2_ref, wp_ref, bias_ref,
                 out_ref):
    m = ids_ref.shape[0]                      # nodes in this block
    e = src_ref.shape[0]                      # edges in this block

    # ---- embedding lookup: one-hot(ids) @ table, on the MXU ----
    lib_iota = lax.broadcasted_iota(jnp.int32, (m, LIB_PAD), 1)
    onehot_ids = (lib_iota == ids_ref[...]).astype(MM_DTYPE)
    x = jnp.dot(onehot_ids, emb_ref[...], preferred_element_type=jnp.float32)

    # ---- dense (A + I), block-diagonal over the fused graphs, built once ---
    # A[i, j] = #edges j -> i  (GIN sum aggregation over incoming edges).
    # TODO(synk): src is an (E,1) column; its lane-broadcast in the compare is
    # XLU-path work.  Making it lane-dense is a micro-win at this size.
    node_iota_e = lax.broadcasted_iota(jnp.int32, (e, m), 1)
    oh_src = (node_iota_e == src_ref[...]).astype(MM_DTYPE)        # (E, M)
    node_iota_n = lax.broadcasted_iota(jnp.int32, (m, e), 0)
    oh_dst_t = (node_iota_n == dst_ref[...]).astype(MM_DTYPE)      # (M, E)
    a = jnp.dot(oh_dst_t, oh_src, preferred_element_type=jnp.float32)
    eye = (lax.broadcasted_iota(jnp.int32, (m, m), 0) ==
           lax.broadcasted_iota(jnp.int32, (m, m), 1)).astype(jnp.float32)
    a_plus_i = (a + eye).astype(MM_DTYPE)

    # ---- 3 x GINConv (eps=0): x <- MLP((A + I) @ x)
    # MLP = Linear -> ReLU -> BN(folded into W2/b2) -> Dropout(id) -> Linear
    for l in range(NUM_GIN_LAYERS):
        h = jnp.dot(a_plus_i, x.astype(MM_DTYPE),
                    preferred_element_type=jnp.float32)
        h = jnp.dot(h.astype(MM_DTYPE), gw1_ref[l],
                    preferred_element_type=jnp.float32)
        h = jnp.maximum(h + bias_ref[pl.ds(l, 1), :], 0.0)
        x = jnp.dot(h.astype(MM_DTYPE), gw2_ref[l],
                    preferred_element_type=jnp.float32)
        x = x + bias_ref[pl.ds(NUM_GIN_LAYERS + l, 1), :]

    # ---- both heads fused: [von-Mises(64) | Gaussian(64)] = 128 lanes ------
    # head = Linear+BN1(folded) -> Dropout(id) -> ReLU -> Linear+BN2(folded)
    h = jnp.dot(x.astype(MM_DTYPE), hw1_ref[...],
                preferred_element_type=jnp.float32)
    h = jnp.maximum(h + bias_ref[pl.ds(6, 1), :], 0.0)
    h = jnp.dot(h.astype(MM_DTYPE), hw2_ref[...],
                preferred_element_type=jnp.float32)
    h = h + bias_ref[pl.ds(7, 1), :]

    # ---- all six projections as one block-diagonal (128, 128) matmul -------
    raw = jnp.dot(h.astype(MM_DTYPE), wp_ref[...],
                  preferred_element_type=jnp.float32)
    raw = raw + bias_ref[pl.ds(8, 1), :]

    # cols: [wl_vm | wl_ga | me_vm | me_ga | ka_vm | ka_ga | zeros]
    lane = lax.broadcasted_iota(jnp.int32, raw.shape, 1)
    is_mean = (lane >= 2 * P) & (lane < 4 * P)
    is_kappa = (lane >= 4 * P) & (lane < 6 * P)
    softplus = jnp.maximum(raw, 0.0) + jnp.log1p(jnp.exp(-jnp.abs(raw)))
    out = jnp.where(is_mean, jnp.tanh(raw) * 180.0, raw)
    out = jnp.where(is_kappa, softplus, out)
    out_ref[...] = out


# ---------------------------------------------------------------------------
# Parameter init (deterministic, synthetic), BN folding, head fusion
# ---------------------------------------------------------------------------
def _linear(key, fan_in, fan_out):
    k1, k2 = jax.random.split(key)
    w = 0.1 * jax.random.normal(k1, (fan_in, fan_out), jnp.float32)
    b = 0.1 * jax.random.normal(k2, (fan_out,), jnp.float32)
    return w, b


def _batchnorm(key, dim):
    # Eval-mode fold (general formula, correct for loaded running stats):
    #   scale = gamma / sqrt(var + eps), shift = beta - mean * scale
    k1, k2 = jax.random.split(key)
    gamma = 1.0 + 0.1 * jax.random.normal(k1, (dim,), jnp.float32)
    beta = 0.1 * jax.random.normal(k2, (dim,), jnp.float32)
    running_mean = jnp.zeros((dim,), jnp.float32)
    running_var = jnp.ones((dim,), jnp.float32)
    eps = 1e-5
    scale = gamma / jnp.sqrt(running_var + eps)
    shift = beta - running_mean * scale
    return scale, shift


def init_params(key):
    keys = jax.random.split(key, 40)
    ki = iter(keys)
    params = {}

    emb = 0.1 * jax.random.normal(next(ki), (LIB_SIZE + 1, HIDDEN), jnp.float32)
    emb = jnp.zeros((LIB_PAD, HIDDEN), jnp.float32).at[:LIB_SIZE + 1].set(emb)
    params["emb"] = emb.astype(MM_DTYPE)

    # --- GIN layers: BN (post-ReLU) folded into the second Linear ---
    gw1s, gw2s, gb1s, gb2s = [], [], [], []
    for _ in range(NUM_GIN_LAYERS):
        w1, b1 = _linear(next(ki), HIDDEN, HIDDEN)
        s1, t1 = _batchnorm(next(ki), HIDDEN)
        w2, b2 = _linear(next(ki), HIDDEN, HIDDEN)
        gw1s.append(w1)
        gb1s.append(b1)
        gw2s.append(s1[:, None] * w2)            # W2' = diag(s1) @ W2
        gb2s.append(t1 @ w2 + b2)                # b2' = t1 @ W2 + b2
    params["gw1"] = jnp.stack(gw1s).astype(MM_DTYPE)
    params["gw2"] = jnp.stack(gw2s).astype(MM_DTYPE)

    # --- heads: BN1 folded into Linear1, BN2 folded into Linear2 ---
    def make_head():
        w1, b1 = _linear(next(ki), HIDDEN, HIDDEN2)
        s1, t1 = _batchnorm(next(ki), HIDDEN2)
        w2, b2 = _linear(next(ki), HIDDEN2, HIDDEN2)
        s2, t2 = _batchnorm(next(ki), HIDDEN2)
        ww, bw = _linear(next(ki), HIDDEN2, P)
        wm, bm = _linear(next(ki), HIDDEN2, P)
        wk, bk = _linear(next(ki), HIDDEN2, P)
        return dict(w1=w1 * s1[None, :], b1=b1 * s1 + t1,
                    w2=w2 * s2[None, :], b2=b2 * s2 + t2,
                    ww=ww, bw=bw, wm=wm, bm=bm, wk=wk, bk=bk)

    vm, ga = make_head(), make_head()
    HH = 2 * HIDDEN2

    hw1 = jnp.concatenate([vm["w1"], ga["w1"]], axis=1)           # (128, 128)
    hb1 = jnp.concatenate([vm["b1"], ga["b1"]])                   # (128,)
    hw2 = jnp.zeros((HH, HH), jnp.float32)
    hw2 = hw2.at[:HIDDEN2, :HIDDEN2].set(vm["w2"]).at[HIDDEN2:, HIDDEN2:].set(ga["w2"])
    hb2 = jnp.concatenate([vm["b2"], ga["b2"]])

    wp = jnp.zeros((HH, OUT_PAD), jnp.float32)
    wp = wp.at[:HIDDEN2, 0 * P:1 * P].set(vm["ww"]).at[HIDDEN2:, 1 * P:2 * P].set(ga["ww"])
    wp = wp.at[:HIDDEN2, 2 * P:3 * P].set(vm["wm"]).at[HIDDEN2:, 3 * P:4 * P].set(ga["wm"])
    wp = wp.at[:HIDDEN2, 4 * P:5 * P].set(vm["wk"]).at[HIDDEN2:, 5 * P:6 * P].set(ga["wk"])
    bp = jnp.zeros((OUT_PAD,), jnp.float32)
    bp = bp.at[0 * P:1 * P].set(vm["bw"]).at[1 * P:2 * P].set(ga["bw"])
    bp = bp.at[2 * P:3 * P].set(vm["bm"]).at[3 * P:4 * P].set(ga["bm"])
    bp = bp.at[4 * P:5 * P].set(vm["bk"]).at[5 * P:6 * P].set(ga["bk"])

    params["hw1"] = hw1.astype(MM_DTYPE)
    params["hw2"] = hw2.astype(MM_DTYPE)
    params["wp"] = wp.astype(MM_DTYPE)

    # --- all remaining biases packed into one f32 (16, 128) slab ---
    bias = jnp.zeros((BIAS_ROWS, HIDDEN), jnp.float32)
    for l in range(NUM_GIN_LAYERS):
        bias = bias.at[l].set(gb1s[l])
        bias = bias.at[NUM_GIN_LAYERS + l].set(gb2s[l])
    bias = bias.at[6].set(hb1).at[7].set(hb2).at[8].set(bp)
    params["bias"] = bias
    return params


# ---------------------------------------------------------------------------
# Forward pass: batched pallas_call + free wrapper-side slicing
#   node_ids   : (B, N_NODES) int32, tokens in [0, LIB_SIZE]
#   edge_index : (B, 2, E_MAX) int32, -1 padding for unused edges
# ---------------------------------------------------------------------------
def forward(params, node_ids, edge_index, graphs_per_block=GRAPHS_PER_BLOCK):
    b, n_nodes = node_ids.shape
    e_max = edge_index.shape[2]

    gpb = graphs_per_block
    b_pad = ((b + gpb - 1) // gpb) * gpb
    if b_pad != b:                              # pad batch with empty graphs
        node_ids = jnp.pad(node_ids, ((0, b_pad - b), (0, 0)))
        edge_index = jnp.pad(edge_index, ((0, b_pad - b), (0, 0), (0, 0)),
                             constant_values=-1)
    num_blocks = b_pad // gpb
    m_block = gpb * n_nodes
    e_block = gpb * e_max
    assert m_block % 8 == 0 and e_block % 8 == 0

    # Node ids pre-broadcast lane-dense over the one-hot width (tiny DMA).
    ids_b = jnp.broadcast_to(
        node_ids.astype(jnp.int32).reshape(num_blocks, m_block, 1),
        (num_blocks, m_block, LIB_PAD))

    # Edge endpoints offset into block-local node index space so the per-block
    # adjacency is block-diagonal across the fused graphs. -1 = padding.
    offs = (jnp.arange(b_pad, dtype=jnp.int32) % gpb * n_nodes)[:, None]
    src = edge_index[:, 0, :].astype(jnp.int32)
    dst = edge_index[:, 1, :].astype(jnp.int32)
    valid = (src >= 0) & (dst >= 0)
    src = jnp.where(valid, src + offs, -1).reshape(num_blocks, e_block, 1)
    dst = jnp.where(valid, dst + offs, -1).reshape(num_blocks, 1, e_block)

    const2 = lambda i: (0, 0)
    const3 = lambda i: (0, 0, 0)
    slab = pl.pallas_call(
        fused_kernel,
        out_shape=jax.ShapeDtypeStruct((b_pad * n_nodes, OUT_PAD), jnp.float32),
        grid=(num_blocks,),
        in_specs=[
            # per-block streamed inputs
            pl.BlockSpec((None, m_block, LIB_PAD), lambda i: (i, 0, 0)),
            pl.BlockSpec((None, e_block, 1), lambda i: (i, 0, 0)),
            pl.BlockSpec((None, 1, e_block), lambda i: (i, 0, 0)),
            # VMEM-resident weights (constant index map -> no re-DMA per step)
            pl.BlockSpec((LIB_PAD, HIDDEN), const2),                  # emb
            pl.BlockSpec((NUM_GIN_LAYERS, HIDDEN, HIDDEN), const3),   # gw1
            pl.BlockSpec((NUM_GIN_LAYERS, HIDDEN, HIDDEN), const3),   # gw2
            pl.BlockSpec((HIDDEN, HIDDEN), const2),                   # hw1
            pl.BlockSpec((HIDDEN, HIDDEN), const2),                   # hw2
            pl.BlockSpec((HIDDEN, OUT_PAD), const2),                  # wp
            pl.BlockSpec((BIAS_ROWS, HIDDEN), const2),                # biases
        ],
        out_specs=pl.BlockSpec((m_block, OUT_PAD), lambda i: (i, 0)),
        compiler_params=pltpu.CompilerParams(
            dimension_semantics=("parallel",)),   # shards across TCs on v7x
    )(ids_b, src, dst, params["emb"], params["gw1"], params["gw2"],
      params["hw1"], params["hw2"], params["wp"], params["bias"])

    slab = slab[: b * n_nodes]                   # drop padded graphs
    rs = lambda t: t.reshape(b * n_nodes, 2, NUM_COMPONENTS)
    wl_vm = rs(slab[:, 0 * P:1 * P])
    wl_ga = rs(slab[:, 1 * P:2 * P])
    me_vm = rs(slab[:, 2 * P:3 * P])
    me_ga = rs(slab[:, 3 * P:4 * P])
    ka_vm = rs(slab[:, 4 * P:5 * P])
    ka_ga = rs(slab[:, 5 * P:6 * P])
    return wl_vm, me_vm, ka_vm, wl_ga, me_ga, ka_ga


if __name__ == "__main__":
    key = jax.random.PRNGKey(0)
    k_param, k_nodes = jax.random.split(key)
    params = init_params(k_param)

    BATCH = 32           # graphs
    N_NODES = 16         # nodes per graph
    E_MAX = 32           # padded edges per graph

    node_ids = jax.random.randint(k_nodes, (BATCH, N_NODES), 0, LIB_SIZE + 1,
                                  jnp.int32)
    # Undirected chain per graph (both directions), -1 padded to E_MAX.
    s = jnp.arange(N_NODES - 1, dtype=jnp.int32)
    src1 = jnp.concatenate([s, s + 1])
    dst1 = jnp.concatenate([s + 1, s])
    pad = E_MAX - src1.shape[0]
    edge1 = jnp.stack([jnp.pad(src1, (0, pad), constant_values=-1),
                       jnp.pad(dst1, (0, pad), constant_values=-1)])
    edge_index = jnp.broadcast_to(edge1[None], (BATCH, 2, E_MAX)).astype(jnp.int32)

    fwd = jax.jit(forward)
    outs = fwd(params, node_ids, edge_index)
    outs = jax.block_until_ready(outs)

    expected = (BATCH * N_NODES, 2, NUM_COMPONENTS)
    assert all(o.shape == expected for o in outs), [o.shape for o in outs]
    assert all(bool(jnp.all(jnp.isfinite(o))) for o in outs)
    print("KERNEL_OK")
</pallas_src>

<mosaic_0001>
module attributes {stable_mosaic.version = 11 : i64} {
  func.func @fused_kernel(%arg0: i32, %arg1: memref<1x256x32xi32, #tpu.memory_space<vmem>>, %arg2: memref<1x512x1xi32, #tpu.memory_space<vmem>>, %arg3: memref<1x1x512xi32, #tpu.memory_space<vmem>>, %arg4: memref<32x128xbf16, #tpu.memory_space<vmem>>, %arg5: memref<3x128x128xbf16, #tpu.memory_space<vmem>>, %arg6: memref<3x128x128xbf16, #tpu.memory_space<vmem>>, %arg7: memref<128x128xbf16, #tpu.memory_space<vmem>>, %arg8: memref<128x128xbf16, #tpu.memory_space<vmem>>, %arg9: memref<128x128xbf16, #tpu.memory_space<vmem>>, %arg10: memref<16x128xf32, #tpu.memory_space<vmem>>, %arg11: memref<256x128xf32, #tpu.memory_space<vmem>>) attributes {dimension_semantics = [#tpu.dimension_semantics<parallel>], iteration_bounds = array<i64: 2>, scalar_prefetch = 0 : i64, scratch_operands = 0 : i64, tpu.core_type = #tpu.core_type<tc>, window_params = [{transform_indices = @transform_0, window_bounds = array<i64: 1, 256, 32>}, {transform_indices = @transform_1, window_bounds = array<i64: 1, 512, 1>}, {transform_indices = @transform_2, window_bounds = array<i64: 1, 1, 512>}, {pipeline_mode = #tpu.pipeline_mode<synchronous>, transform_indices = @transform_3, window_bounds = array<i64: 32, 128>}, {pipeline_mode = #tpu.pipeline_mode<synchronous>, transform_indices = @transform_4, window_bounds = array<i64: 3, 128, 128>}, {pipeline_mode = #tpu.pipeline_mode<synchronous>, transform_indices = @transform_5, window_bounds = array<i64: 3, 128, 128>}, {pipeline_mode = #tpu.pipeline_mode<synchronous>, transform_indices = @transform_6, window_bounds = array<i64: 128, 128>}, {pipeline_mode = #tpu.pipeline_mode<synchronous>, transform_indices = @transform_7, window_bounds = array<i64: 128, 128>}, {pipeline_mode = #tpu.pipeline_mode<synchronous>, transform_indices = @transform_8, window_bounds = array<i64: 128, 128>}, {pipeline_mode = #tpu.pipeline_mode<synchronous>, transform_indices = @transform_9, window_bounds = array<i64: 16, 128>}, {transform_indices = @transform_10, window_bounds = array<i64: 256, 128>}]} {
    %0 = tpu.iota {dimensions = array<i32: 1>} : vector<256x32xi32>
    %c0 = arith.constant 0 : index
    %c0_0 = arith.constant 0 : index
    %c0_1 = arith.constant 0 : index
    %1 = vector.load %arg1[%c0, %c0_0, %c0_1] : memref<1x256x32xi32, #tpu.memory_space<vmem>>, vector<1x256x32xi32>
    %2 = vector.shape_cast %1 : vector<1x256x32xi32> to vector<256x32xi32>
    %3 = arith.cmpi eq, %0, %2 : vector<256x32xi32>
    %4 = arith.extui %3 : vector<256x32xi1> to vector<256x32xi32>
    %5 = arith.sitofp %4 : vector<256x32xi32> to vector<256x32xf32>
    %6 = arith.truncf %5 : vector<256x32xf32> to vector<256x32xbf16>
    %c0_2 = arith.constant 0 : index
    %c0_3 = arith.constant 0 : index
    %7 = vector.load %arg4[%c0_2, %c0_3] : memref<32x128xbf16, #tpu.memory_space<vmem>>, vector<32x128xbf16>
    %cst = arith.constant dense<0.000000e+00> : vector<256x128xf32>
    %8 = tpu.matmul %6, %7, %cst {dimension_numbers = #tpu.dot_dimension_numbers<[1], [0], [0], [1], [0, 0, 1, 1], [], []>} : vector<256x32xbf16>, vector<32x128xbf16>, vector<256x128xf32> -> vector<256x128xf32>
    %9 = tpu.iota {dimensions = array<i32: 1>} : vector<512x256xi32>
    %c0_4 = arith.constant 0 : index
    %c0_5 = arith.constant 0 : index
    %c0_6 = arith.constant 0 : index
    %10 = vector.load %arg2[%c0_4, %c0_5, %c0_6] : memref<1x512x1xi32, #tpu.memory_space<vmem>>, vector<1x512x1xi32>
    %11 = vector.shape_cast %10 : vector<1x512x1xi32> to vector<512x1xi32>
    %12 = vector.broadcast %11 : vector<512x1xi32> to vector<512x256xi32>
    %13 = arith.cmpi eq, %9, %12 : vector<512x256xi32>
    %14 = arith.extui %13 : vector<512x256xi1> to vector<512x256xi32>
    %15 = arith.sitofp %14 : vector<512x256xi32> to vector<512x256xf32>
    %16 = arith.truncf %15 : vector<512x256xf32> to vector<512x256xbf16>
    %17 = tpu.iota {dimensions = array<i32: 0>} : vector<256x512xi32>
    %c0_7 = arith.constant 0 : index
    %c0_8 = arith.constant 0 : index
    %c0_9 = arith.constant 0 : index
    %18 = vector.load %arg3[%c0_7, %c0_8, %c0_9] : memref<1x1x512xi32, #tpu.memory_space<vmem>>, vector<1x1x512xi32>
    %19 = vector.shape_cast %18 : vector<1x1x512xi32> to vector<1x512xi32>
    %20 = vector.broadcast %19 : vector<1x512xi32> to vector<256x512xi32>
    %21 = arith.cmpi eq, %17, %20 : vector<256x512xi32>
    %22 = arith.extui %21 : vector<256x512xi1> to vector<256x512xi32>
    %23 = arith.sitofp %22 : vector<256x512xi32> to vector<256x512xf32>
    %24 = arith.truncf %23 : vector<256x512xf32> to vector<256x512xbf16>
    %cst_10 = arith.constant dense<0.000000e+00> : vector<256x256xf32>
    %25 = tpu.matmul %24, %16, %cst_10 {dimension_numbers = #tpu.dot_dimension_numbers<[1], [0], [0], [1], [0, 0, 1, 1], [], []>} : vector<256x512xbf16>, vector<512x256xbf16>, vector<256x256xf32> -> vector<256x256xf32>
    %26 = tpu.iota {dimensions = array<i32: 0>} : vector<256x256xi32>
    %27 = tpu.iota {dimensions = array<i32: 1>} : vector<256x256xi32>
    %28 = arith.cmpi eq, %26, %27 : vector<256x256xi32>
    %29 = arith.extui %28 : vector<256x256xi1> to vector<256x256xi32>
    %30 = arith.sitofp %29 : vector<256x256xi32> to vector<256x256xf32>
    %31 = arith.addf %25, %30 : vector<256x256xf32>
    %32 = arith.truncf %31 : vector<256x256xf32> to vector<256x256xbf16>
    %33 = arith.truncf %8 : vector<256x128xf32> to vector<256x128xbf16>
    %cst_11 = arith.constant dense<0.000000e+00> : vector<256x128xf32>
    %34 = tpu.matmul %32, %33, %cst_11 {dimension_numbers = #tpu.dot_dimension_numbers<[1], [0], [0], [1], [0, 0, 1, 1], [], []>} : vector<256x256xbf16>, vector<256x128xbf16>, vector<256x128xf32> -> vector<256x128xf32>
    %35 = arith.truncf %34 : vector<256x128xf32> to vector<256x128xbf16>
    %c0_12 = arith.constant 0 : index
    %c0_13 = arith.constant 0 : index
    %c0_14 = arith.constant 0 : index
    %36 = vector.load %arg5[%c0_12, %c0_13, %c0_14] : memref<3x128x128xbf16, #tpu.memory_space<vmem>>, vector<1x128x128xbf16>
    %37 = vector.shape_cast %36 : vector<1x128x128xbf16> to vector<128x128xbf16>
    %cst_15 = arith.constant dense<0.000000e+00> : vector<256x128xf32>
    %38 = tpu.matmul %35, %37, %cst_15 {dimension_numbers = #tpu.dot_dimension_numbers<[1], [0], [0], [1], [0, 0, 1, 1], [], []>} : vector<256x128xbf16>, vector<128x128xbf16>, vector<256x128xf32> -> vector<256x128xf32>
    %c0_16 = arith.constant 0 : index
    %c0_17 = arith.constant 0 : index
    %39 = vector.load %arg10[%c0_16, %c0_17] : memref<16x128xf32, #tpu.memory_space<vmem>>, vector<1x128xf32>
    %40 = vector.broadcast %39 : vector<1x128xf32> to vector<256x128xf32>
    %41 = arith.addf %38, %40 : vector<256x128xf32>
    %cst_18 = arith.constant 0.000000e+00 : f32
    %42 = vector.broadcast %cst_18 : f32 to vector<256x128xf32>
    %43 = arith.maximumf %41, %42 : vector<256x128xf32>
    %44 = arith.truncf %43 : vector<256x128xf32> to vector<256x128xbf16>
    %c0_19 = arith.constant 0 : index
    %c0_20 = arith.constant 0 : index
    %c0_21 = arith.constant 0 : index
    %45 = vector.load %arg6[%c0_19, %c0_20, %c0_21] : memref<3x128x128xbf16, #tpu.memory_space<vmem>>, vector<1x128x128xbf16>
    %46 = vector.shape_cast %45 : vector<1x128x128xbf16> to vector<128x128xbf16>
    %cst_22 = arith.constant dense<0.000000e+00> : vector<256x128xf32>
    %47 = tpu.matmul %44, %46, %cst_22 {dimension_numbers = #tpu.dot_dimension_numbers<[1], [0], [0], [1], [0, 0, 1, 1], [], []>} : vector<256x128xbf16>, vector<128x128xbf16>, vector<256x128xf32> -> vector<256x128xf32>
    %c3 = arith.constant 3 : index
    %c0_23 = arith.constant 0 : index
    %48 = vector.load %arg10[%c3, %c0_23] : memref<16x128xf32, #tpu.memory_space<vmem>>, vector<1x128xf32>
    %49 = vector.broadcast %48 : vector<1x128xf32> to vector<256x128xf32>
    %50 = arith.addf %47, %49 : vector<256x128xf32>
    %51 = arith.truncf %50 : vector<256x128xf32> to vector<256x128xbf16>
    %cst_24 = arith.constant dense<0.000000e+00> : vector<256x128xf32>
    %52 = tpu.matmul %32, %51, %cst_24 {dimension_numbers = #tpu.dot_dimension_numbers<[1], [0], [0], [1], [0, 0, 1, 1], [], []>} : vector<256x256xbf16>, vector<256x128xbf16>, vector<256x128xf32> -> vector<256x128xf32>
    %53 = arith.truncf %52 : vector<256x128xf32> to vector<256x128xbf16>
    %c1 = arith.constant 1 : index
    %c0_25 = arith.constant 0 : index
    %c0_26 = arith.constant 0 : index
    %54 = vector.load %arg5[%c1, %c0_25, %c0_26] : memref<3x128x128xbf16, #tpu.memory_space<vmem>>, vector<1x128x128xbf16>
    %55 = vector.shape_cast %54 : vector<1x128x128xbf16> to vector<128x128xbf16>
    %cst_27 = arith.constant dense<0.000000e+00> : vector<256x128xf32>
    %56 = tpu.matmul %53, %55, %cst_27 {dimension_numbers = #tpu.dot_dimension_numbers<[1], [0], [0], [1], [0, 0, 1, 1], [], []>} : vector<256x128xbf16>, vector<128x128xbf16>, vector<256x128xf32> -> vector<256x128xf32>
    %c1_28 = arith.constant 1 : index
    %c0_29 = arith.constant 0 : index
    %57 = vector.load %arg10[%c1_28, %c0_29] : memref<16x128xf32, #tpu.memory_space<vmem>>, vector<1x128xf32>
    %58 = vector.broadcast %57 : vector<1x128xf32> to vector<256x128xf32>
    %59 = arith.addf %56, %58 : vector<256x128xf32>
    %cst_30 = arith.constant 0.000000e+00 : f32
    %60 = vector.broadcast %cst_30 : f32 to vector<256x128xf32>
    %61 = arith.maximumf %59, %60 : vector<256x128xf32>
    %62 = arith.truncf %61 : vector<256x128xf32> to vector<256x128xbf16>
    %c1_31 = arith.constant 1 : index
    %c0_32 = arith.constant 0 : index
    %c0_33 = arith.constant 0 : index
    %63 = vector.load %arg6[%c1_31, %c0_32, %c0_33] : memref<3x128x128xbf16, #tpu.memory_space<vmem>>, vector<1x128x128xbf16>
    %64 = vector.shape_cast %63 : vector<1x128x128xbf16> to vector<128x128xbf16>
    %cst_34 = arith.constant dense<0.000000e+00> : vector<256x128xf32>
    %65 = tpu.matmul %62, %64, %cst_34 {dimension_numbers = #tpu.dot_dimension_numbers<[1], [0], [0], [1], [0, 0, 1, 1], [], []>} : vector<256x128xbf16>, vector<128x128xbf16>, vector<256x128xf32> -> vector<256x128xf32>
    %c4 = arith.constant 4 : index
    %c0_35 = arith.constant 0 : index
    %66 = vector.load %arg10[%c4, %c0_35] : memref<16x128xf32, #tpu.memory_space<vmem>>, vector<1x128xf32>
    %67 = vector.broadcast %66 : vector<1x128xf32> to vector<256x128xf32>
    %68 = arith.addf %65, %67 : vector<256x128xf32>
    %69 = arith.truncf %68 : vector<256x128xf32> to vector<256x128xbf16>
    %cst_36 = arith.constant dense<0.000000e+00> : vector<256x128xf32>
    %70 = tpu.matmul %32, %69, %cst_36 {dimension_numbers = #tpu.dot_dimension_numbers<[1], [0], [0], [1], [0, 0, 1, 1], [], []>} : vector<256x256xbf16>, vector<256x128xbf16>, vector<256x128xf32> -> vector<256x128xf32>
    %71 = arith.truncf %70 : vector<256x128xf32> to vector<256x128xbf16>
    %c2 = arith.constant 2 : index
    %c0_37 = arith.constant 0 : index
    %c0_38 = arith.constant 0 : index
    %72 = vector.load %arg5[%c2, %c0_37, %c0_38] : memref<3x128x128xbf16, #tpu.memory_space<vmem>>, vector<1x128x128xbf16>
    %73 = vector.shape_cast %72 : vector<1x128x128xbf16> to vector<128x128xbf16>
    %cst_39 = arith.constant dense<0.000000e+00> : vector<256x128xf32>
    %74 = tpu.matmul %71, %73, %cst_39 {dimension_numbers = #tpu.dot_dimension_numbers<[1], [0], [0], [1], [0, 0, 1, 1], [], []>} : vector<256x128xbf16>, vector<128x128xbf16>, vector<256x128xf32> -> vector<256x128xf32>
    %c2_40 = arith.constant 2 : index
    %c0_41 = arith.constant 0 : index
    %75 = vector.load %arg10[%c2_40, %c0_41] : memref<16x128xf32, #tpu.memory_space<vmem>>, vector<1x128xf32>
    %76 = vector.broadcast %75 : vector<1x128xf32> to vector<256x128xf32>
    %77 = arith.addf %74, %76 : vector<256x128xf32>
    %cst_42 = arith.constant 0.000000e+00 : f32
    %78 = vector.broadcast %cst_42 : f32 to vector<256x128xf32>
    %79 = arith.maximumf %77, %78 : vector<256x128xf32>
    %80 = arith.truncf %79 : vector<256x128xf32> to vector<256x128xbf16>
    %c2_43 = arith.constant 2 : index
    %c0_44 = arith.constant 0 : index
    %c0_45 = arith.constant 0 : index
    %81 = vector.load %arg6[%c2_43, %c0_44, %c0_45] : memref<3x128x128xbf16, #tpu.memory_space<vmem>>, vector<1x128x128xbf16>
    %82 = vector.shape_cast %81 : vector<1x128x128xbf16> to vector<128x128xbf16>
    %cst_46 = arith.constant dense<0.000000e+00> : vector<256x128xf32>
    %83 = tpu.matmul %80, %82, %cst_46 {dimension_numbers = #tpu.dot_dimension_numbers<[1], [0], [0], [1], [0, 0, 1, 1], [], []>} : vector<256x128xbf16>, vector<128x128xbf16>, vector<256x128xf32> -> vector<256x128xf32>
    %c5 = arith.constant 5 : index
    %c0_47 = arith.constant 0 : index
    %84 = vector.load %arg10[%c5, %c0_47] : memref<16x128xf32, #tpu.memory_space<vmem>>, vector<1x128xf32>
    %85 = vector.broadcast %84 : vector<1x128xf32> to vector<256x128xf32>
    %86 = arith.addf %83, %85 : vector<256x128xf32>
    %87 = arith.truncf %86 : vector<256x128xf32> to vector<256x128xbf16>
    %c0_48 = arith.constant 0 : index
    %c0_49 = arith.constant 0 : index
    %88 = vector.load %arg7[%c0_48, %c0_49] : memref<128x128xbf16, #tpu.memory_space<vmem>>, vector<128x128xbf16>
    %cst_50 = arith.constant dense<0.000000e+00> : vector<256x128xf32>
    %89 = tpu.matmul %87, %88, %cst_50 {dimension_numbers = #tpu.dot_dimension_numbers<[1], [0], [0], [1], [0, 0, 1, 1], [], []>} : vector<256x128xbf16>, vector<128x128xbf16>, vector<256x128xf32> -> vector<256x128xf32>
    %c6 = arith.constant 6 : index
    %c0_51 = arith.constant 0 : index
    %90 = vector.load %arg10[%c6, %c0_51] : memref<16x128xf32, #tpu.memory_space<vmem>>, vector<1x128xf32>
    %91 = vector.broadcast %90 : vector<1x128xf32> to vector<256x128xf32>
    %92 = arith.addf %89, %91 : vector<256x128xf32>
    %cst_52 = arith.constant 0.000000e+00 : f32
    %93 = vector.broadcast %cst_52 : f32 to vector<256x128xf32>
    %94 = arith.maximumf %92, %93 : vector<256x128xf32>
    %95 = arith.truncf %94 : vector<256x128xf32> to vector<256x128xbf16>
    %c0_53 = arith.constant 0 : index
    %c0_54 = arith.constant 0 : index
    %96 = vector.load %arg8[%c0_53, %c0_54] : memref<128x128xbf16, #tpu.memory_space<vmem>>, vector<128x128xbf16>
    %cst_55 = arith.constant dense<0.000000e+00> : vector<256x128xf32>
    %97 = tpu.matmul %95, %96, %cst_55 {dimension_numbers = #tpu.dot_dimension_numbers<[1], [0], [0], [1], [0, 0, 1, 1], [], []>} : vector<256x128xbf16>, vector<128x128xbf16>, vector<256x128xf32> -> vector<256x128xf32>
    %c7 = arith.constant 7 : index
    %c0_56 = arith.constant 0 : index
    %98 = vector.load %arg10[%c7, %c0_56] : memref<16x128xf32, #tpu.memory_space<vmem>>, vector<1x128xf32>
    %99 = vector.broadcast %98 : vector<1x128xf32> to vector<256x128xf32>
    %100 = arith.addf %97, %99 : vector<256x128xf32>
    %101 = arith.truncf %100 : vector<256x128xf32> to vector<256x128xbf16>
    %c0_57 = arith.constant 0 : index
    %c0_58 = arith.constant 0 : index
    %102 = vector.load %arg9[%c0_57, %c0_58] : memref<128x128xbf16, #tpu.memory_space<vmem>>, vector<128x128xbf16>
    %cst_59 = arith.constant dense<0.000000e+00> : vector<256x128xf32>
    %103 = tpu.matmul %101, %102, %cst_59 {dimension_numbers = #tpu.dot_dimension_numbers<[1], [0], [0], [1], [0, 0, 1, 1], [], []>} : vector<256x128xbf16>, vector<128x128xbf16>, vector<256x128xf32> -> vector<256x128xf32>
    %c8 = arith.constant 8 : index
    %c0_60 = arith.constant 0 : index
    %104 = vector.load %arg10[%c8, %c0_60] : memref<16x128xf32, #tpu.memory_space<vmem>>, vector<1x128xf32>
    %105 = vector.broadcast %104 : vector<1x128xf32> to vector<256x128xf32>
    %106 = arith.addf %103, %105 : vector<256x128xf32>
    %107 = tpu.iota {dimensions = array<i32: 1>} : vector<256x128xi32>
    %c20_i32 = arith.constant 20 : i32
    %108 = vector.broadcast %c20_i32 : i32 to vector<256x128xi32>
    %109 = arith.cmpi sge, %107, %108 : vector<256x128xi32>
    %c40_i32 = arith.constant 40 : i32
    %110 = vector.broadcast %c40_i32 : i32 to vector<256x128xi32>
    %111 = arith.cmpi slt, %107, %110 : vector<256x128xi32>
    %112 = arith.andi %109, %111 : vector<256x128xi1>
    %c40_i32_61 = arith.constant 40 : i32
    %113 = vector.broadcast %c40_i32_61 : i32 to vector<256x128xi32>
    %114 = arith.cmpi sge, %107, %113 : vector<256x128xi32>
    %c60_i32 = arith.constant 60 : i32
    %115 = vector.broadcast %c60_i32 : i32 to vector<256x128xi32>
    %116 = arith.cmpi slt, %107, %115 : vector<256x128xi32>
    %117 = arith.andi %114, %116 : vector<256x128xi1>
    %cst_62 = arith.constant 0.000000e+00 : f32
    %118 = vector.broadcast %cst_62 : f32 to vector<256x128xf32>
    %119 = arith.maximumf %106, %118 : vector<256x128xf32>
    %120 = math.absf %106 : vector<256x128xf32>
    %cst_63 = arith.constant 0.000000e+00 : f32
    %121 = vector.broadcast %cst_63 : f32 to vector<256x128xf32>
    %122 = arith.subf %121, %120 : vector<256x128xf32>
    %123 = math.exp %122 : vector<256x128xf32>
    %124 = math.log1p %123 : vector<256x128xf32>
    %125 = arith.addf %119, %124 : vector<256x128xf32>
    %126 = math.tanh %106 : vector<256x128xf32>
    %cst_64 = arith.constant 1.800000e+02 : f32
    %127 = vector.broadcast %cst_64 : f32 to vector<256x128xf32>
    %128 = arith.mulf %126, %127 : vector<256x128xf32>
    %129 = arith.select %112, %128, %106 : vector<256x128xi1>, vector<256x128xf32>
    %130 = arith.select %117, %125, %129 : vector<256x128xi1>, vector<256x128xf32>
    %c0_65 = arith.constant 0 : index
    %c0_66 = arith.constant 0 : index
    %131 = vector.load %arg11[%c0_65, %c0_66] : memref<256x128xf32, #tpu.memory_space<vmem>>, vector<256x128xf32>
    tpu.vector_store %arg11[%c0_65, %c0_66], %130 {strides = array<i32>} : memref<256x128xf32, #tpu.memory_space<vmem>>, vector<256x128xf32>,
    return
  }
  func.func @transform_0(%arg0: i32) -> (i32, i32, i32) {
    %c0_i32 = arith.constant 0 : i32
    %c0_i32_0 = arith.constant 0 : i32
    %c0_i32_1 = arith.constant 0 : i32
    return %arg0, %c0_i32, %c0_i32_0 : i32, i32, i32
  }
  func.func @transform_1(%arg0: i32) -> (i32, i32, i32) {
    %c0_i32 = arith.constant 0 : i32
    %c0_i32_0 = arith.constant 0 : i32
    %c0_i32_1 = arith.constant 0 : i32
    return %arg0, %c0_i32, %c0_i32_0 : i32, i32, i32
  }
  func.func @transform_2(%arg0: i32) -> (i32, i32, i32) {
    %c0_i32 = arith.constant 0 : i32
    %c0_i32_0 = arith.constant 0 : i32
    %c0_i32_1 = arith.constant 0 : i32
    return %arg0, %c0_i32, %c0_i32_0 : i32, i32, i32
  }
  func.func @transform_3(%arg0: i32) -> (i32, i32) {
    %c0_i32 = arith.constant 0 : i32
    %c0_i32_0 = arith.constant 0 : i32
    %c0_i32_1 = arith.constant 0 : i32
    return %c0_i32, %c0_i32_0 : i32, i32
  }
  func.func @transform_4(%arg0: i32) -> (i32, i32, i32) {
    %c0_i32 = arith.constant 0 : i32
    %c0_i32_0 = arith.constant 0 : i32
    %c0_i32_1 = arith.constant 0 : i32
    %c0_i32_2 = arith.constant 0 : i32
    return %c0_i32, %c0_i32_0, %c0_i32_1 : i32, i32, i32
  }
  func.func @transform_5(%arg0: i32) -> (i32, i32, i32) {
    %c0_i32 = arith.constant 0 : i32
    %c0_i32_0 = arith.constant 0 : i32
    %c0_i32_1 = arith.constant 0 : i32
    %c0_i32_2 = arith.constant 0 : i32
    return %c0_i32, %c0_i32_0, %c0_i32_1 : i32, i32, i32
  }
  func.func @transform_6(%arg0: i32) -> (i32, i32) {
    %c0_i32 = arith.constant 0 : i32
    %c0_i32_0 = arith.constant 0 : i32
    %c0_i32_1 = arith.constant 0 : i32
    return %c0_i32, %c0_i32_0 : i32, i32
  }
  func.func @transform_7(%arg0: i32) -> (i32, i32) {
    %c0_i32 = arith.constant 0 : i32
    %c0_i32_0 = arith.constant 0 : i32
    %c0_i32_1 = arith.constant 0 : i32
    return %c0_i32, %c0_i32_0 : i32, i32
  }
  func.func @transform_8(%arg0: i32) -> (i32, i32) {
    %c0_i32 = arith.constant 0 : i32
    %c0_i32_0 = arith.constant 0 : i32
    %c0_i32_1 = arith.constant 0 : i32
    return %c0_i32, %c0_i32_0 : i32, i32
  }
  func.func @transform_9(%arg0: i32) -> (i32, i32) {
    %c0_i32 = arith.constant 0 : i32
    %c0_i32_0 = arith.constant 0 : i32
    %c0_i32_1 = arith.constant 0 : i32
    return %c0_i32, %c0_i32_0 : i32, i32
  }
  func.func @transform_10(%arg0: i32) -> (i32, i32) {
    %c0_i32 = arith.constant 0 : i32
    %c0_i32_0 = arith.constant 0 : i32
    return %arg0, %c0_i32 : i32, i32
  }
}

</mosaic_0001>

<llo_original>
// kernel: forward.1
$region0: #{forward.1}
  #allocation0 [shape = 'u32[]', space=smem, size = 0x4, offset = 0x4, fixed_abs, tag = 'smem constant byte address 0x4 - core index']
  #allocation1 [shape = 'u32[144,128]{1,0:T(1,128)}', space=vmem, size = 0x12000, scoped, tag = 'internal scratch']
  %s0 = inlined_call_operand.vmem [shape: s32[2,256,32], index: 0, kind: input, shape index: {}]
  %s1 = inlined_call_operand.vmem [shape: s32[2,512,1], index: 1, kind: input, shape index: {}]
  %s2 = inlined_call_operand.vmem [shape: s32[2,1,512], index: 2, kind: input, shape index: {}]
  %s3 = inlined_call_operand.vmem [shape: bf16[32,128], index: 3, kind: input, shape index: {}]
  %s4 = inlined_call_operand.vmem [shape: bf16[3,128,128], index: 4, kind: input, shape index: {}]
  %s5 = inlined_call_operand.vmem [shape: bf16[3,128,128], index: 5, kind: input, shape index: {}]
  %s6 = inlined_call_operand.vmem [shape: bf16[128,128], index: 6, kind: input, shape index: {}]
  %s7 = inlined_call_operand.vmem [shape: bf16[128,128], index: 7, kind: input, shape index: {}]
  %s8 = inlined_call_operand.vmem [shape: bf16[128,128], index: 8, kind: input, shape index: {}]
  %s9 = inlined_call_operand.vmem [shape: f32[16,128], index: 9, kind: input, shape index: {}]
  %s10 = inlined_call_operand.vmem [shape: f32[512,128], index: 10, kind: output, shape index: {}]
  %s11 = sld [smem:[#allocation0]]
  $region73: #{forward.1} parent=0
    _
  %s13 = ssub.s32 1, %s11
  %s14 = scalar_select 0, %s13, %s11
  loop: start=0, step=1, limit=4
  $region2: #{forward.1} parent=0 // loop_pre_header
    _
  $region3: #{forward.1} parent=0 // loop_header
    %s16 = sphi 0, %s20
    %p17 = scmp.ge.s32.totalorder %s16, 4
    %s26 = sphi 0, %s28
    %s29 = sphi 0, %s26
    %s30 = sphi 0, %s29
    %s46 = sphi 0, %s30
    %s52 = sphi 0, %s54
    %s55 = sphi 0, %s52
    %s56 = sphi 0, %s55
    %s72 = sphi 0, %s56
    %s78 = sphi 0, %s80
    %s81 = sphi 0, %s78
    %s82 = sphi 0, %s81
    %s98 = sphi 0, %s82
    %s102 = sphi 0, %s102
    %s104 = sphi 0, %s102
    %s105 = sphi 0, %s104
    %s119 = sphi 0, %s105
    %s123 = sphi 0, %s123
    %s125 = sphi 0, %s123
    %s126 = sphi 0, %s125
    %s140 = sphi 0, %s126
    %s144 = sphi 0, %s144
    %s146 = sphi 0, %s144
    %s147 = sphi 0, %s146
    %s161 = sphi 0, %s147
    %s165 = sphi 0, %s165
    %s167 = sphi 0, %s165
    %s168 = sphi 0, %s167
    %s182 = sphi 0, %s168
    %s186 = sphi 0, %s186
    %s188 = sphi 0, %s186
    %s189 = sphi 0, %s188
    %s203 = sphi 0, %s189
    %s207 = sphi 0, %s207
    %s209 = sphi 0, %s207
    %s210 = sphi 0, %s209
    %s224 = sphi 0, %s210
    %s228 = sphi 0, %s228
    %s230 = sphi 0, %s228
    %s231 = sphi 0, %s230
    %s245 = sphi 0, %s231
    %s251 = sphi 0, %s253
    %s254 = sphi 0, %s251
    %s255 = sphi 0, %s254
    %s271 = sphi 0, %s255
  $region4: #{forward.1} parent=0 // loop_header_branch
    %19 = sbr.rel (%p17) target = $region8
  $region5: #{forward.1} parent=0 // loop_body
    %s21 = ssub.s32 %s16, 1
    %s22 = ssub.s32 %s16, 2
    %s23 = sadd.s32 %s16, 1
    %s24 = ssub.s32 %s16, %s23
    %p25 = scmp.eq.s32.totalorder %s24, 0
    %s27 = sadd.s32 %s26, 1
    %s28 = scalar_select %p25, %s26, %s27
    %p31 = pneg %p25
    %p32 = scmp.eq.s32.totalorder %s16, 1
    %p33 = por %p31, %p32
    %p34 = scmp.ne.s32.totalorder %s26, %s29
    %p35 = scmp.eq.s32.totalorder %s16, 0
    %p36 = por %p34, %p35
    %p37 = scmp.ne.s32.totalorder %s26, %s29
    %p38 = scmp.eq.s32.totalorder %s21, 1
    %p39 = por %p37, %p38
    %p40 = scmp.ne.s32.totalorder %s29, %s30
    %p41 = scmp.eq.s32.totalorder %s21, 0
    %p42 = por %p40, %p41
    %p43 = scmp.ne.s32.totalorder %s29, %s30
    %p44 = scmp.eq.s32.totalorder %s22, 1
    %p45 = por %p43, %p44
    %p47 = scmp.ne.s32.totalorder %s30, %s46
    %p48 = scmp.eq.s32.totalorder %s22, 0
    %p49 = por %p47, %p48
    %s50 = ssub.s32 %s16, %s23
    %p51 = scmp.eq.s32.totalorder %s50, 0
    %s53 = sadd.s32 %s52, 1
    %s54 = scalar_select %p51, %s52, %s53
    %p57 = pneg %p51
    %p58 = scmp.eq.s32.totalorder %s16, 1
    %p59 = por %p57, %p58
    %p60 = scmp.ne.s32.totalorder %s52, %s55
    %p61 = scmp.eq.s32.totalorder %s16, 0
    %p62 = por %p60, %p61
    %p63 = scmp.ne.s32.totalorder %s52, %s55
    %p64 = scmp.eq.s32.totalorder %s21, 1
    %p65 = por %p63, %p64
    %p66 = scmp.ne.s32.totalorder %s55, %s56
    %p67 = scmp.eq.s32.totalorder %s21, 0
    %p68 = por %p66, %p67
    %p69 = scmp.ne.s32.totalorder %s55, %s56
    %p70 = scmp.eq.s32.totalorder %s22, 1
    %p71 = por %p69, %p70
    %p73 = scmp.ne.s32.totalorder %s56, %s72
    %p74 = scmp.eq.s32.totalorder %s22, 0
    %p75 = por %p73, %p74
    %s76 = ssub.s32 %s16, %s23
    %p77 = scmp.eq.s32.totalorder %s76, 0
    %s79 = sadd.s32 %s78, 1
    %s80 = scalar_select %p77, %s78, %s79
    %p83 = pneg %p77
    %p84 = scmp.eq.s32.totalorder %s16, 1
    %p85 = por %p83, %p84
    %p86 = scmp.ne.s32.totalorder %s78, %s81
    %p87 = scmp.eq.s32.totalorder %s16, 0
    %p88 = por %p86, %p87
    %p89 = scmp.ne.s32.totalorder %s78, %s81
    %p90 = scmp.eq.s32.totalorder %s21, 1
    %p91 = por %p89, %p90
    %p92 = scmp.ne.s32.totalorder %s81, %s82
    %p93 = scmp.eq.s32.totalorder %s21, 0
    %p94 = por %p92, %p93
    %p95 = scmp.ne.s32.totalorder %s81, %s82
    %p96 = scmp.eq.s32.totalorder %s22, 1
    %p97 = por %p95, %p96
    %p99 = scmp.ne.s32.totalorder %s82, %s98
    %p100 = scmp.eq.s32.totalorder %s22, 0
    %p101 = por %p99, %p100
    %s103 = sadd.s32 %s102, 1
    %p106 = scmp.eq.s32.totalorder %s16, 1
    %p107 = scmp.ne.s32.totalorder %s102, %s104
    %p108 = scmp.eq.s32.totalorder %s16, 0
    %p109 = por %p107, %p108
    %p110 = scmp.ne.s32.totalorder %s102, %s104
    %p111 = scmp.eq.s32.totalorder %s21, 1
    %p112 = por %p110, %p111
    %p113 = scmp.ne.s32.totalorder %s104, %s105
    %p114 = scmp.eq.s32.totalorder %s21, 0
    %p115 = por %p113, %p114
    %p116 = scmp.ne.s32.totalorder %s104, %s105
    %p117 = scmp.eq.s32.totalorder %s22, 1
    %p118 = por %p116, %p117
    %p120 = scmp.ne.s32.totalorder %s105, %s119
    %p121 = scmp.eq.s32.totalorder %s22, 0
    %p122 = por %p120, %p121
    %s124 = sadd.s32 %s123, 1
    %p127 = scmp.eq.s32.totalorder %s16, 1
    %p128 = scmp.ne.s32.totalorder %s123, %s125
    %p129 = scmp.eq.s32.totalorder %s16, 0
    %p130 = por %p128, %p129
    %p131 = scmp.ne.s32.totalorder %s123, %s125
    %p132 = scmp.eq.s32.totalorder %s21, 1
    %p133 = por %p131, %p132
    %p134 = scmp.ne.s32.totalorder %s125, %s126
    %p135 = scmp.eq.s32.totalorder %s21, 0
    %p136 = por %p134, %p135
    %p137 = scmp.ne.s32.totalorder %s125, %s126
    %p138 = scmp.eq.s32.totalorder %s22, 1
    %p139 = por %p137, %p138
    %p141 = scmp.ne.s32.totalorder %s126, %s140
    %p142 = scmp.eq.s32.totalorder %s22, 0
    %p143 = por %p141, %p142
    %s145 = sadd.s32 %s144, 1
    %p148 = scmp.eq.s32.totalorder %s16, 1
    %p149 = scmp.ne.s32.totalorder %s144, %s146
    %p150 = scmp.eq.s32.totalorder %s16, 0
    %p151 = por %p149, %p150
    %p152 = scmp.ne.s32.totalorder %s144, %s146
    %p153 = scmp.eq.s32.totalorder %s21, 1
    %p154 = por %p152, %p153
    %p155 = scmp.ne.s32.totalorder %s146, %s147
    %p156 = scmp.eq.s32.totalorder %s21, 0
    %p157 = por %p155, %p156
    %p158 = scmp.ne.s32.totalorder %s146, %s147
    %p159 = scmp.eq.s32.totalorder %s22, 1
    %p160 = por %p158, %p159
    %p162 = scmp.ne.s32.totalorder %s147, %s161
    %p163 = scmp.eq.s32.totalorder %s22, 0
    %p164 = por %p162, %p163
    %s166 = sadd.s32 %s165, 1
    %p169 = scmp.eq.s32.totalorder %s16, 1
    %p170 = scmp.ne.s32.totalorder %s165, %s167
    %p171 = scmp.eq.s32.totalorder %s16, 0
    %p172 = por %p170, %p171
    %p173 = scmp.ne.s32.totalorder %s165, %s167
    %p174 = scmp.eq.s32.totalorder %s21, 1
    %p175 = por %p173, %p174
    %p176 = scmp.ne.s32.totalorder %s167, %s168
    %p177 = scmp.eq.s32.totalorder %s21, 0
    %p178 = por %p176, %p177
    %p179 = scmp.ne.s32.totalorder %s167, %s168
    %p180 = scmp.eq.s32.totalorder %s22, 1
    %p181 = por %p179, %p180
    %p183 = scmp.ne.s32.totalorder %s168, %s182
    %p184 = scmp.eq.s32.totalorder %s22, 0
    %p185 = por %p183, %p184
    %s187 = sadd.s32 %s186, 1
    %p190 = scmp.eq.s32.totalorder %s16, 1
    %p191 = scmp.ne.s32.totalorder %s186, %s188
    %p192 = scmp.eq.s32.totalorder %s16, 0
    %p193 = por %p191, %p192
    %p194 = scmp.ne.s32.totalorder %s186, %s188
    %p195 = scmp.eq.s32.totalorder %s21, 1
    %p196 = por %p194, %p195
    %p197 = scmp.ne.s32.totalorder %s188, %s189
    %p198 = scmp.eq.s32.totalorder %s21, 0
    %p199 = por %p197, %p198
    %p200 = scmp.ne.s32.totalorder %s188, %s189
    %p201 = scmp.eq.s32.totalorder %s22, 1
    %p202 = por %p200, %p201
    %p204 = scmp.ne.s32.totalorder %s189, %s203
    %p205 = scmp.eq.s32.totalorder %s22, 0
    %p206 = por %p204, %p205
    %s208 = sadd.s32 %s207, 1
    %p211 = scmp.eq.s32.totalorder %s16, 1
    %p212 = scmp.ne.s32.totalorder %s207, %s209
    %p213 = scmp.eq.s32.totalorder %s16, 0
    %p214 = por %p212, %p213
    %p215 = scmp.ne.s32.totalorder %s207, %s209
    %p216 = scmp.eq.s32.totalorder %s21, 1
    %p217 = por %p215, %p216
    %p218 = scmp.ne.s32.totalorder %s209, %s210
    %p219 = scmp.eq.s32.totalorder %s21, 0
    %p220 = por %p218, %p219
    %p221 = scmp.ne.s32.totalorder %s209, %s210
    %p222 = scmp.eq.s32.totalorder %s22, 1
    %p223 = por %p221, %p222
    %p225 = scmp.ne.s32.totalorder %s210, %s224
    %p226 = scmp.eq.s32.totalorder %s22, 0
    %p227 = por %p225, %p226
    %s229 = sadd.s32 %s228, 1
    %p232 = scmp.eq.s32.totalorder %s16, 1
    %p233 = scmp.ne.s32.totalorder %s228, %s230
    %p234 = scmp.eq.s32.totalorder %s16, 0
    %p235 = por %p233, %p234
    %p236 = scmp.ne.s32.totalorder %s228, %s230
    %p237 = scmp.eq.s32.totalorder %s21, 1
    %p238 = por %p236, %p237
    %p239 = scmp.ne.s32.totalorder %s230, %s231
    %p240 = scmp.eq.s32.totalorder %s21, 0
    %p241 = por %p239, %p240
    %p242 = scmp.ne.s32.totalorder %s230, %s231
    %p243 = scmp.eq.s32.totalorder %s22, 1
    %p244 = por %p242, %p243
    %p246 = scmp.ne.s32.totalorder %s231, %s245
    %p247 = scmp.eq.s32.totalorder %s22, 0
    %p248 = por %p246, %p247
    %s249 = ssub.s32 %s16, %s23
    %p250 = scmp.eq.s32.totalorder %s249, 0
    %s252 = sadd.s32 %s251, 1
    %s253 = scalar_select %p250, %s251, %s252
    %p256 = pneg %p250
    %p257 = scmp.eq.s32.totalorder %s16, 1
    %p258 = por %p256, %p257
    %p259 = scmp.ne.s32.totalorder %s251, %s254
    %p260 = scmp.eq.s32.totalorder %s16, 0
    %p261 = por %p259, %p260
    %p262 = scmp.ne.s32.totalorder %s251, %s254
    %p263 = scmp.eq.s32.totalorder %s21, 1
    %p264 = por %p262, %p263
    %p265 = scmp.ne.s32.totalorder %s254, %s255
    %p266 = scmp.eq.s32.totalorder %s21, 0
    %p267 = por %p265, %p266
    %p268 = scmp.ne.s32.totalorder %s254, %s255
    %p269 = scmp.eq.s32.totalorder %s22, 1
    %p270 = por %p268, %p269
    %p272 = scmp.ne.s32.totalorder %s255, %s271
    %p273 = scmp.eq.s32.totalorder %s22, 0
    %p274 = por %p272, %p273
    %p275 = scmp.le.s32.totalorder 1, %s16
    %p276 = scmp.lt.s32.totalorder %s16, 3
    %p277 = pnand %p275, %p276
    %p278 = pneg %p277
    // Predicated region
    $region9: #{forward.1} parent=5 // pred_check
      _
    $region10: #{forward.1} parent=5 // pred_check_branch
      %280 = sbr.rel (%p277) target = $region12
    $region11: #{forward.1} parent=5 // pred_region
      %s281 = ssub.s32 %s16, 1
      // Predicated region
      $region13: #{forward.1} parent=11 // pred_check
        %p282 = pneg %p115
      $region14: #{forward.1} parent=11 // pred_check_branch
        %284 = sbr.rel (%p282) target = $region16
      $region15: #{forward.1} parent=11 // pred_region
        _
      $region16: #{forward.1} parent=11 // pred_fallthru
        _
      // Predicated region
      $region17: #{forward.1} parent=11 // pred_check
        %p285 = pneg %p136
      $region18: #{forward.1} parent=11 // pred_check_branch
        %287 = sbr.rel (%p285) target = $region20
      $region19: #{forward.1} parent=11 // pred_region
        _
      $region20: #{forward.1} parent=11 // pred_fallthru
        _
      // Predicated region
      $region21: #{forward.1} parent=11 // pred_check
        %p288 = pneg %p157
      $region22: #{forward.1} parent=11 // pred_check_branch
        %290 = sbr.rel (%p288) target = $region24
      $region23: #{forward.1} parent=11 // pred_region
        _
      $region24: #{forward.1} parent=11 // pred_fallthru
        _
      // Predicated region
      $region25: #{forward.1} parent=11 // pred_check
        %p291 = pneg %p178
      $region26: #{forward.1} parent=11 // pred_check_branch
        %293 = sbr.rel (%p291) target = $region28
      $region27: #{forward.1} parent=11 // pred_region
        _
      $region28: #{forward.1} parent=11 // pred_fallthru
        _
      // Predicated region
      $region29: #{forward.1} parent=11 // pred_check
        %p294 = pneg %p199
      $region30: #{forward.1} parent=11 // pred_check_branch
        %296 = sbr.rel (%p294) target = $region32
      $region31: #{forward.1} parent=11 // pred_region
        _
      $region32: #{forward.1} parent=11 // pred_fallthru
        _
      // Predicated region
      $region33: #{forward.1} parent=11 // pred_check
        %p297 = pneg %p220
      $region34: #{forward.1} parent=11 // pred_check_branch
        %299 = sbr.rel (%p297) target = $region36
      $region35: #{forward.1} parent=11 // pred_region
        _
      $region36: #{forward.1} parent=11 // pred_fallthru
        _
      // Predicated region
      $region37: #{forward.1} parent=11 // pred_check
        %p300 = pneg %p241
      $region38: #{forward.1} parent=11 // pred_check_branch
        %302 = sbr.rel (%p300) target = $region40
      $region39: #{forward.1} parent=11 // pred_region
        _
      $region40: #{forward.1} parent=11 // pred_fallthru
        _
    $region12: #{forward.1} parent=5 // pred_fallthru
      _
    %p303 = scmp.lt.s32.totalorder %s16, 2
    // Predicated region
    $region41: #{forward.1} parent=5 // pred_check
      %p304 = pneg %p303
    $region42: #{forward.1} parent=5 // pred_check_branch
      %306 = sbr.rel (%p304) target = $region44
    $region43: #{forward.1} parent=5 // pred_region
      // Predicated region
      $region45: #{forward.1} parent=43 // pred_check
        %p307 = pneg %p36
      $region46: #{forward.1} parent=43 // pred_check_branch
        %309 = sbr.rel (%p307) target = $region48
      $region47: #{forward.1} parent=43 // pred_region
        %p310 = scmp.lt.s32.totalorder %s16, 1
        %s311 = scalar_select %p310, %s16, 1
        %s312 = smul.addr %s311, 32
        %s313 = smul.addr %s312, 8
        %s314 = scalar_lea.vmem %s0, %s313
      $region48: #{forward.1} parent=43 // pred_fallthru
        _
      // Predicated region
      $region49: #{forward.1} parent=43 // pred_check
        %p315 = pneg %p62
      $region50: #{forward.1} parent=43 // pred_check_branch
        %317 = sbr.rel (%p315) target = $region52
      $region51: #{forward.1} parent=43 // pred_region
        %p318 = scmp.lt.s32.totalorder %s16, 1
        %s319 = scalar_select %p318, %s16, 1
        %s320 = smul.addr %s319, 64
        %s321 = smul.addr %s320, 8
        %s322 = scalar_lea.vmem %s1, %s321
      $region52: #{forward.1} parent=43 // pred_fallthru
        _
      // Predicated region
      $region53: #{forward.1} parent=43 // pred_check
        %p323 = pneg %p88
      $region54: #{forward.1} parent=43 // pred_check_branch
        %325 = sbr.rel (%p323) target = $region56
      $region55: #{forward.1} parent=43 // pred_region
        %p326 = scmp.lt.s32.totalorder %s16, 1
        %s327 = scalar_select %p326, %s16, 1
        %s328 = smul.addr %s327, 4
        %s329 = scalar_lea.vmem %s2, %s328
      $region56: #{forward.1} parent=43 // pred_fallthru
        _
    $region44: #{forward.1} parent=5 // pred_fallthru
      _
    %p330 = scmp.le.s32.totalorder 1, %s16
    %p331 = scmp.lt.s32.totalorder %s16, 3
    %p332 = pnand %p330, %p331
    %p333 = pneg %p332
    // Predicated region
    $region57: #{forward.1} parent=5 // pred_check
      _
    $region58: #{forward.1} parent=5 // pred_check_branch
      %335 = sbr.rel (%p332) target = $region60
    $region59: #{forward.1} parent=5 // pred_region
      %s336 = ssub.s32 %s16, 1
      %p337 = scmp.lt.s32.totalorder %s21, 1
      %s338 = scalar_select %p337, %s21, 1
      %s339 = smul.addr %s338, 32
      %s340 = smul.addr %s339, 8
      %s341 = scalar_lea.vmem %s0, %s340
      %p342 = pneg %p42
      %p343 = pneg %p39
      %p344 = scmp.lt.s32.totalorder %s21, 1
      %s345 = scalar_select %p344, %s21, 1
      %s346 = smul.addr %s345, 64
      %s347 = smul.addr %s346, 8
      %s348 = scalar_lea.vmem %s1, %s347
      %p349 = pneg %p68
      %p350 = pneg %p65
      %p351 = scmp.lt.s32.totalorder %s21, 1
      %s352 = scalar_select %p351, %s21, 1
      %s353 = smul.addr %s352, 4
      %s354 = scalar_lea.vmem %s2, %s353
      %p355 = pneg %p94
      %p356 = pneg %p91
      %p357 = pneg %p115
      %p358 = pneg %p112
      %p359 = pneg %p136
      %p360 = pneg %p133
      %p361 = pneg %p157
      %p362 = pneg %p154
      %p363 = pneg %p178
      %p364 = pneg %p175
      %p365 = pneg %p199
      %p366 = pneg %p196
      %p367 = pneg %p220
      %p368 = pneg %p217
      %p369 = pneg %p241
      %p370 = pneg %p238
      %p371 = pneg %p267
      %p372 = pneg %p264
      %s373 = smul.u32 32, %s21
      %p374 = scmp.lt.s32.totalorder %s373, 63
      %s375 = scalar_select %p374, %s373, 63
      %s376 = smul.addr %s375, 8
      %s377 = scalar_lea.vmem %s10, %s376
      %p378 = scmp.lt.s32.totalorder %s21, 1
      %s379 = scalar_select %p378, %s21, 1
      %s380 = smul.addr %s379, 32
      %s381 = smul.addr %s380, 8
      %s382 = scalar_lea.vmem %s0, %s381
      %p383 = scmp.lt.s32.totalorder %s21, 1
      %s384 = scalar_select %p383, %s21, 1
      %s385 = smul.addr %s384, 64
      %s386 = smul.addr %s385, 8
      %s387 = scalar_lea.vmem %s1, %s386
      %p388 = scmp.lt.s32.totalorder %s21, 1
      %s389 = scalar_select %p388, %s21, 1
      %s390 = smul.addr %s389, 4
      %s391 = scalar_lea.vmem %s2, %s390
      %s392 = smul.u32 32, %s21
      %p393 = scmp.lt.s32.totalorder %s392, 63
      %s394 = scalar_select %p393, %s392, 63
      %s395 = smul.addr %s394, 8
      %s396 = scalar_lea.vmem %s10, %s395
      %s397 = smul.u32 32, %s21
      %v399 = vlaneseq
      %v400 = vand.u32 %v399, 127
      %v401 = vld [vmem:[%s382] sm:$0xff]
      %v402 = vld [vmem:[%s382 + $0x8] sm:$0xff]
      %v403 = vld [vmem:[%s382 + $0x10] sm:$0xff]
      %v404 = vld [vmem:[%s382 + $0x18] sm:$0xff]
      %v405 = vld [vmem:[%s382 + $0x20] sm:$0xff]
      %v406 = vld [vmem:[%s382 + $0x28] sm:$0xff]
      %v407 = vld [vmem:[%s382 + $0x30] sm:$0xff]
      %v408 = vld [vmem:[%s382 + $0x38] sm:$0xff]
      %v409 = vld [vmem:[%s382 + $0x40] sm:$0xff]
      %v410 = vld [vmem:[%s382 + $0x48] sm:$0xff]
      %v411 = vld [vmem:[%s382 + $0x50] sm:$0xff]
      %v412 = vld [vmem:[%s382 + $0x58] sm:$0xff]
      %v413 = vld [vmem:[%s382 + $0x60] sm:$0xff]
      %v414 = vld [vmem:[%s382 + $0x68] sm:$0xff]
      %v415 = vld [vmem:[%s382 + $0x70] sm:$0xff]
      %v416 = vld [vmem:[%s382 + $0x78] sm:$0xff]
      %v417 = vld [vmem:[%s382 + $0x80] sm:$0xff]
      %v418 = vld [vmem:[%s382 + $0x88] sm:$0xff]
      %v419 = vld [vmem:[%s382 + $0x90] sm:$0xff]
      %v420 = vld [vmem:[%s382 + $0x98] sm:$0xff]
      %v421 = vld [vmem:[%s382 + $0xa0] sm:$0xff]
      %v422 = vld [vmem:[%s382 + $0xa8] sm:$0xff]
      %v423 = vld [vmem:[%s382 + $0xb0] sm:$0xff]
      %v424 = vld [vmem:[%s382 + $0xb8] sm:$0xff]
      %v425 = vld [vmem:[%s382 + $0xc0] sm:$0xff]
      %v426 = vld [vmem:[%s382 + $0xc8] sm:$0xff]
      %v427 = vld [vmem:[%s382 + $0xd0] sm:$0xff]
      %v428 = vld [vmem:[%s382 + $0xd8] sm:$0xff]
      %v429 = vld [vmem:[%s382 + $0xe0] sm:$0xff]
      %v430 = vld [vmem:[%s382 + $0xe8] sm:$0xff]
      %v431 = vld [vmem:[%s382 + $0xf0] sm:$0xff]
      %v432 = vld [vmem:[%s382 + $0xf8] sm:$0xff]
      %vm433 = vcmp.eq.s32.totalorder %v400, %v401
      %vm434 = vcmp.eq.s32.totalorder %v400, %v402
      %vm435 = vcmp.eq.s32.totalorder %v400, %v403
      %vm436 = vcmp.eq.s32.totalorder %v400, %v404
      %vm437 = vcmp.eq.s32.totalorder %v400, %v405
      %vm438 = vcmp.eq.s32.totalorder %v400, %v406
      %vm439 = vcmp.eq.s32.totalorder %v400, %v407
      %vm440 = vcmp.eq.s32.totalorder %v400, %v408
      %vm441 = vcmp.eq.s32.totalorder %v400, %v409
      %vm442 = vcmp.eq.s32.totalorder %v400, %v410
      %vm443 = vcmp.eq.s32.totalorder %v400, %v411
      %vm444 = vcmp.eq.s32.totalorder %v400, %v412
      %vm445 = vcmp.eq.s32.totalorder %v400, %v413
      %vm446 = vcmp.eq.s32.totalorder %v400, %v414
      %vm447 = vcmp.eq.s32.totalorder %v400, %v415
      %vm448 = vcmp.eq.s32.totalorder %v400, %v416
      %vm449 = vcmp.eq.s32.totalorder %v400, %v417
      %vm450 = vcmp.eq.s32.totalorder %v400, %v418
      %vm451 = vcmp.eq.s32.totalorder %v400, %v419
      %vm452 = vcmp.eq.s32.totalorder %v400, %v420
      %vm453 = vcmp.eq.s32.totalorder %v400, %v421
      %vm454 = vcmp.eq.s32.totalorder %v400, %v422
      %vm455 = vcmp.eq.s32.totalorder %v400, %v423
      %vm456 = vcmp.eq.s32.totalorder %v400, %v424
      %vm457 = vcmp.eq.s32.totalorder %v400, %v425
      %vm458 = vcmp.eq.s32.totalorder %v400, %v426
      %vm459 = vcmp.eq.s32.totalorder %v400, %v427
      %vm460 = vcmp.eq.s32.totalorder %v400, %v428
      %vm461 = vcmp.eq.s32.totalorder %v400, %v429
      %vm462 = vcmp.eq.s32.totalorder %v400, %v430
      %vm463 = vcmp.eq.s32.totalorder %v400, %v431
      %vm464 = vcmp.eq.s32.totalorder %v400, %v432
      %v465 = vsel %vm433, 1, 0
      %v466 = vsel %vm434, 1, 0
      %v467 = vsel %vm435, 1, 0
      %v468 = vsel %vm436, 1, 0
      %v469 = vsel %vm437, 1, 0
      %v470 = vsel %vm438, 1, 0
      %v471 = vsel %vm439, 1, 0
      %v472 = vsel %vm440, 1, 0
      %v473 = vsel %vm441, 1, 0
      %v474 = vsel %vm442, 1, 0
      %v475 = vsel %vm443, 1, 0
      %v476 = vsel %vm444, 1, 0
      %v477 = vsel %vm445, 1, 0
      %v478 = vsel %vm446, 1, 0
      %v479 = vsel %vm447, 1, 0
      %v480 = vsel %vm448, 1, 0
      %v481 = vsel %vm449, 1, 0
      %v482 = vsel %vm450, 1, 0
      %v483 = vsel %vm451, 1, 0
      %v484 = vsel %vm452, 1, 0
      %v485 = vsel %vm453, 1, 0
      %v486 = vsel %vm454, 1, 0
      %v487 = vsel %vm455, 1, 0
      %v488 = vsel %vm456, 1, 0
      %v489 = vsel %vm457, 1, 0
      %v490 = vsel %vm458, 1, 0
      %v491 = vsel %vm459, 1, 0
      %v492 = vsel %vm460, 1, 0
      %v493 = vsel %vm461, 1, 0
      %v494 = vsel %vm462, 1, 0
      %v495 = vsel %vm463, 1, 0
      %v496 = vsel %vm464, 1, 0
      %v497 = vcvt.s32.f32 %v465
      %v498 = vcvt.s32.f32 %v466
      %v499 = vcvt.s32.f32 %v467
      %v500 = vcvt.s32.f32 %v468
      %v501 = vcvt.s32.f32 %v469
      %v502 = vcvt.s32.f32 %v470
      %v503 = vcvt.s32.f32 %v471
      %v504 = vcvt.s32.f32 %v472
      %v505 = vcvt.s32.f32 %v473
      %v506 = vcvt.s32.f32 %v474
      %v507 = vcvt.s32.f32 %v475
      %v508 = vcvt.s32.f32 %v476
      %v509 = vcvt.s32.f32 %v477
      %v510 = vcvt.s32.f32 %v478
      %v511 = vcvt.s32.f32 %v479
      %v512 = vcvt.s32.f32 %v480
      %v513 = vcvt.s32.f32 %v481
      %v514 = vcvt.s32.f32 %v482
      %v515 = vcvt.s32.f32 %v483
      %v516 = vcvt.s32.f32 %v484
      %v517 = vcvt.s32.f32 %v485
      %v518 = vcvt.s32.f32 %v486
      %v519 = vcvt.s32.f32 %v487
      %v520 = vcvt.s32.f32 %v488
      %v521 = vcvt.s32.f32 %v489
      %v522 = vcvt.s32.f32 %v490
      %v523 = vcvt.s32.f32 %v491
      %v524 = vcvt.s32.f32 %v492
      %v525 = vcvt.s32.f32 %v493
      %v526 = vcvt.s32.f32 %v494
      %v527 = vcvt.s32.f32 %v495
      %v528 = vcvt.s32.f32 %v496
      %v529 = vpack.c.bf16 %v498, %v497
      %v530 = vpack.c.bf16 %v500, %v499
      %v531 = vpack.c.bf16 %v502, %v501
      %v532 = vpack.c.bf16 %v504, %v503
      %v533 = vpack.c.bf16 %v506, %v505
      %v534 = vpack.c.bf16 %v508, %v507
      %v535 = vpack.c.bf16 %v510, %v509
      %v536 = vpack.c.bf16 %v512, %v511
      %v537 = vpack.c.bf16 %v514, %v513
      %v538 = vpack.c.bf16 %v516, %v515
      %v539 = vpack.c.bf16 %v518, %v517
      %v540 = vpack.c.bf16 %v520, %v519
      %v541 = vpack.c.bf16 %v522, %v521
      %v542 = vpack.c.bf16 %v524, %v523
      %v543 = vpack.c.bf16 %v526, %v525
      %v544 = vpack.c.bf16 %v528, %v527
      %v545 = vld [vmem:[%s3] sm:$0xf]
      %v546 = vld [vmem:[%s3 + $0x4] sm:$0xf]
      %v547 = vld [vmem:[%s3 + $0x8] sm:$0xf]
      %v548 = vld [vmem:[%s3 + $0xc] sm:$0xf]
      %v553 = vunpack.c.l.b16 %v545
      %v554 = vunpack.c.l.b16 %v546
      %v555 = vunpack.c.l.b16 %v547
      %v556 = vunpack.c.l.b16 %v548
      %v557 = vpack.c.b16 %v554, %v553
      %v558 = vpack.c.b16 %v556, %v555
      %vm561 = vcmask 261120
      %v563 = vsel %vm561, %v529, 0
      %v566 = vsel %vm561, %v530, 0
      %v569 = vsel %vm561, %v531, 0
      %v572 = vsel %vm561, %v532, 0
      %v575 = vsel %vm561, %v533, 0
      %v578 = vsel %vm561, %v534, 0
      %v581 = vsel %vm561, %v535, 0
      %v584 = vsel %vm561, %v536, 0
      %v587 = vsel %vm561, %v537, 0
      %v590 = vsel %vm561, %v538, 0
      %v593 = vsel %vm561, %v539, 0
      %v596 = vsel %vm561, %v540, 0
      %v599 = vsel %vm561, %v541, 0
      %v602 = vsel %vm561, %v542, 0
      %v605 = vsel %vm561, %v543, 0
      %v608 = vsel %vm561, %v544, 0
      %610 = vmatprep.subr.bf16.mxu0 0
      %611 = vmatpush1.bf16.msra.mxu0 0
      %612 = vmatprep.subr.bf16.mxu0 0
      %613 = vmatpush1.bf16.msra.mxu0 0
      %614 = vmatprep.subr.bf16.mxu0 0
      %615 = vmatpush1.bf16.msra.mxu0 0
      %616 = vmatprep.subr.bf16.mxu0 0
      %617 = vmatpush1.bf16.msra.mxu0 0
      %618 = vmatprep.subr.bf16.mxu0 0
      %619 = vmatpush1.bf16.msra.mxu0 0
      %620 = vmatprep.subr.bf16.mxu0 0
      %621 = vmatpush1.bf16.msra.mxu0 0
      %622 = vmatprep.subr.bf16.mxu0 0
      %623 = vmatpush1.bf16.msra.mxu0 %v558
      %624 = vmatprep.subr.bf16.mxu0 0
      %625 = vmatpush1.bf16.msra.mxu0 %v557
      %626 = vmatprep.subr.bf16.mxu0 0
      %627 = vmatpush2.bf16.msra.mxu0 0
      %628 = vmatprep.subr.bf16.mxu0 0
      %629 = vmatpush2.bf16.msra.mxu0 0
      %630 = vmatprep.subr.bf16.mxu0 0
      %631 = vmatpush2.bf16.msra.mxu0 0
      %632 = vmatprep.subr.bf16.mxu0 0
      %633 = vmatpush2.bf16.msra.mxu0 0
      %634 = vmatprep.subr.bf16.mxu0 0
      %635 = vmatpush2.bf16.msra.mxu0 0
      %636 = vmatprep.subr.bf16.mxu0 0
      %637 = vmatpush2.bf16.msra.mxu0 0
      %638 = vmatprep.subr.bf16.mxu0 0
      %639 = vmatpush2.bf16.msra.mxu0 0
      %640 = vmatprep.subr.bf16.mxu0 0
      %641 = vmatpush2.bf16.msra.mxu0 0
      %642 = vmatprep.mubr.bf16.mxu0 0
      %643 = vmatmul.mubr.bf16.gmra.mxu0 %v563
      %v644 = vpop.f32.mrf.mxu0
      %v645 = vadd.f32 0.0, %v644
      %v646 = vpop.f32.mrf.mxu0
      %v647 = vpop.f32.mrf.mxu0
      %v648 = vadd.f32 0.0, %v647
      %v649 = vpop.f32.mrf.mxu0
      %650 = vmatprep.mubr.bf16.mxu0 0
      %651 = vmatmul.mubr.bf16.gmra.mxu0 %v566
      %v652 = vpop.f32.mrf.mxu0
      %v653 = vadd.f32 0.0, %v652
      %v654 = vpop.f32.mrf.mxu0
      %v655 = vpop.f32.mrf.mxu0
      %v656 = vadd.f32 0.0, %v655
      %v657 = vpop.f32.mrf.mxu0
      %658 = vmatprep.mubr.bf16.mxu0 0
      %659 = vmatmul.mubr.bf16.gmra.mxu0 %v569
      %v660 = vpop.f32.mrf.mxu0
      %v661 = vadd.f32 0.0, %v660
      %v662 = vpop.f32.mrf.mxu0
      %v663 = vpop.f32.mrf.mxu0
      %v664 = vadd.f32 0.0, %v663
      %v665 = vpop.f32.mrf.mxu0
      %666 = vmatprep.mubr.bf16.mxu0 0
      %667 = vmatmul.mubr.bf16.gmra.mxu0 %v572
      %v668 = vpop.f32.mrf.mxu0
      %v669 = vadd.f32 0.0, %v668
      %v670 = vpop.f32.mrf.mxu0
      %v671 = vpop.f32.mrf.mxu0
      %v672 = vadd.f32 0.0, %v671
      %v673 = vpop.f32.mrf.mxu0
      %674 = vmatprep.mubr.bf16.mxu0 0
      %675 = vmatmul.mubr.bf16.gmra.mxu0 %v575
      %v676 = vpop.f32.mrf.mxu0
      %v677 = vadd.f32 0.0, %v676
      %v678 = vpop.f32.mrf.mxu0
      %v679 = vpop.f32.mrf.mxu0
      %v680 = vadd.f32 0.0, %v679
      %v681 = vpop.f32.mrf.mxu0
      %682 = vmatprep.mubr.bf16.mxu0 0
      %683 = vmatmul.mubr.bf16.gmra.mxu0 %v578
      %v684 = vpop.f32.mrf.mxu0
      %v685 = vadd.f32 0.0, %v684
      %v686 = vpop.f32.mrf.mxu0
      %v687 = vpop.f32.mrf.mxu0
      %v688 = vadd.f32 0.0, %v687
      %v689 = vpop.f32.mrf.mxu0
      %690 = vmatprep.mubr.bf16.mxu0 0
      %691 = vmatmul.mubr.bf16.gmra.mxu0 %v581
      %v692 = vpop.f32.mrf.mxu0
      %v693 = vadd.f32 0.0, %v692
      %v694 = vpop.f32.mrf.mxu0
      %v695 = vpop.f32.mrf.mxu0
      %v696 = vadd.f32 0.0, %v695
      %v697 = vpop.f32.mrf.mxu0
      %698 = vmatprep.mubr.bf16.mxu0 0
      %699 = vmatmul.mubr.bf16.gmra.mxu0 %v584
      %v700 = vpop.f32.mrf.mxu0
      %v701 = vadd.f32 0.0, %v700
      %v702 = vpop.f32.mrf.mxu0
      %v703 = vpop.f32.mrf.mxu0
      %v704 = vadd.f32 0.0, %v703
      %v705 = vpop.f32.mrf.mxu0
      %706 = vmatprep.mubr.bf16.mxu0 0
      %707 = vmatmul.mubr.bf16.gmra.mxu0 %v587
      %v708 = vpop.f32.mrf.mxu0
      %v709 = vadd.f32 0.0, %v708
      %v710 = vpop.f32.mrf.mxu0
      %v711 = vpop.f32.mrf.mxu0
      %v712 = vadd.f32 0.0, %v711
      %v713 = vpop.f32.mrf.mxu0
      %714 = vmatprep.mubr.bf16.mxu0 0
      %715 = vmatmul.mubr.bf16.gmra.mxu0 %v590
      %v716 = vpop.f32.mrf.mxu0
      %v717 = vadd.f32 0.0, %v716
      %v718 = vpop.f32.mrf.mxu0
      %v719 = vpop.f32.mrf.mxu0
      %v720 = vadd.f32 0.0, %v719
      %v721 = vpop.f32.mrf.mxu0
      %722 = vmatprep.mubr.bf16.mxu0 0
      %723 = vmatmul.mubr.bf16.gmra.mxu0 %v593
      %v724 = vpop.f32.mrf.mxu0
      %v725 = vadd.f32 0.0, %v724
      %v726 = vpop.f32.mrf.mxu0
      %v727 = vpop.f32.mrf.mxu0
      %v728 = vadd.f32 0.0, %v727
      %v729 = vpop.f32.mrf.mxu0
      %730 = vmatprep.mubr.bf16.mxu0 0
      %731 = vmatmul.mubr.bf16.gmra.mxu0 %v596
      %v732 = vpop.f32.mrf.mxu0
      %v733 = vadd.f32 0.0, %v732
      %v734 = vpop.f32.mrf.mxu0
      %v735 = vpop.f32.mrf.mxu0
      %v736 = vadd.f32 0.0, %v735
      %v737 = vpop.f32.mrf.mxu0
      %738 = vmatprep.mubr.bf16.mxu0 0
      %739 = vmatmul.mubr.bf16.gmra.mxu0 %v599
      %v740 = vpop.f32.mrf.mxu0
      %v741 = vadd.f32 0.0, %v740
      %v742 = vpop.f32.mrf.mxu0
      %v743 = vpop.f32.mrf.mxu0
      %v744 = vadd.f32 0.0, %v743
      %v745 = vpop.f32.mrf.mxu0
      %746 = vmatprep.mubr.bf16.mxu0 0
      %747 = vmatmul.mubr.bf16.gmra.mxu0 %v602
      %v748 = vpop.f32.mrf.mxu0
      %v749 = vadd.f32 0.0, %v748
      %v750 = vpop.f32.mrf.mxu0
      %v751 = vpop.f32.mrf.mxu0
      %v752 = vadd.f32 0.0, %v751
      %v753 = vpop.f32.mrf.mxu0
      %754 = vmatprep.mubr.bf16.mxu0 0
      %755 = vmatmul.mubr.bf16.gmra.mxu0 %v605
      %v756 = vpop.f32.mrf.mxu0
      %v757 = vadd.f32 0.0, %v756
      %v758 = vpop.f32.mrf.mxu0
      %v759 = vpop.f32.mrf.mxu0
      %v760 = vadd.f32 0.0, %v759
      %v761 = vpop.f32.mrf.mxu0
      %762 = vmatprep.mubr.bf16.mxu0 0
      %763 = vmatmul.mubr.bf16.gmra.mxu0 %v608
      %v764 = vpop.f32.mrf.mxu0
      %v765 = vadd.f32 0.0, %v764
      %v766 = vpop.f32.mrf.mxu0
      %v767 = vpop.f32.mrf.mxu0
      %v768 = vadd.f32 0.0, %v767
      %v769 = vpop.f32.mrf.mxu0
      %770 = vdwg.mxu0
      %v771 = vadd.s32 %v400, 128
      %v772 = vld [vmem:[%s387] sm:$0xff]
      %v773 = vld [vmem:[%s387 + $0x8] sm:$0xff]
      %v774 = vld [vmem:[%s387 + $0x10] sm:$0xff]
      %v775 = vld [vmem:[%s387 + $0x18] sm:$0xff]
      %v776 = vld [vmem:[%s387 + $0x20] sm:$0xff]
      %v777 = vld [vmem:[%s387 + $0x28] sm:$0xff]
      %v778 = vld [vmem:[%s387 + $0x30] sm:$0xff]
      %v779 = vld [vmem:[%s387 + $0x38] sm:$0xff]
      %v780 = vld [vmem:[%s387 + $0x40] sm:$0xff]
      %v781 = vld [vmem:[%s387 + $0x48] sm:$0xff]
      %v782 = vld [vmem:[%s387 + $0x50] sm:$0xff]
      %v783 = vld [vmem:[%s387 + $0x58] sm:$0xff]
      %v784 = vld [vmem:[%s387 + $0x60] sm:$0xff]
      %v785 = vld [vmem:[%s387 + $0x68] sm:$0xff]
      %v786 = vld [vmem:[%s387 + $0x70] sm:$0xff]
      %v787 = vld [vmem:[%s387 + $0x78] sm:$0xff]
      %v788 = vld [vmem:[%s387 + $0x80] sm:$0xff]
      %v789 = vld [vmem:[%s387 + $0x88] sm:$0xff]
      %v790 = vld [vmem:[%s387 + $0x90] sm:$0xff]
      %v791 = vld [vmem:[%s387 + $0x98] sm:$0xff]
      %v792 = vld [vmem:[%s387 + $0xa0] sm:$0xff]
      %v793 = vld [vmem:[%s387 + $0xa8] sm:$0xff]
      %v794 = vld [vmem:[%s387 + $0xb0] sm:$0xff]
      %v795 = vld [vmem:[%s387 + $0xb8] sm:$0xff]
      %v796 = vld [vmem:[%s387 + $0xc0] sm:$0xff]
      %v797 = vld [vmem:[%s387 + $0xc8] sm:$0xff]
      %v798 = vld [vmem:[%s387 + $0xd0] sm:$0xff]
      %v799 = vld [vmem:[%s387 + $0xd8] sm:$0xff]
      %v800 = vld [vmem:[%s387 + $0xe0] sm:$0xff]
      %v801 = vld [vmem:[%s387 + $0xe8] sm:$0xff]
      %v802 = vld [vmem:[%s387 + $0xf0] sm:$0xff]
      %v803 = vld [vmem:[%s387 + $0xf8] sm:$0xff]
      %v804 = vld [vmem:[%s387 + $0x100] sm:$0xff]
      %v805 = vld [vmem:[%s387 + $0x108] sm:$0xff]
      %v806 = vld [vmem:[%s387 + $0x110] sm:$0xff]
      %v807 = vld [vmem:[%s387 + $0x118] sm:$0xff]
      %v808 = vld [vmem:[%s387 + $0x120] sm:$0xff]
      %v809 = vld [vmem:[%s387 + $0x128] sm:$0xff]
      %v810 = vld [vmem:[%s387 + $0x130] sm:$0xff]
      %v811 = vld [vmem:[%s387 + $0x138] sm:$0xff]
      %v812 = vld [vmem:[%s387 + $0x140] sm:$0xff]
      %v813 = vld [vmem:[%s387 + $0x148] sm:$0xff]
      %v814 = vld [vmem:[%s387 + $0x150] sm:$0xff]
      %v815 = vld [vmem:[%s387 + $0x158] sm:$0xff]
      %v816 = vld [vmem:[%s387 + $0x160] sm:$0xff]
      %v817 = vld [vmem:[%s387 + $0x168] sm:$0xff]
      %v818 = vld [vmem:[%s387 + $0x170] sm:$0xff]
      %v819 = vld [vmem:[%s387 + $0x178] sm:$0xff]
      %v820 = vld [vmem:[%s387 + $0x180] sm:$0xff]
      %v821 = vld [vmem:[%s387 + $0x188] sm:$0xff]
      %v822 = vld [vmem:[%s387 + $0x190] sm:$0xff]
      %v823 = vld [vmem:[%s387 + $0x198] sm:$0xff]
      %v824 = vld [vmem:[%s387 + $0x1a0] sm:$0xff]
      %v825 = vld [vmem:[%s387 + $0x1a8] sm:$0xff]
      %v826 = vld [vmem:[%s387 + $0x1b0] sm:$0xff]
      %v827 = vld [vmem:[%s387 + $0x1b8] sm:$0xff]
      %v828 = vld [vmem:[%s387 + $0x1c0] sm:$0xff]
      %v829 = vld [vmem:[%s387 + $0x1c8] sm:$0xff]
      %v830 = vld [vmem:[%s387 + $0x1d0] sm:$0xff]
      %v831 = vld [vmem:[%s387 + $0x1d8] sm:$0xff]
      %v832 = vld [vmem:[%s387 + $0x1e0] sm:$0xff]
      %v833 = vld [vmem:[%s387 + $0x1e8] sm:$0xff]
      %v834 = vld [vmem:[%s387 + $0x1f0] sm:$0xff]
      %v835 = vld [vmem:[%s387 + $0x1f8] sm:$0xff]
      %836 = vset.pattern.permute.xlu0 0
      %837 = vperm.xlu0 %836, %v772
      %v838 = vpop.permute.xlu0 %837
      %839 = vset.pattern.permute.xlu0 0
      %840 = vperm.xlu0 %839, %v773
      %v841 = vpop.permute.xlu0 %840
      %842 = vset.pattern.permute.xlu0 0
      %843 = vperm.xlu0 %842, %v774
      %v844 = vpop.permute.xlu0 %843
      %845 = vset.pattern.permute.xlu0 0
      %846 = vperm.xlu0 %845, %v775
      %v847 = vpop.permute.xlu0 %846
      %848 = vset.pattern.permute.xlu0 0
      %849 = vperm.xlu0 %848, %v776
      %v850 = vpop.permute.xlu0 %849
      %851 = vset.pattern.permute.xlu0 0
      %852 = vperm.xlu0 %851, %v777
      %v853 = vpop.permute.xlu0 %852
      %854 = vset.pattern.permute.xlu0 0
      %855 = vperm.xlu0 %854, %v778
      %v856 = vpop.permute.xlu0 %855
      %857 = vset.pattern.permute.xlu0 0
      %858 = vperm.xlu0 %857, %v779
      %v859 = vpop.permute.xlu0 %858
      %860 = vset.pattern.permute.xlu0 0
      %861 = vperm.xlu0 %860, %v780
      %v862 = vpop.permute.xlu0 %861
      %863 = vset.pattern.permute.xlu0 0
      %864 = vperm.xlu0 %863, %v781
      %v865 = vpop.permute.xlu0 %864
      %866 = vset.pattern.permute.xlu0 0
      %867 = vperm.xlu0 %866, %v782
      %v868 = vpop.permute.xlu0 %867
      %869 = vset.pattern.permute.xlu0 0
      %870 = vperm.xlu0 %869, %v783
      %v871 = vpop.permute.xlu0 %870
      %872 = vset.pattern.permute.xlu0 0
      %873 = vperm.xlu0 %872, %v784
      %v874 = vpop.permute.xlu0 %873
      %875 = vset.pattern.permute.xlu0 0
      %876 = vperm.xlu0 %875, %v785
      %v877 = vpop.permute.xlu0 %876
      %878 = vset.pattern.permute.xlu0 0
      %879 = vperm.xlu0 %878, %v786
      %v880 = vpop.permute.xlu0 %879
      %881 = vset.pattern.permute.xlu0 0
      %882 = vperm.xlu0 %881, %v787
      %v883 = vpop.permute.xlu0 %882
      %884 = vset.pattern.permute.xlu0 0
      %885 = vperm.xlu0 %884, %v788
      %v886 = vpop.permute.xlu0 %885
      %887 = vset.pattern.permute.xlu0 0
      %888 = vperm.xlu0 %887, %v789
      %v889 = vpop.permute.xlu0 %888
      %890 = vset.pattern.permute.xlu0 0
      %891 = vperm.xlu0 %890, %v790
      %v892 = vpop.permute.xlu0 %891
      %893 = vset.pattern.permute.xlu0 0
      %894 = vperm.xlu0 %893, %v791
      %v895 = vpop.permute.xlu0 %894
      %896 = vset.pattern.permute.xlu0 0
      %897 = vperm.xlu0 %896, %v792
      %v898 = vpop.permute.xlu0 %897
      %899 = vset.pattern.permute.xlu0 0
      %900 = vperm.xlu0 %899, %v793
      %v901 = vpop.permute.xlu0 %900
      %902 = vset.pattern.permute.xlu0 0
      %903 = vperm.xlu0 %902, %v794
      %v904 = vpop.permute.xlu0 %903
      %905 = vset.pattern.permute.xlu0 0
      %906 = vperm.xlu0 %905, %v795
      %v907 = vpop.permute.xlu0 %906
      %908 = vset.pattern.permute.xlu0 0
      %909 = vperm.xlu0 %908, %v796
      %v910 = vpop.permute.xlu0 %909
      %911 = vset.pattern.permute.xlu0 0
      %912 = vperm.xlu0 %911, %v797
      %v913 = vpop.permute.xlu0 %912
      %914 = vset.pattern.permute.xlu0 0
      %915 = vperm.xlu0 %914, %v798
      %v916 = vpop.permute.xlu0 %915
      %917 = vset.pattern.permute.xlu0 0
      %918 = vperm.xlu0 %917, %v799
      %v919 = vpop.permute.xlu0 %918
      %920 = vset.pattern.permute.xlu0 0
      %921 = vperm.xlu0 %920, %v800
      %v922 = vpop.permute.xlu0 %921
      %923 = vset.pattern.permute.xlu0 0
      %924 = vperm.xlu0 %923, %v801
      %v925 = vpop.permute.xlu0 %924
      %926 = vset.pattern.permute.xlu0 0
      %927 = vperm.xlu0 %926, %v802
      %v928 = vpop.permute.xlu0 %927
      %929 = vset.pattern.permute.xlu0 0
      %930 = vperm.xlu0 %929, %v803
      %v931 = vpop.permute.xlu0 %930
      %932 = vset.pattern.permute.xlu0 0
      %933 = vperm.xlu0 %932, %v804
      %v934 = vpop.permute.xlu0 %933
      %935 = vset.pattern.permute.xlu0 0
      %936 = vperm.xlu0 %935, %v805
      %v937 = vpop.permute.xlu0 %936
      %938 = vset.pattern.permute.xlu0 0
      %939 = vperm.xlu0 %938, %v806
      %v940 = vpop.permute.xlu0 %939
      %941 = vset.pattern.permute.xlu0 0
      %942 = vperm.xlu0 %941, %v807
      %v943 = vpop.permute.xlu0 %942
      %944 = vset.pattern.permute.xlu0 0
      %945 = vperm.xlu0 %944, %v808
      %v946 = vpop.permute.xlu0 %945
      %947 = vset.pattern.permute.xlu0 0
      %948 = vperm.xlu0 %947, %v809
      %v949 = vpop.permute.xlu0 %948
      %950 = vset.pattern.permute.xlu0 0
      %951 = vperm.xlu0 %950, %v810
      %v952 = vpop.permute.xlu0 %951
      %953 = vset.pattern.permute.xlu0 0
      %954 = vperm.xlu0 %953, %v811
      %v955 = vpop.permute.xlu0 %954
      %956 = vset.pattern.permute.xlu0 0
      %957 = vperm.xlu0 %956, %v812
      %v958 = vpop.permute.xlu0 %957
      %959 = vset.pattern.permute.xlu0 0
      %960 = vperm.xlu0 %959, %v813
      %v961 = vpop.permute.xlu0 %960
      %962 = vset.pattern.permute.xlu0 0
      %963 = vperm.xlu0 %962, %v814
      %v964 = vpop.permute.xlu0 %963
      %965 = vset.pattern.permute.xlu0 0
      %966 = vperm.xlu0 %965, %v815
      %v967 = vpop.permute.xlu0 %966
      %968 = vset.pattern.permute.xlu0 0
      %969 = vperm.xlu0 %968, %v816
      %v970 = vpop.permute.xlu0 %969
      %971 = vset.pattern.permute.xlu0 0
      %972 = vperm.xlu0 %971, %v817
      %v973 = vpop.permute.xlu0 %972
      %974 = vset.pattern.permute.xlu0 0
      %975 = vperm.xlu0 %974, %v818
      %v976 = vpop.permute.xlu0 %975
      %977 = vset.pattern.permute.xlu0 0
      %978 = vperm.xlu0 %977, %v819
      %v979 = vpop.permute.xlu0 %978
      %980 = vset.pattern.permute.xlu0 0
      %981 = vperm.xlu0 %980, %v820
      %v982 = vpop.permute.xlu0 %981
      %983 = vset.pattern.permute.xlu0 0
      %984 = vperm.xlu0 %983, %v821
      %v985 = vpop.permute.xlu0 %984
      %986 = vset.pattern.permute.xlu0 0
      %987 = vperm.xlu0 %986, %v822
      %v988 = vpop.permute.xlu0 %987
      %989 = vset.pattern.permute.xlu0 0
      %990 = vperm.xlu0 %989, %v823
      %v991 = vpop.permute.xlu0 %990
      %992 = vset.pattern.permute.xlu0 0
      %993 = vperm.xlu0 %992, %v824
      %v994 = vpop.permute.xlu0 %993
      %995 = vset.pattern.permute.xlu0 0
      %996 = vperm.xlu0 %995, %v825
      %v997 = vpop.permute.xlu0 %996
      %998 = vset.pattern.permute.xlu0 0
      %999 = vperm.xlu0 %998, %v826
      %v1000 = vpop.permute.xlu0 %999
      %1001 = vset.pattern.permute.xlu0 0
      %1002 = vperm.xlu0 %1001, %v827
      %v1003 = vpop.permute.xlu0 %1002
      %1004 = vset.pattern.permute.xlu0 0
      %1005 = vperm.xlu0 %1004, %v828
      %v1006 = vpop.permute.xlu0 %1005
      %1007 = vset.pattern.permute.xlu0 0
      %1008 = vperm.xlu0 %1007, %v829
      %v1009 = vpop.permute.xlu0 %1008
      %1010 = vset.pattern.permute.xlu0 0
      %1011 = vperm.xlu0 %1010, %v830
      %v1012 = vpop.permute.xlu0 %1011
      %1013 = vset.pattern.permute.xlu0 0
      %1014 = vperm.xlu0 %1013, %v831
      %v1015 = vpop.permute.xlu0 %1014
      %1016 = vset.pattern.permute.xlu0 0
      %1017 = vperm.xlu0 %1016, %v832
      %v1018 = vpop.permute.xlu0 %1017
      %1019 = vset.pattern.permute.xlu0 0
      %1020 = vperm.xlu0 %1019, %v833
      %v1021 = vpop.permute.xlu0 %1020
      %1022 = vset.pattern.permute.xlu0 0
      %1023 = vperm.xlu0 %1022, %v834
      %v1024 = vpop.permute.xlu0 %1023
      %1025 = vset.pattern.permute.xlu0 0
      %1026 = vperm.xlu0 %1025, %v835
      %v1027 = vpop.permute.xlu0 %1026
      %vm1028 = vcmp.eq.s32.totalorder %v400, %v838
      %vm1029 = vcmp.eq.s32.totalorder %v771, %v838
      %vm1030 = vcmp.eq.s32.totalorder %v400, %v841
      %vm1031 = vcmp.eq.s32.totalorder %v771, %v841
      %vm1032 = vcmp.eq.s32.totalorder %v400, %v844
      %vm1033 = vcmp.eq.s32.totalorder %v771, %v844
      %vm1034 = vcmp.eq.s32.totalorder %v400, %v847
      %vm1035 = vcmp.eq.s32.totalorder %v771, %v847
      %vm1036 = vcmp.eq.s32.totalorder %v400, %v850
      %vm1037 = vcmp.eq.s32.totalorder %v771, %v850
      %vm1038 = vcmp.eq.s32.totalorder %v400, %v853
      %vm1039 = vcmp.eq.s32.totalorder %v771, %v853
      %vm1040 = vcmp.eq.s32.totalorder %v400, %v856
      %vm1041 = vcmp.eq.s32.totalorder %v771, %v856
      %vm1042 = vcmp.eq.s32.totalorder %v400, %v859
      %vm1043 = vcmp.eq.s32.totalorder %v771, %v859
      %vm1044 = vcmp.eq.s32.totalorder %v400, %v862
      %vm1045 = vcmp.eq.s32.totalorder %v771, %v862
      %vm1046 = vcmp.eq.s32.totalorder %v400, %v865
      %vm1047 = vcmp.eq.s32.totalorder %v771, %v865
      %vm1048 = vcmp.eq.s32.totalorder %v400, %v868
      %vm1049 = vcmp.eq.s32.totalorder %v771, %v868
      %vm1050 = vcmp.eq.s32.totalorder %v400, %v871
      %vm1051 = vcmp.eq.s32.totalorder %v771, %v871
      %vm1052 = vcmp.eq.s32.totalorder %v400, %v874
      %vm1053 = vcmp.eq.s32.totalorder %v771, %v874
      %vm1054 = vcmp.eq.s32.totalorder %v400, %v877
      %vm1055 = vcmp.eq.s32.totalorder %v771, %v877
      %vm1056 = vcmp.eq.s32.totalorder %v400, %v880
      %vm1057 = vcmp.eq.s32.totalorder %v771, %v880
      %vm1058 = vcmp.eq.s32.totalorder %v400, %v883
      %vm1059 = vcmp.eq.s32.totalorder %v771, %v883
      %vm1060 = vcmp.eq.s32.totalorder %v400, %v886
      %vm1061 = vcmp.eq.s32.totalorder %v771, %v886
      %vm1062 = vcmp.eq.s32.totalorder %v400, %v889
      %vm1063 = vcmp.eq.s32.totalorder %v771, %v889
      %vm1064 = vcmp.eq.s32.totalorder %v400, %v892
      %vm1065 = vcmp.eq.s32.totalorder %v771, %v892
      %vm1066 = vcmp.eq.s32.totalorder %v400, %v895
      %vm1067 = vcmp.eq.s32.totalorder %v771, %v895
      %vm1068 = vcmp.eq.s32.totalorder %v400, %v898
      %vm1069 = vcmp.eq.s32.totalorder %v771, %v898
      %vm1070 = vcmp.eq.s32.totalorder %v400, %v901
      %vm1071 = vcmp.eq.s32.totalorder %v771, %v901
      %vm1072 = vcmp.eq.s32.totalorder %v400, %v904
      %vm1073 = vcmp.eq.s32.totalorder %v771, %v904
      %vm1074 = vcmp.eq.s32.totalorder %v400, %v907
      %vm1075 = vcmp.eq.s32.totalorder %v771, %v907
      %vm1076 = vcmp.eq.s32.totalorder %v400, %v910
      %vm1077 = vcmp.eq.s32.totalorder %v771, %v910
      %vm1078 = vcmp.eq.s32.totalorder %v400, %v913
      %vm1079 = vcmp.eq.s32.totalorder %v771, %v913
      %vm1080 = vcmp.eq.s32.totalorder %v400, %v916
      %vm1081 = vcmp.eq.s32.totalorder %v771, %v916
      %vm1082 = vcmp.eq.s32.totalorder %v400, %v919
      %vm1083 = vcmp.eq.s32.totalorder %v771, %v919
      %vm1084 = vcmp.eq.s32.totalorder %v400, %v922
      %vm1085 = vcmp.eq.s32.totalorder %v771, %v922
      %vm1086 = vcmp.eq.s32.totalorder %v400, %v925
      %vm1087 = vcmp.eq.s32.totalorder %v771, %v925
      %vm1088 = vcmp.eq.s32.totalorder %v400, %v928
      %vm1089 = vcmp.eq.s32.totalorder %v771, %v928
      %vm1090 = vcmp.eq.s32.totalorder %v400, %v931
      %vm1091 = vcmp.eq.s32.totalorder %v771, %v931
      %vm1092 = vcmp.eq.s32.totalorder %v400, %v934
      %vm1093 = vcmp.eq.s32.totalorder %v771, %v934
      %vm1094 = vcmp.eq.s32.totalorder %v400, %v937
      %vm1095 = vcmp.eq.s32.totalorder %v771, %v937
      %vm1096 = vcmp.eq.s32.totalorder %v400, %v940
      %vm1097 = vcmp.eq.s32.totalorder %v771, %v940
      %vm1098 = vcmp.eq.s32.totalorder %v400, %v943
      %vm1099 = vcmp.eq.s32.totalorder %v771, %v943
      %vm1100 = vcmp.eq.s32.totalorder %v400, %v946
      %vm1101 = vcmp.eq.s32.totalorder %v771, %v946
      %vm1102 = vcmp.eq.s32.totalorder %v400, %v949
      %vm1103 = vcmp.eq.s32.totalorder %v771, %v949
      %vm1104 = vcmp.eq.s32.totalorder %v400, %v952
      %vm1105 = vcmp.eq.s32.totalorder %v771, %v952
      %vm1106 = vcmp.eq.s32.totalorder %v400, %v955
      %vm1107 = vcmp.eq.s32.totalorder %v771, %v955
      %vm1108 = vcmp.eq.s32.totalorder %v400, %v958
      %vm1109 = vcmp.eq.s32.totalorder %v771, %v958
      %vm1110 = vcmp.eq.s32.totalorder %v400, %v961
      %vm1111 = vcmp.eq.s32.totalorder %v771, %v961
      %vm1112 = vcmp.eq.s32.totalorder %v400, %v964
      %vm1113 = vcmp.eq.s32.totalorder %v771, %v964
      %vm1114 = vcmp.eq.s32.totalorder %v400, %v967
      %vm1115 = vcmp.eq.s32.totalorder %v771, %v967
      %vm1116 = vcmp.eq.s32.totalorder %v400, %v970
      %vm1117 = vcmp.eq.s32.totalorder %v771, %v970
      %vm1118 = vcmp.eq.s32.totalorder %v400, %v973
      %vm1119 = vcmp.eq.s32.totalorder %v771, %v973
      %vm1120 = vcmp.eq.s32.totalorder %v400, %v976
      %vm1121 = vcmp.eq.s32.totalorder %v771, %v976
      %vm1122 = vcmp.eq.s32.totalorder %v400, %v979
      %vm1123 = vcmp.eq.s32.totalorder %v771, %v979
      %vm1124 = vcmp.eq.s32.totalorder %v400, %v982
      %vm1125 = vcmp.eq.s32.totalorder %v771, %v982
      %vm1126 = vcmp.eq.s32.totalorder %v400, %v985
      %vm1127 = vcmp.eq.s32.totalorder %v771, %v985
      %vm1128 = vcmp.eq.s32.totalorder %v400, %v988
      %vm1129 = vcmp.eq.s32.totalorder %v771, %v988
      %vm1130 = vcmp.eq.s32.totalorder %v400, %v991
      %vm1131 = vcmp.eq.s32.totalorder %v771, %v991
      %vm1132 = vcmp.eq.s32.totalorder %v400, %v994
      %vm1133 = vcmp.eq.s32.totalorder %v771, %v994
      %vm1134 = vcmp.eq.s32.totalorder %v400, %v997
      %vm1135 = vcmp.eq.s32.totalorder %v771, %v997
      %vm1136 = vcmp.eq.s32.totalorder %v400, %v1000
      %vm1137 = vcmp.eq.s32.totalorder %v771, %v1000
      %vm1138 = vcmp.eq.s32.totalorder %v400, %v1003
      %vm1139 = vcmp.eq.s32.totalorder %v771, %v1003
      %vm1140 = vcmp.eq.s32.totalorder %v400, %v1006
      %vm1141 = vcmp.eq.s32.totalorder %v771, %v1006
      %vm1142 = vcmp.eq.s32.totalorder %v400, %v1009
      %vm1143 = vcmp.eq.s32.totalorder %v771, %v1009
      %vm1144 = vcmp.eq.s32.totalorder %v400, %v1012
      %vm1145 = vcmp.eq.s32.totalorder %v771, %v1012
      %vm1146 = vcmp.eq.s32.totalorder %v400, %v1015
      %vm1147 = vcmp.eq.s32.totalorder %v771, %v1015
      %vm1148 = vcmp.eq.s32.totalorder %v400, %v1018
      %vm1149 = vcmp.eq.s32.totalorder %v771, %v1018
      %vm1150 = vcmp.eq.s32.totalorder %v400, %v1021
      %vm1151 = vcmp.eq.s32.totalorder %v771, %v1021
      %vm1152 = vcmp.eq.s32.totalorder %v400, %v1024
      %vm1153 = vcmp.eq.s32.totalorder %v771, %v1024
      %vm1154 = vcmp.eq.s32.totalorder %v400, %v1027
      %vm1155 = vcmp.eq.s32.totalorder %v771, %v1027
      %v1156 = vsel %vm1028, 1, 0
      %v1157 = vsel %vm1029, 1, 0
      %v1158 = vsel %vm1030, 1, 0
      %v1159 = vsel %vm1031, 1, 0
      %v1160 = vsel %vm1032, 1, 0
      %v1161 = vsel %vm1033, 1, 0
      %v1162 = vsel %vm1034, 1, 0
      %v1163 = vsel %vm1035, 1, 0
      %v1164 = vsel %vm1036, 1, 0
      %v1165 = vsel %vm1037, 1, 0
      %v1166 = vsel %vm1038, 1, 0
      %v1167 = vsel %vm1039, 1, 0
      %v1168 = vsel %vm1040, 1, 0
      %v1169 = vsel %vm1041, 1, 0
      %v1170 = vsel %vm1042, 1, 0
      %v1171 = vsel %vm1043, 1, 0
      %v1172 = vsel %vm1044, 1, 0
      %v1173 = vsel %vm1045, 1, 0
      %v1174 = vsel %vm1046, 1, 0
      %v1175 = vsel %vm1047, 1, 0
      %v1176 = vsel %vm1048, 1, 0
      %v1177 = vsel %vm1049, 1, 0
      %v1178 = vsel %vm1050, 1, 0
      %v1179 = vsel %vm1051, 1, 0
      %v1180 = vsel %vm1052, 1, 0
      %v1181 = vsel %vm1053, 1, 0
      %v1182 = vsel %vm1054, 1, 0
      %v1183 = vsel %vm1055, 1, 0
      %v1184 = vsel %vm1056, 1, 0
      %v1185 = vsel %vm1057, 1, 0
      %v1186 = vsel %vm1058, 1, 0
      %v1187 = vsel %vm1059, 1, 0
      %v1188 = vsel %vm1060, 1, 0
      %v1189 = vsel %vm1061, 1, 0
      %v1190 = vsel %vm1062, 1, 0
      %v1191 = vsel %vm1063, 1, 0
      %v1192 = vsel %vm1064, 1, 0
      %v1193 = vsel %vm1065, 1, 0
      %v1194 = vsel %vm1066, 1, 0
      %v1195 = vsel %vm1067, 1, 0
      %v1196 = vsel %vm1068, 1, 0
      %v1197 = vsel %vm1069, 1, 0
      %v1198 = vsel %vm1070, 1, 0
      %v1199 = vsel %vm1071, 1, 0
      %v1200 = vsel %vm1072, 1, 0
      %v1201 = vsel %vm1073, 1, 0
      %v1202 = vsel %vm1074, 1, 0
      %v1203 = vsel %vm1075, 1, 0
      %v1204 = vsel %vm1076, 1, 0
      %v1205 = vsel %vm1077, 1, 0
      %v1206 = vsel %vm1078, 1, 0
      %v1207 = vsel %vm1079, 1, 0
      %v1208 = vsel %vm1080, 1, 0
      %v1209 = vsel %vm1081, 1, 0
      %v1210 = vsel %vm1082, 1, 0
      %v1211 = vsel %vm1083, 1, 0
      %v1212 = vsel %vm1084, 1, 0
      %v1213 = vsel %vm1085, 1, 0
      %v1214 = vsel %vm1086, 1, 0
      %v1215 = vsel %vm1087, 1, 0
      %v1216 = vsel %vm1088, 1, 0
      %v1217 = vsel %vm1089, 1, 0
      %v1218 = vsel %vm1090, 1, 0
      %v1219 = vsel %vm1091, 1, 0
      %v1220 = vsel %vm1092, 1, 0
      %v1221 = vsel %vm1093, 1, 0
      %v1222 = vsel %vm1094, 1, 0
      %v1223 = vsel %vm1095, 1, 0
      %v1224 = vsel %vm1096, 1, 0
      %v1225 = vsel %vm1097, 1, 0
      %v1226 = vsel %vm1098, 1, 0
      %v1227 = vsel %vm1099, 1, 0
      %v1228 = vsel %vm1100, 1, 0
      %v1229 = vsel %vm1101, 1, 0
      %v1230 = vsel %vm1102, 1, 0
      %v1231 = vsel %vm1103, 1, 0
      %v1232 = vsel %vm1104, 1, 0
      %v1233 = vsel %vm1105, 1, 0
      %v1234 = vsel %vm1106, 1, 0
      %v1235 = vsel %vm1107, 1, 0
      %v1236 = vsel %vm1108, 1, 0
      %v1237 = vsel %vm1109, 1, 0
      %v1238 = vsel %vm1110, 1, 0
      %v1239 = vsel %vm1111, 1, 0
      %v1240 = vsel %vm1112, 1, 0
      %v1241 = vsel %vm1113, 1, 0
      %v1242 = vsel %vm1114, 1, 0
      %v1243 = vsel %vm1115, 1, 0
      %v1244 = vsel %vm1116, 1, 0
      %v1245 = vsel %vm1117, 1, 0
      %v1246 = vsel %vm1118, 1, 0
      %v1247 = vsel %vm1119, 1, 0
      %v1248 = vsel %vm1120, 1, 0
      %v1249 = vsel %vm1121, 1, 0
      %v1250 = vsel %vm1122, 1, 0
      %v1251 = vsel %vm1123, 1, 0
      %v1252 = vsel %vm1124, 1, 0
      %v1253 = vsel %vm1125, 1, 0
      %v1254 = vsel %vm1126, 1, 0
      %v1255 = vsel %vm1127, 1, 0
      %v1256 = vsel %vm1128, 1, 0
      %v1257 = vsel %vm1129, 1, 0
      %v1258 = vsel %vm1130, 1, 0
      %v1259 = vsel %vm1131, 1, 0
      %v1260 = vsel %vm1132, 1, 0
      %v1261 = vsel %vm1133, 1, 0
      %v1262 = vsel %vm1134, 1, 0
      %v1263 = vsel %vm1135, 1, 0
      %v1264 = vsel %vm1136, 1, 0
      %v1265 = vsel %vm1137, 1, 0
      %v1266 = vsel %vm1138, 1, 0
      %v1267 = vsel %vm1139, 1, 0
      %v1268 = vsel %vm1140, 1, 0
      %v1269 = vsel %vm1141, 1, 0
      %v1270 = vsel %vm1142, 1, 0
      %v1271 = vsel %vm1143, 1, 0
      %v1272 = vsel %vm1144, 1, 0
      %v1273 = vsel %vm1145, 1, 0
      %v1274 = vsel %vm1146, 1, 0
      %v1275 = vsel %vm1147, 1, 0
      %v1276 = vsel %vm1148, 1, 0
      %v1277 = vsel %vm1149, 1, 0
      %v1278 = vsel %vm1150, 1, 0
      %v1279 = vsel %vm1151, 1, 0
      %v1280 = vsel %vm1152, 1, 0
      %v1281 = vsel %vm1153, 1, 0
      %v1282 = vsel %vm1154, 1, 0
      %v1283 = vsel %vm1155, 1, 0
      %v1284 = vcvt.s32.f32 %v1156
      %v1285 = vcvt.s32.f32 %v1157
      %v1286 = vcvt.s32.f32 %v1158
      %v1287 = vcvt.s32.f32 %v1159
      %v1288 = vcvt.s32.f32 %v1160
      %v1289 = vcvt.s32.f32 %v1161
      %v1290 = vcvt.s32.f32 %v1162
      %v1291 = vcvt.s32.f32 %v1163
      %v1292 = vcvt.s32.f32 %v1164
      %v1293 = vcvt.s32.f32 %v1165
      %v1294 = vcvt.s32.f32 %v1166
      %v1295 = vcvt.s32.f32 %v1167
      %v1296 = vcvt.s32.f32 %v1168
      %v1297 = vcvt.s32.f32 %v1169
      %v1298 = vcvt.s32.f32 %v1170
      %v1299 = vcvt.s32.f32 %v1171
      %v1300 = vcvt.s32.f32 %v1172
      %v1301 = vcvt.s32.f32 %v1173
      %v1302 = vcvt.s32.f32 %v1174
      %v1303 = vcvt.s32.f32 %v1175
      %v1304 = vcvt.s32.f32 %v1176
      %v1305 = vcvt.s32.f32 %v1177
      %v1306 = vcvt.s32.f32 %v1178
      %v1307 = vcvt.s32.f32 %v1179
      %v1308 = vcvt.s32.f32 %v1180
      %v1309 = vcvt.s32.f32 %v1181
      %v1310 = vcvt.s32.f32 %v1182
      %v1311 = vcvt.s32.f32 %v1183
      %v1312 = vcvt.s32.f32 %v1184
      %v1313 = vcvt.s32.f32 %v1185
      %v1314 = vcvt.s32.f32 %v1186
      %v1315 = vcvt.s32.f32 %v1187
      %v1316 = vcvt.s32.f32 %v1188
      %v1317 = vcvt.s32.f32 %v1189
      %v1318 = vcvt.s32.f32 %v1190
      %v1319 = vcvt.s32.f32 %v1191
      %v1320 = vcvt.s32.f32 %v1192
      %v1321 = vcvt.s32.f32 %v1193
      %v1322 = vcvt.s32.f32 %v1194
      %v1323 = vcvt.s32.f32 %v1195
      %v1324 = vcvt.s32.f32 %v1196
      %v1325 = vcvt.s32.f32 %v1197
      %v1326 = vcvt.s32.f32 %v1198
      %v1327 = vcvt.s32.f32 %v1199
      %v1328 = vcvt.s32.f32 %v1200
      %v1329 = vcvt.s32.f32 %v1201
      %v1330 = vcvt.s32.f32 %v1202
      %v1331 = vcvt.s32.f32 %v1203
      %v1332 = vcvt.s32.f32 %v1204
      %v1333 = vcvt.s32.f32 %v1205
      %v1334 = vcvt.s32.f32 %v1206
      %v1335 = vcvt.s32.f32 %v1207
      %v1336 = vcvt.s32.f32 %v1208
      %v1337 = vcvt.s32.f32 %v1209
      %v1338 = vcvt.s32.f32 %v1210
      %v1339 = vcvt.s32.f32 %v1211
      %v1340 = vcvt.s32.f32 %v1212
      %v1341 = vcvt.s32.f32 %v1213
      %v1342 = vcvt.s32.f32 %v1214
      %v1343 = vcvt.s32.f32 %v1215
      %v1344 = vcvt.s32.f32 %v1216
      %v1345 = vcvt.s32.f32 %v1217
      %v1346 = vcvt.s32.f32 %v1218
      %v1347 = vcvt.s32.f32 %v1219
      %v1348 = vcvt.s32.f32 %v1220
      %v1349 = vcvt.s32.f32 %v1221
      %v1350 = vcvt.s32.f32 %v1222
      %v1351 = vcvt.s32.f32 %v1223
      %v1352 = vcvt.s32.f32 %v1224
      %v1353 = vcvt.s32.f32 %v1225
      %v1354 = vcvt.s32.f32 %v1226
      %v1355 = vcvt.s32.f32 %v1227
      %v1356 = vcvt.s32.f32 %v1228
      %v1357 = vcvt.s32.f32 %v1229
      %v1358 = vcvt.s32.f32 %v1230
      %v1359 = vcvt.s32.f32 %v1231
      %v1360 = vcvt.s32.f32 %v1232
      %v1361 = vcvt.s32.f32 %v1233
      %v1362 = vcvt.s32.f32 %v1234
      %v1363 = vcvt.s32.f32 %v1235
      %v1364 = vcvt.s32.f32 %v1236
      %v1365 = vcvt.s32.f32 %v1237
      %v1366 = vcvt.s32.f32 %v1238
      %v1367 = vcvt.s32.f32 %v1239
      %v1368 = vcvt.s32.f32 %v1240
      %v1369 = vcvt.s32.f32 %v1241
      %v1370 = vcvt.s32.f32 %v1242
      %v1371 = vcvt.s32.f32 %v1243
      %v1372 = vcvt.s32.f32 %v1244
      %v1373 = vcvt.s32.f32 %v1245
      %v1374 = vcvt.s32.f32 %v1246
      %v1375 = vcvt.s32.f32 %v1247
      %v1376 = vcvt.s32.f32 %v1248
      %v1377 = vcvt.s32.f32 %v1249
      %v1378 = vcvt.s32.f32 %v1250
      %v1379 = vcvt.s32.f32 %v1251
      %v1380 = vcvt.s32.f32 %v1252
      %v1381 = vcvt.s32.f32 %v1253
      %v1382 = vcvt.s32.f32 %v1254
      %v1383 = vcvt.s32.f32 %v1255
      %v1384 = vcvt.s32.f32 %v1256
      %v1385 = vcvt.s32.f32 %v1257
      %v1386 = vcvt.s32.f32 %v1258
      %v1387 = vcvt.s32.f32 %v1259
      %v1388 = vcvt.s32.f32 %v1260
      %v1389 = vcvt.s32.f32 %v1261
      %v1390 = vcvt.s32.f32 %v1262
      %v1391 = vcvt.s32.f32 %v1263
      %v1392 = vcvt.s32.f32 %v1264
      %v1393 = vcvt.s32.f32 %v1265
      %v1394 = vcvt.s32.f32 %v1266
      %v1395 = vcvt.s32.f32 %v1267
      %v1396 = vcvt.s32.f32 %v1268
      %v1397 = vcvt.s32.f32 %v1269
      %v1398 = vcvt.s32.f32 %v1270
      %v1399 = vcvt.s32.f32 %v1271
      %v1400 = vcvt.s32.f32 %v1272
      %v1401 = vcvt.s32.f32 %v1273
      %v1402 = vcvt.s32.f32 %v1274
      %v1403 = vcvt.s32.f32 %v1275
      %v1404 = vcvt.s32.f32 %v1276
      %v1405 = vcvt.s32.f32 %v1277
      %v1406 = vcvt.s32.f32 %v1278
      %v1407 = vcvt.s32.f32 %v1279
      %v1408 = vcvt.s32.f32 %v1280
      %v1409 = vcvt.s32.f32 %v1281
      %v1410 = vcvt.s32.f32 %v1282
      %v1411 = vcvt.s32.f32 %v1283
      %v1412 = vpack.c.bf16 %v1286, %v1284
      %v1413 = vpack.c.bf16 %v1287, %v1285
      %v1414 = vpack.c.bf16 %v1290, %v1288
      %v1415 = vpack.c.bf16 %v1291, %v1289
      %v1416 = vpack.c.bf16 %v1294, %v1292
      %v1417 = vpack.c.bf16 %v1295, %v1293
      %v1418 = vpack.c.bf16 %v1298, %v1296
      %v1419 = vpack.c.bf16 %v1299, %v1297
      %v1420 = vpack.c.bf16 %v1302, %v1300
      %v1421 = vpack.c.bf16 %v1303, %v1301
      %v1422 = vpack.c.bf16 %v1306, %v1304
      %v1423 = vpack.c.bf16 %v1307, %v1305
      %v1424 = vpack.c.bf16 %v1310, %v1308
      %v1425 = vpack.c.bf16 %v1311, %v1309
      %v1426 = vpack.c.bf16 %v1314, %v1312
      %v1427 = vpack.c.bf16 %v1315, %v1313
      %v1428 = vpack.c.bf16 %v1318, %v1316
      %v1429 = vpack.c.bf16 %v1319, %v1317
      %v1430 = vpack.c.bf16 %v1322, %v1320
      %v1431 = vpack.c.bf16 %v1323, %v1321
      %v1432 = vpack.c.bf16 %v1326, %v1324
      %v1433 = vpack.c.bf16 %v1327, %v1325
      %v1434 = vpack.c.bf16 %v1330, %v1328
      %v1435 = vpack.c.bf16 %v1331, %v1329
      %v1436 = vpack.c.bf16 %v1334, %v1332
      %v1437 = vpack.c.bf16 %v1335, %v1333
      %v1438 = vpack.c.bf16 %v1338, %v1336
      %v1439 = vpack.c.bf16 %v1339, %v1337
      %v1440 = vpack.c.bf16 %v1342, %v1340
      %v1441 = vpack.c.bf16 %v1343, %v1341
      %v1442 = vpack.c.bf16 %v1346, %v1344
      %v1443 = vpack.c.bf16 %v1347, %v1345
      %v1444 = vpack.c.bf16 %v1350, %v1348
      %v1445 = vpack.c.bf16 %v1351, %v1349
      %v1446 = vpack.c.bf16 %v1354, %v1352
      %v1447 = vpack.c.bf16 %v1355, %v1353
      %v1448 = vpack.c.bf16 %v1358, %v1356
      %v1449 = vpack.c.bf16 %v1359, %v1357
      %v1450 = vpack.c.bf16 %v1362, %v1360
      %v1451 = vpack.c.bf16 %v1363, %v1361
      %v1452 = vpack.c.bf16 %v1366, %v1364
      %v1453 = vpack.c.bf16 %v1367, %v1365
      %v1454 = vpack.c.bf16 %v1370, %v1368
      %v1455 = vpack.c.bf16 %v1371, %v1369
      %v1456 = vpack.c.bf16 %v1374, %v1372
      %v1457 = vpack.c.bf16 %v1375, %v1373
      %v1458 = vpack.c.bf16 %v1378, %v1376
      %v1459 = vpack.c.bf16 %v1379, %v1377
      %v1460 = vpack.c.bf16 %v1382, %v1380
      %v1461 = vpack.c.bf16 %v1383, %v1381
      %v1462 = vpack.c.bf16 %v1386, %v1384
      %v1463 = vpack.c.bf16 %v1387, %v1385
      %v1464 = vpack.c.bf16 %v1390, %v1388
      %v1465 = vpack.c.bf16 %v1391, %v1389
      %v1466 = vpack.c.bf16 %v1394, %v1392
      %v1467 = vpack.c.bf16 %v1395, %v1393
      %v1468 = vpack.c.bf16 %v1398, %v1396
      %v1469 = vpack.c.bf16 %v1399, %v1397
      %v1470 = vpack.c.bf16 %v1402, %v1400
      %v1471 = vpack.c.bf16 %v1403, %v1401
      %v1472 = vpack.c.bf16 %v1406, %v1404
      %v1473 = vpack.c.bf16 %v1407, %v1405
      %v1474 = vpack.c.bf16 %v1410, %v1408
      %v1475 = vpack.c.bf16 %v1411, %v1409
      %v1476 = vlaneseq
      %v1477 = vshrl.u32 %v1476, 7
      %v1478 = vadd.s32 %v1477, 8
      %v1479 = vadd.s32 %v1477, 16
      %v1480 = vadd.s32 %v1477, 24
      %v1481 = vadd.s32 %v1477, 32
      %v1482 = vadd.s32 %v1477, 40
      %v1483 = vadd.s32 %v1477, 48
      %v1484 = vadd.s32 %v1477, 56
      %v1485 = vadd.s32 %v1477, 64
      %v1486 = vadd.s32 %v1477, 72
      %v1487 = vadd.s32 %v1477, 80
      %v1488 = vadd.s32 %v1477, 88
      %v1489 = vadd.s32 %v1477, 96
      %v1490 = vadd.s32 %v1477, 104
      %v1491 = vadd.s32 %v1477, 112
      %v1492 = vadd.s32 %v1477, 120
      %v1493 = vadd.s32 %v1477, 128
      %v1494 = vadd.s32 %v1477, 136
      %v1495 = vadd.s32 %v1477, 144
      %v1496 = vadd.s32 %v1477, 152
      %v1497 = vadd.s32 %v1477, 160
      %v1498 = vadd.s32 %v1477, 168
      %v1499 = vadd.s32 %v1477, 176
      %v1500 = vadd.s32 %v1477, 184
      %v1501 = vadd.s32 %v1477, 192
      %v1502 = vadd.s32 %v1477, 200
      %v1503 = vadd.s32 %v1477, 208
      %v1504 = vadd.s32 %v1477, 216
      %v1505 = vadd.s32 %v1477, 224
      %v1506 = vadd.s32 %v1477, 232
      %v1507 = vadd.s32 %v1477, 240
      %v1508 = vadd.s32 %v1477, 248
      %v1509 = vld [vmem:[%s391] sm:$0xf]
      %v1510 = vlaneseq
      %v1511 = vshrl.u32 %v1510, 7
      %v1512 = vsub.s32 0, %v1511
      %v1513 = vrot.slane %v1509, %v1512
      %v1514 = vlaneseq
      %v1515 = vshrl.u32 %v1514, 7
      %v1516 = vsub.s32 1, %v1515
      %v1517 = vrot.slane %v1509, %v1516
      %v1518 = vlaneseq
      %v1519 = vshrl.u32 %v1518, 7
      %v1520 = vsub.s32 2, %v1519
      %v1521 = vrot.slane %v1509, %v1520
      %v1522 = vlaneseq
      %v1523 = vshrl.u32 %v1522, 7
      %v1524 = vsub.s32 3, %v1523
      %v1525 = vrot.slane %v1509, %v1524
      %vm1526 = vcmp.eq.s32.totalorder %v1477, %v1513
      %vm1527 = vcmp.eq.s32.totalorder %v1477, %v1517
      %vm1528 = vcmp.eq.s32.totalorder %v1477, %v1521
      %vm1529 = vcmp.eq.s32.totalorder %v1477, %v1525
      %vm1530 = vcmp.eq.s32.totalorder %v1478, %v1513
      %vm1531 = vcmp.eq.s32.totalorder %v1478, %v1517
      %vm1532 = vcmp.eq.s32.totalorder %v1478, %v1521
      %vm1533 = vcmp.eq.s32.totalorder %v1478, %v1525
      %vm1534 = vcmp.eq.s32.totalorder %v1479, %v1513
      %vm1535 = vcmp.eq.s32.totalorder %v1479, %v1517
      %vm1536 = vcmp.eq.s32.totalorder %v1479, %v1521
      %vm1537 = vcmp.eq.s32.totalorder %v1479, %v1525
      %vm1538 = vcmp.eq.s32.totalorder %v1480, %v1513
      %vm1539 = vcmp.eq.s32.totalorder %v1480, %v1517
      %vm1540 = vcmp.eq.s32.totalorder %v1480, %v1521
      %vm1541 = vcmp.eq.s32.totalorder %v1480, %v1525
      %vm1542 = vcmp.eq.s32.totalorder %v1481, %v1513
      %vm1543 = vcmp.eq.s32.totalorder %v1481, %v1517
      %vm1544 = vcmp.eq.s32.totalorder %v1481, %v1521
      %vm1545 = vcmp.eq.s32.totalorder %v1481, %v1525
      %vm1546 = vcmp.eq.s32.totalorder %v1482, %v1513
      %vm1547 = vcmp.eq.s32.totalorder %v1482, %v1517
      %vm1548 = vcmp.eq.s32.totalorder %v1482, %v1521
      %vm1549 = vcmp.eq.s32.totalorder %v1482, %v1525
      %vm1550 = vcmp.eq.s32.totalorder %v1483, %v1513
      %vm1551 = vcmp.eq.s32.totalorder %v1483, %v1517
      %vm1552 = vcmp.eq.s32.totalorder %v1483, %v1521
      %vm1553 = vcmp.eq.s32.totalorder %v1483, %v1525
      %vm1554 = vcmp.eq.s32.totalorder %v1484, %v1513
      %vm1555 = vcmp.eq.s32.totalorder %v1484, %v1517
      %vm1556 = vcmp.eq.s32.totalorder %v1484, %v1521
      %vm1557 = vcmp.eq.s32.totalorder %v1484, %v1525
      %vm1558 = vcmp.eq.s32.totalorder %v1485, %v1513
      %vm1559 = vcmp.eq.s32.totalorder %v1485, %v1517
      %vm1560 = vcmp.eq.s32.totalorder %v1485, %v1521
      %vm1561 = vcmp.eq.s32.totalorder %v1485, %v1525
      %vm1562 = vcmp.eq.s32.totalorder %v1486, %v1513
      %vm1563 = vcmp.eq.s32.totalorder %v1486, %v1517
      %vm1564 = vcmp.eq.s32.totalorder %v1486, %v1521
      %vm1565 = vcmp.eq.s32.totalorder %v1486, %v1525
      %vm1566 = vcmp.eq.s32.totalorder %v1487, %v1513
      %vm1567 = vcmp.eq.s32.totalorder %v1487, %v1517
      %vm1568 = vcmp.eq.s32.totalorder %v1487, %v1521
      %vm1569 = vcmp.eq.s32.totalorder %v1487, %v1525
      %vm1570 = vcmp.eq.s32.totalorder %v1488, %v1513
      %vm1571 = vcmp.eq.s32.totalorder %v1488, %v1517
      %vm1572 = vcmp.eq.s32.totalorder %v1488, %v1521
      %vm1573 = vcmp.eq.s32.totalorder %v1488, %v1525
      %vm1574 = vcmp.eq.s32.totalorder %v1489, %v1513
      %vm1575 = vcmp.eq.s32.totalorder %v1489, %v1517
      %vm1576 = vcmp.eq.s32.totalorder %v1489, %v1521
      %vm1577 = vcmp.eq.s32.totalorder %v1489, %v1525
      %vm1578 = vcmp.eq.s32.totalorder %v1490, %v1513
      %vm1579 = vcmp.eq.s32.totalorder %v1490, %v1517
      %vm1580 = vcmp.eq.s32.totalorder %v1490, %v1521
      %vm1581 = vcmp.eq.s32.totalorder %v1490, %v1525
      %vm1582 = vcmp.eq.s32.totalorder %v1491, %v1513
      %vm1583 = vcmp.eq.s32.totalorder %v1491, %v1517
      %vm1584 = vcmp.eq.s32.totalorder %v1491, %v1521
      %vm1585 = vcmp.eq.s32.totalorder %v1491, %v1525
      %vm1586 = vcmp.eq.s32.totalorder %v1492, %v1513
      %vm1587 = vcmp.eq.s32.totalorder %v1492, %v1517
      %vm1588 = vcmp.eq.s32.totalorder %v1492, %v1521
      %vm1589 = vcmp.eq.s32.totalorder %v1492, %v1525
      %vm1590 = vcmp.eq.s32.totalorder %v1493, %v1513
      %vm1591 = vcmp.eq.s32.totalorder %v1493, %v1517
      %vm1592 = vcmp.eq.s32.totalorder %v1493, %v1521
      %vm1593 = vcmp.eq.s32.totalorder %v1493, %v1525
      %vm1594 = vcmp.eq.s32.totalorder %v1494, %v1513
      %vm1595 = vcmp.eq.s32.totalorder %v1494, %v1517
      %vm1596 = vcmp.eq.s32.totalorder %v1494, %v1521
      %vm1597 = vcmp.eq.s32.totalorder %v1494, %v1525
      %vm1598 = vcmp.eq.s32.totalorder %v1495, %v1513
      %vm1599 = vcmp.eq.s32.totalorder %v1495, %v1517
      %vm1600 = vcmp.eq.s32.totalorder %v1495, %v1521
      %vm1601 = vcmp.eq.s32.totalorder %v1495, %v1525
      %vm1602 = vcmp.eq.s32.totalorder %v1496, %v1513
      %vm1603 = vcmp.eq.s32.totalorder %v1496, %v1517
      %vm1604 = vcmp.eq.s32.totalorder %v1496, %v1521
      %vm1605 = vcmp.eq.s32.totalorder %v1496, %v1525
      %vm1606 = vcmp.eq.s32.totalorder %v1497, %v1513
      %vm1607 = vcmp.eq.s32.totalorder %v1497, %v1517
      %vm1608 = vcmp.eq.s32.totalorder %v1497, %v1521
      %vm1609 = vcmp.eq.s32.totalorder %v1497, %v1525
      %vm1610 = vcmp.eq.s32.totalorder %v1498, %v1513
      %vm1611 = vcmp.eq.s32.totalorder %v1498, %v1517
      %vm1612 = vcmp.eq.s32.totalorder %v1498, %v1521
      %vm1613 = vcmp.eq.s32.totalorder %v1498, %v1525
      %vm1614 = vcmp.eq.s32.totalorder %v1499, %v1513
      %vm1615 = vcmp.eq.s32.totalorder %v1499, %v1517
      %vm1616 = vcmp.eq.s32.totalorder %v1499, %v1521
      %vm1617 = vcmp.eq.s32.totalorder %v1499, %v1525
      %vm1618 = vcmp.eq.s32.totalorder %v1500, %v1513
      %vm1619 = vcmp.eq.s32.totalorder %v1500, %v1517
      %vm1620 = vcmp.eq.s32.totalorder %v1500, %v1521
      %vm1621 = vcmp.eq.s32.totalorder %v1500, %v1525
      %vm1622 = vcmp.eq.s32.totalorder %v1501, %v1513
      %vm1623 = vcmp.eq.s32.totalorder %v1501, %v1517
      %vm1624 = vcmp.eq.s32.totalorder %v1501, %v1521
      %vm1625 = vcmp.eq.s32.totalorder %v1501, %v1525
      %vm1626 = vcmp.eq.s32.totalorder %v1502, %v1513
      %vm1627 = vcmp.eq.s32.totalorder %v1502, %v1517
      %vm1628 = vcmp.eq.s32.totalorder %v1502, %v1521
      %vm1629 = vcmp.eq.s32.totalorder %v1502, %v1525
      %vm1630 = vcmp.eq.s32.totalorder %v1503, %v1513
      %vm1631 = vcmp.eq.s32.totalorder %v1503, %v1517
      %vm1632 = vcmp.eq.s32.totalorder %v1503, %v1521
      %vm1633 = vcmp.eq.s32.totalorder %v1503, %v1525
      %vm1634 = vcmp.eq.s32.totalorder %v1504, %v1513
      %vm1635 = vcmp.eq.s32.totalorder %v1504, %v1517
      %vm1636 = vcmp.eq.s32.totalorder %v1504, %v1521
      %vm1637 = vcmp.eq.s32.totalorder %v1504, %v1525
      %vm1638 = vcmp.eq.s32.totalorder %v1505, %v1513
      %vm1639 = vcmp.eq.s32.totalorder %v1505, %v1517
      %vm1640 = vcmp.eq.s32.totalorder %v1505, %v1521
      %vm1641 = vcmp.eq.s32.totalorder %v1505, %v1525
      %vm1642 = vcmp.eq.s32.totalorder %v1506, %v1513
      %vm1643 = vcmp.eq.s32.totalorder %v1506, %v1517
      %vm1644 = vcmp.eq.s32.totalorder %v1506, %v1521
      %vm1645 = vcmp.eq.s32.totalorder %v1506, %v1525
      %vm1646 = vcmp.eq.s32.totalorder %v1507, %v1513
      %vm1647 = vcmp.eq.s32.totalorder %v1507, %v1517
      %vm1648 = vcmp.eq.s32.totalorder %v1507, %v1521
      %vm1649 = vcmp.eq.s32.totalorder %v1507, %v1525
      %vm1650 = vcmp.eq.s32.totalorder %v1508, %v1513
      %vm1651 = vcmp.eq.s32.totalorder %v1508, %v1517
      %vm1652 = vcmp.eq.s32.totalorder %v1508, %v1521
      %vm1653 = vcmp.eq.s32.totalorder %v1508, %v1525
      %v1654 = vsel %vm1526, 1, 0
      %v1655 = vsel %vm1527, 1, 0
      %v1656 = vsel %vm1528, 1, 0
      %v1657 = vsel %vm1529, 1, 0
      %v1658 = vsel %vm1530, 1, 0
      %v1659 = vsel %vm1531, 1, 0
      %v1660 = vsel %vm1532, 1, 0
      %v1661 = vsel %vm1533, 1, 0
      %v1662 = vsel %vm1534, 1, 0
      %v1663 = vsel %vm1535, 1, 0
      %v1664 = vsel %vm1536, 1, 0
      %v1665 = vsel %vm1537, 1, 0
      %v1666 = vsel %vm1538, 1, 0
      %v1667 = vsel %vm1539, 1, 0
      %v1668 = vsel %vm1540, 1, 0
      %v1669 = vsel %vm1541, 1, 0
      %v1670 = vsel %vm1542, 1, 0
      %v1671 = vsel %vm1543, 1, 0
      %v1672 = vsel %vm1544, 1, 0
      %v1673 = vsel %vm1545, 1, 0
      %v1674 = vsel %vm1546, 1, 0
      %v1675 = vsel %vm1547, 1, 0
      %v1676 = vsel %vm1548, 1, 0
      %v1677 = vsel %vm1549, 1, 0
      %v1678 = vsel %vm1550, 1, 0
      %v1679 = vsel %vm1551, 1, 0
      %v1680 = vsel %vm1552, 1, 0
      %v1681 = vsel %vm1553, 1, 0
      %v1682 = vsel %vm1554, 1, 0
      %v1683 = vsel %vm1555, 1, 0
      %v1684 = vsel %vm1556, 1, 0
      %v1685 = vsel %vm1557, 1, 0
      %v1686 = vsel %vm1558, 1, 0
      %v1687 = vsel %vm1559, 1, 0
      %v1688 = vsel %vm1560, 1, 0
      %v1689 = vsel %vm1561, 1, 0
      %v1690 = vsel %vm1562, 1, 0
      %v1691 = vsel %vm1563, 1, 0
      %v1692 = vsel %vm1564, 1, 0
      %v1693 = vsel %vm1565, 1, 0
      %v1694 = vsel %vm1566, 1, 0
      %v1695 = vsel %vm1567, 1, 0
      %v1696 = vsel %vm1568, 1, 0
      %v1697 = vsel %vm1569, 1, 0
      %v1698 = vsel %vm1570, 1, 0
      %v1699 = vsel %vm1571, 1, 0
      %v1700 = vsel %vm1572, 1, 0
      %v1701 = vsel %vm1573, 1, 0
      %v1702 = vsel %vm1574, 1, 0
      %v1703 = vsel %vm1575, 1, 0
      %v1704 = vsel %vm1576, 1, 0
      %v1705 = vsel %vm1577, 1, 0
      %v1706 = vsel %vm1578, 1, 0
      %v1707 = vsel %vm1579, 1, 0
      %v1708 = vsel %vm1580, 1, 0
      %v1709 = vsel %vm1581, 1, 0
      %v1710 = vsel %vm1582, 1, 0
      %v1711 = vsel %vm1583, 1, 0
      %v1712 = vsel %vm1584, 1, 0
      %v1713 = vsel %vm1585, 1, 0
      %v1714 = vsel %vm1586, 1, 0
      %v1715 = vsel %vm1587, 1, 0
      %v1716 = vsel %vm1588, 1, 0
      %v1717 = vsel %vm1589, 1, 0
      %v1718 = vsel %vm1590, 1, 0
      %v1719 = vsel %vm1591, 1, 0
      %v1720 = vsel %vm1592, 1, 0
      %v1721 = vsel %vm1593, 1, 0
      %v1722 = vsel %vm1594, 1, 0
      %v1723 = vsel %vm1595, 1, 0
      %v1724 = vsel %vm1596, 1, 0
      %v1725 = vsel %vm1597, 1, 0
      %v1726 = vsel %vm1598, 1, 0
      %v1727 = vsel %vm1599, 1, 0
      %v1728 = vsel %vm1600, 1, 0
      %v1729 = vsel %vm1601, 1, 0
      %v1730 = vsel %vm1602, 1, 0
      %v1731 = vsel %vm1603, 1, 0
      %v1732 = vsel %vm1604, 1, 0
      %v1733 = vsel %vm1605, 1, 0
      %v1734 = vsel %vm1606, 1, 0
      %v1735 = vsel %vm1607, 1, 0
      %v1736 = vsel %vm1608, 1, 0
      %v1737 = vsel %vm1609, 1, 0
      %v1738 = vsel %vm1610, 1, 0
      %v1739 = vsel %vm1611, 1, 0
      %v1740 = vsel %vm1612, 1, 0
      %v1741 = vsel %vm1613, 1, 0
      %v1742 = vsel %vm1614, 1, 0
      %v1743 = vsel %vm1615, 1, 0
      %v1744 = vsel %vm1616, 1, 0
      %v1745 = vsel %vm1617, 1, 0
      %v1746 = vsel %vm1618, 1, 0
      %v1747 = vsel %vm1619, 1, 0
      %v1748 = vsel %vm1620, 1, 0
      %v1749 = vsel %vm1621, 1, 0
      %v1750 = vsel %vm1622, 1, 0
      %v1751 = vsel %vm1623, 1, 0
      %v1752 = vsel %vm1624, 1, 0
      %v1753 = vsel %vm1625, 1, 0
      %v1754 = vsel %vm1626, 1, 0
      %v1755 = vsel %vm1627, 1, 0
      %v1756 = vsel %vm1628, 1, 0
      %v1757 = vsel %vm1629, 1, 0
      %v1758 = vsel %vm1630, 1, 0
      %v1759 = vsel %vm1631, 1, 0
      %v1760 = vsel %vm1632, 1, 0
      %v1761 = vsel %vm1633, 1, 0
      %v1762 = vsel %vm1634, 1, 0
      %v1763 = vsel %vm1635, 1, 0
      %v1764 = vsel %vm1636, 1, 0
      %v1765 = vsel %vm1637, 1, 0
      %v1766 = vsel %vm1638, 1, 0
      %v1767 = vsel %vm1639, 1, 0
      %v1768 = vsel %vm1640, 1, 0
      %v1769 = vsel %vm1641, 1, 0
      %v1770 = vsel %vm1642, 1, 0
      %v1771 = vsel %vm1643, 1, 0
      %v1772 = vsel %vm1644, 1, 0
      %v1773 = vsel %vm1645, 1, 0
      %v1774 = vsel %vm1646, 1, 0
      %v1775 = vsel %vm1647, 1, 0
      %v1776 = vsel %vm1648, 1, 0
      %v1777 = vsel %vm1649, 1, 0
      %v1778 = vsel %vm1650, 1, 0
      %v1779 = vsel %vm1651, 1, 0
      %v1780 = vsel %vm1652, 1, 0
      %v1781 = vsel %vm1653, 1, 0
      %v1782 = vcvt.s32.f32 %v1654
      %v1783 = vcvt.s32.f32 %v1655
      %v1784 = vcvt.s32.f32 %v1656
      %v1785 = vcvt.s32.f32 %v1657
      %v1786 = vcvt.s32.f32 %v1658
      %v1787 = vcvt.s32.f32 %v1659
      %v1788 = vcvt.s32.f32 %v1660
      %v1789 = vcvt.s32.f32 %v1661
      %v1790 = vcvt.s32.f32 %v1662
      %v1791 = vcvt.s32.f32 %v1663
      %v1792 = vcvt.s32.f32 %v1664
      %v1793 = vcvt.s32.f32 %v1665
      %v1794 = vcvt.s32.f32 %v1666
      %v1795 = vcvt.s32.f32 %v1667
      %v1796 = vcvt.s32.f32 %v1668
      %v1797 = vcvt.s32.f32 %v1669
      %v1798 = vcvt.s32.f32 %v1670
      %v1799 = vcvt.s32.f32 %v1671
      %v1800 = vcvt.s32.f32 %v1672
      %v1801 = vcvt.s32.f32 %v1673
      %v1802 = vcvt.s32.f32 %v1674
      %v1803 = vcvt.s32.f32 %v1675
      %v1804 = vcvt.s32.f32 %v1676
      %v1805 = vcvt.s32.f32 %v1677
      %v1806 = vcvt.s32.f32 %v1678
      %v1807 = vcvt.s32.f32 %v1679
      %v1808 = vcvt.s32.f32 %v1680
      %v1809 = vcvt.s32.f32 %v1681
      %v1810 = vcvt.s32.f32 %v1682
      %v1811 = vcvt.s32.f32 %v1683
      %v1812 = vcvt.s32.f32 %v1684
      %v1813 = vcvt.s32.f32 %v1685
      %v1814 = vcvt.s32.f32 %v1686
      %v1815 = vcvt.s32.f32 %v1687
      %v1816 = vcvt.s32.f32 %v1688
      %v1817 = vcvt.s32.f32 %v1689
      %v1818 = vcvt.s32.f32 %v1690
      %v1819 = vcvt.s32.f32 %v1691
      %v1820 = vcvt.s32.f32 %v1692
      %v1821 = vcvt.s32.f32 %v1693
      %v1822 = vcvt.s32.f32 %v1694
      %v1823 = vcvt.s32.f32 %v1695
      %v1824 = vcvt.s32.f32 %v1696
      %v1825 = vcvt.s32.f32 %v1697
      %v1826 = vcvt.s32.f32 %v1698
      %v1827 = vcvt.s32.f32 %v1699
      %v1828 = vcvt.s32.f32 %v1700
      %v1829 = vcvt.s32.f32 %v1701
      %v1830 = vcvt.s32.f32 %v1702
      %v1831 = vcvt.s32.f32 %v1703
      %v1832 = vcvt.s32.f32 %v1704
      %v1833 = vcvt.s32.f32 %v1705
      %v1834 = vcvt.s32.f32 %v1706
      %v1835 = vcvt.s32.f32 %v1707
      %v1836 = vcvt.s32.f32 %v1708
      %v1837 = vcvt.s32.f32 %v1709
      %v1838 = vcvt.s32.f32 %v1710
      %v1839 = vcvt.s32.f32 %v1711
      %v1840 = vcvt.s32.f32 %v1712
      %v1841 = vcvt.s32.f32 %v1713
      %v1842 = vcvt.s32.f32 %v1714
      %v1843 = vcvt.s32.f32 %v1715
      %v1844 = vcvt.s32.f32 %v1716
      %v1845 = vcvt.s32.f32 %v1717
      %v1846 = vcvt.s32.f32 %v1718
      %v1847 = vcvt.s32.f32 %v1719
      %v1848 = vcvt.s32.f32 %v1720
      %v1849 = vcvt.s32.f32 %v1721
      %v1850 = vcvt.s32.f32 %v1722
      %v1851 = vcvt.s32.f32 %v1723
      %v1852 = vcvt.s32.f32 %v1724
      %v1853 = vcvt.s32.f32 %v1725
      %v1854 = vcvt.s32.f32 %v1726
      %v1855 = vcvt.s32.f32 %v1727
      %v1856 = vcvt.s32.f32 %v1728
      %v1857 = vcvt.s32.f32 %v1729
      %v1858 = vcvt.s32.f32 %v1730
      %v1859 = vcvt.s32.f32 %v1731
      %v1860 = vcvt.s32.f32 %v1732
      %v1861 = vcvt.s32.f32 %v1733
      %v1862 = vcvt.s32.f32 %v1734
      %v1863 = vcvt.s32.f32 %v1735
      %v1864 = vcvt.s32.f32 %v1736
      %v1865 = vcvt.s32.f32 %v1737
      %v1866 = vcvt.s32.f32 %v1738
      %v1867 = vcvt.s32.f32 %v1739
      %v1868 = vcvt.s32.f32 %v1740
      %v1869 = vcvt.s32.f32 %v1741
      %v1870 = vcvt.s32.f32 %v1742
      %v1871 = vcvt.s32.f32 %v1743
      %v1872 = vcvt.s32.f32 %v1744
      %v1873 = vcvt.s32.f32 %v1745
      %v1874 = vcvt.s32.f32 %v1746
      %v1875 = vcvt.s32.f32 %v1747
      %v1876 = vcvt.s32.f32 %v1748
      %v1877 = vcvt.s32.f32 %v1749
      %v1878 = vcvt.s32.f32 %v1750
      %v1879 = vcvt.s32.f32 %v1751
      %v1880 = vcvt.s32.f32 %v1752
      %v1881 = vcvt.s32.f32 %v1753
      %v1882 = vcvt.s32.f32 %v1754
      %v1883 = vcvt.s32.f32 %v1755
      %v1884 = vcvt.s32.f32 %v1756
      %v1885 = vcvt.s32.f32 %v1757
      %v1886 = vcvt.s32.f32 %v1758
      %v1887 = vcvt.s32.f32 %v1759
      %v1888 = vcvt.s32.f32 %v1760
      %v1889 = vcvt.s32.f32 %v1761
      %v1890 = vcvt.s32.f32 %v1762
      %v1891 = vcvt.s32.f32 %v1763
      %v1892 = vcvt.s32.f32 %v1764
      %v1893 = vcvt.s32.f32 %v1765
      %v1894 = vcvt.s32.f32 %v1766
      %v1895 = vcvt.s32.f32 %v1767
      %v1896 = vcvt.s32.f32 %v1768
      %v1897 = vcvt.s32.f32 %v1769
      %v1898 = vcvt.s32.f32 %v1770
      %v1899 = vcvt.s32.f32 %v1771
      %v1900 = vcvt.s32.f32 %v1772
      %v1901 = vcvt.s32.f32 %v1773
      %v1902 = vcvt.s32.f32 %v1774
      %v1903 = vcvt.s32.f32 %v1775
      %v1904 = vcvt.s32.f32 %v1776
      %v1905 = vcvt.s32.f32 %v1777
      %v1906 = vcvt.s32.f32 %v1778
      %v1907 = vcvt.s32.f32 %v1779
      %v1908 = vcvt.s32.f32 %v1780
      %v1909 = vcvt.s32.f32 %v1781
      %v1910 = vpack.c.bf16 %v1786, %v1782
      %v1911 = vpack.c.bf16 %v1787, %v1783
      %v1912 = vpack.c.bf16 %v1788, %v1784
      %v1913 = vpack.c.bf16 %v1789, %v1785
      %v1914 = vpack.c.bf16 %v1794, %v1790
      %v1915 = vpack.c.bf16 %v1795, %v1791
      %v1916 = vpack.c.bf16 %v1796, %v1792
      %v1917 = vpack.c.bf16 %v1797, %v1793
      %v1918 = vpack.c.bf16 %v1802, %v1798
      %v1919 = vpack.c.bf16 %v1803, %v1799
      %v1920 = vpack.c.bf16 %v1804, %v1800
      %v1921 = vpack.c.bf16 %v1805, %v1801
      %v1922 = vpack.c.bf16 %v1810, %v1806
      %v1923 = vpack.c.bf16 %v1811, %v1807
      %v1924 = vpack.c.bf16 %v1812, %v1808
      %v1925 = vpack.c.bf16 %v1813, %v1809
      %v1926 = vpack.c.bf16 %v1818, %v1814
      %v1927 = vpack.c.bf16 %v1819, %v1815
      %v1928 = vpack.c.bf16 %v1820, %v1816
      %v1929 = vpack.c.bf16 %v1821, %v1817
      %v1930 = vpack.c.bf16 %v1826, %v1822
      %v1931 = vpack.c.bf16 %v1827, %v1823
      %v1932 = vpack.c.bf16 %v1828, %v1824
      %v1933 = vpack.c.bf16 %v1829, %v1825
      %v1934 = vpack.c.bf16 %v1834, %v1830
      %v1935 = vpack.c.bf16 %v1835, %v1831
      %v1936 = vpack.c.bf16 %v1836, %v1832
      %v1937 = vpack.c.bf16 %v1837, %v1833
      %v1938 = vpack.c.bf16 %v1842, %v1838
      %v1939 = vpack.c.bf16 %v1843, %v1839
      %v1940 = vpack.c.bf16 %v1844, %v1840
      %v1941 = vpack.c.bf16 %v1845, %v1841
      %v1942 = vpack.c.bf16 %v1850, %v1846
      %v1943 = vpack.c.bf16 %v1851, %v1847
      %v1944 = vpack.c.bf16 %v1852, %v1848
      %v1945 = vpack.c.bf16 %v1853, %v1849
      %v1946 = vpack.c.bf16 %v1858, %v1854
      %v1947 = vpack.c.bf16 %v1859, %v1855
      %v1948 = vpack.c.bf16 %v1860, %v1856
      %v1949 = vpack.c.bf16 %v1861, %v1857
      %v1950 = vpack.c.bf16 %v1866, %v1862
      %v1951 = vpack.c.bf16 %v1867, %v1863
      %v1952 = vpack.c.bf16 %v1868, %v1864
      %v1953 = vpack.c.bf16 %v1869, %v1865
      %v1954 = vpack.c.bf16 %v1874, %v1870
      %v1955 = vpack.c.bf16 %v1875, %v1871
      %v1956 = vpack.c.bf16 %v1876, %v1872
      %v1957 = vpack.c.bf16 %v1877, %v1873
      %v1958 = vpack.c.bf16 %v1882, %v1878
      %v1959 = vpack.c.bf16 %v1883, %v1879
      %v1960 = vpack.c.bf16 %v1884, %v1880
      %v1961 = vpack.c.bf16 %v1885, %v1881
      %v1962 = vpack.c.bf16 %v1890, %v1886
      %v1963 = vpack.c.bf16 %v1891, %v1887
      %v1964 = vpack.c.bf16 %v1892, %v1888
      %v1965 = vpack.c.bf16 %v1893, %v1889
      %v1966 = vpack.c.bf16 %v1898, %v1894
      %v1967 = vpack.c.bf16 %v1899, %v1895
      %v1968 = vpack.c.bf16 %v1900, %v1896
      %v1969 = vpack.c.bf16 %v1901, %v1897
      %v1970 = vpack.c.bf16 %v1906, %v1902
      %v1971 = vpack.c.bf16 %v1907, %v1903
      %v1972 = vpack.c.bf16 %v1908, %v1904
      %v1973 = vpack.c.bf16 %v1909, %v1905
      %vm1974 = vcmp.eq.s32.totalorder %v1477, %v400
      %vm1975 = vcmp.eq.s32.totalorder %v1477, %v771
      %vm1976 = vcmp.eq.s32.totalorder %v1478, %v400
      %vm1977 = vcmp.eq.s32.totalorder %v1478, %v771
      %vm1978 = vcmp.eq.s32.totalorder %v1479, %v400
      %vm1979 = vcmp.eq.s32.totalorder %v1479, %v771
      %vm1980 = vcmp.eq.s32.totalorder %v1480, %v400
      %vm1981 = vcmp.eq.s32.totalorder %v1480, %v771
      %vm1982 = vcmp.eq.s32.totalorder %v1481, %v400
      %vm1983 = vcmp.eq.s32.totalorder %v1481, %v771
      %vm1984 = vcmp.eq.s32.totalorder %v1482, %v400
      %vm1985 = vcmp.eq.s32.totalorder %v1482, %v771
      %vm1986 = vcmp.eq.s32.totalorder %v1483, %v400
      %vm1987 = vcmp.eq.s32.totalorder %v1483, %v771
      %vm1988 = vcmp.eq.s32.totalorder %v1484, %v400
      %vm1989 = vcmp.eq.s32.totalorder %v1484, %v771
      %vm1990 = vcmp.eq.s32.totalorder %v1485, %v400
      %vm1991 = vcmp.eq.s32.totalorder %v1485, %v771
      %vm1992 = vcmp.eq.s32.totalorder %v1486, %v400
      %vm1993 = vcmp.eq.s32.totalorder %v1486, %v771
      %vm1994 = vcmp.eq.s32.totalorder %v1487, %v400
      %vm1995 = vcmp.eq.s32.totalorder %v1487, %v771
      %vm1996 = vcmp.eq.s32.totalorder %v1488, %v400
      %vm1997 = vcmp.eq.s32.totalorder %v1488, %v771
      %vm1998 = vcmp.eq.s32.totalorder %v1489, %v400
      %vm1999 = vcmp.eq.s32.totalorder %v1489, %v771
      %vm2000 = vcmp.eq.s32.totalorder %v1490, %v400
      %vm2001 = vcmp.eq.s32.totalorder %v1490, %v771
      %vm2002 = vcmp.eq.s32.totalorder %v1491, %v400
      %vm2003 = vcmp.eq.s32.totalorder %v1491, %v771
      %vm2004 = vcmp.eq.s32.totalorder %v1492, %v400
      %vm2005 = vcmp.eq.s32.totalorder %v1492, %v771
      %vm2006 = vcmp.eq.s32.totalorder %v1493, %v400
      %vm2007 = vcmp.eq.s32.totalorder %v1493, %v771
      %vm2008 = vcmp.eq.s32.totalorder %v1494, %v400
      %vm2009 = vcmp.eq.s32.totalorder %v1494, %v771
      %vm2010 = vcmp.eq.s32.totalorder %v1495, %v400
      %vm2011 = vcmp.eq.s32.totalorder %v1495, %v771
      %vm2012 = vcmp.eq.s32.totalorder %v1496, %v400
      %vm2013 = vcmp.eq.s32.totalorder %v1496, %v771
      %vm2014 = vcmp.eq.s32.totalorder %v1497, %v400
      %vm2015 = vcmp.eq.s32.totalorder %v1497, %v771
      %vm2016 = vcmp.eq.s32.totalorder %v1498, %v400
      %vm2017 = vcmp.eq.s32.totalorder %v1498, %v771
      %vm2018 = vcmp.eq.s32.totalorder %v1499, %v400
      %vm2019 = vcmp.eq.s32.totalorder %v1499, %v771
      %vm2020 = vcmp.eq.s32.totalorder %v1500, %v400
      %vm2021 = vcmp.eq.s32.totalorder %v1500, %v771
      %vm2022 = vcmp.eq.s32.totalorder %v1501, %v400
      %vm2023 = vcmp.eq.s32.totalorder %v1501, %v771
      %vm2024 = vcmp.eq.s32.totalorder %v1502, %v400
      %vm2025 = vcmp.eq.s32.totalorder %v1502, %v771
      %vm2026 = vcmp.eq.s32.totalorder %v1503, %v400
      %vm2027 = vcmp.eq.s32.totalorder %v1503, %v771
      %vm2028 = vcmp.eq.s32.totalorder %v1504, %v400
      %vm2029 = vcmp.eq.s32.totalorder %v1504, %v771
      %vm2030 = vcmp.eq.s32.totalorder %v1505, %v400
      %vm2031 = vcmp.eq.s32.totalorder %v1505, %v771
      %vm2032 = vcmp.eq.s32.totalorder %v1506, %v400
      %vm2033 = vcmp.eq.s32.totalorder %v1506, %v771
      %vm2034 = vcmp.eq.s32.totalorder %v1507, %v400
      %vm2035 = vcmp.eq.s32.totalorder %v1507, %v771
      %vm2036 = vcmp.eq.s32.totalorder %v1508, %v400
      %vm2037 = vcmp.eq.s32.totalorder %v1508, %v771
      %v2038 = vsel %vm1974, 1, 0
      %v2039 = vsel %vm1975, 1, 0
      %v2040 = vsel %vm1976, 1, 0
      %v2041 = vsel %vm1977, 1, 0
      %v2042 = vsel %vm1978, 1, 0
      %v2043 = vsel %vm1979, 1, 0
      %v2044 = vsel %vm1980, 1, 0
      %v2045 = vsel %vm1981, 1, 0
      %v2046 = vsel %vm1982, 1, 0
      %v2047 = vsel %vm1983, 1, 0
      %v2048 = vsel %vm1984, 1, 0
      %v2049 = vsel %vm1985, 1, 0
      %v2050 = vsel %vm1986, 1, 0
      %v2051 = vsel %vm1987, 1, 0
      %v2052 = vsel %vm1988, 1, 0
      %v2053 = vsel %vm1989, 1, 0
      %v2054 = vsel %vm1990, 1, 0
      %v2055 = vsel %vm1991, 1, 0
      %v2056 = vsel %vm1992, 1, 0
      %v2057 = vsel %vm1993, 1, 0
      %v2058 = vsel %vm1994, 1, 0
      %v2059 = vsel %vm1995, 1, 0
      %v2060 = vsel %vm1996, 1, 0
      %v2061 = vsel %vm1997, 1, 0
      %v2062 = vsel %vm1998, 1, 0
      %v2063 = vsel %vm1999, 1, 0
      %v2064 = vsel %vm2000, 1, 0
      %v2065 = vsel %vm2001, 1, 0
      %v2066 = vsel %vm2002, 1, 0
      %v2067 = vsel %vm2003, 1, 0
      %v2068 = vsel %vm2004, 1, 0
      %v2069 = vsel %vm2005, 1, 0
      %v2070 = vsel %vm2006, 1, 0
      %v2071 = vsel %vm2007, 1, 0
      %v2072 = vsel %vm2008, 1, 0
      %v2073 = vsel %vm2009, 1, 0
      %v2074 = vsel %vm2010, 1, 0
      %v2075 = vsel %vm2011, 1, 0
      %v2076 = vsel %vm2012, 1, 0
      %v2077 = vsel %vm2013, 1, 0
      %v2078 = vsel %vm2014, 1, 0
      %v2079 = vsel %vm2015, 1, 0
      %v2080 = vsel %vm2016, 1, 0
      %v2081 = vsel %vm2017, 1, 0
      %v2082 = vsel %vm2018, 1, 0
      %v2083 = vsel %vm2019, 1, 0
      %v2084 = vsel %vm2020, 1, 0
      %v2085 = vsel %vm2021, 1, 0
      %v2086 = vsel %vm2022, 1, 0
      %v2087 = vsel %vm2023, 1, 0
      %v2088 = vsel %vm2024, 1, 0
      %v2089 = vsel %vm2025, 1, 0
      %v2090 = vsel %vm2026, 1, 0
      %v2091 = vsel %vm2027, 1, 0
      %v2092 = vsel %vm2028, 1, 0
      %v2093 = vsel %vm2029, 1, 0
      %v2094 = vsel %vm2030, 1, 0
      %v2095 = vsel %vm2031, 1, 0
      %v2096 = vsel %vm2032, 1, 0
      %v2097 = vsel %vm2033, 1, 0
      %v2098 = vsel %vm2034, 1, 0
      %v2099 = vsel %vm2035, 1, 0
      %v2100 = vsel %vm2036, 1, 0
      %v2101 = vsel %vm2037, 1, 0
      %v2102 = vcvt.s32.f32 %v2038
      %v2103 = vcvt.s32.f32 %v2039
      %v2104 = vcvt.s32.f32 %v2040
      %v2105 = vcvt.s32.f32 %v2041
      %v2106 = vcvt.s32.f32 %v2042
      %v2107 = vcvt.s32.f32 %v2043
      %v2108 = vcvt.s32.f32 %v2044
      %v2109 = vcvt.s32.f32 %v2045
      %v2110 = vcvt.s32.f32 %v2046
      %v2111 = vcvt.s32.f32 %v2047
      %v2112 = vcvt.s32.f32 %v2048
      %v2113 = vcvt.s32.f32 %v2049
      %v2114 = vcvt.s32.f32 %v2050
      %v2115 = vcvt.s32.f32 %v2051
      %v2116 = vcvt.s32.f32 %v2052
      %v2117 = vcvt.s32.f32 %v2053
      %v2118 = vcvt.s32.f32 %v2054
      %v2119 = vcvt.s32.f32 %v2055
      %v2120 = vcvt.s32.f32 %v2056
      %v2121 = vcvt.s32.f32 %v2057
      %v2122 = vcvt.s32.f32 %v2058
      %v2123 = vcvt.s32.f32 %v2059
      %v2124 = vcvt.s32.f32 %v2060
      %v2125 = vcvt.s32.f32 %v2061
      %v2126 = vcvt.s32.f32 %v2062
      %v2127 = vcvt.s32.f32 %v2063
      %v2128 = vcvt.s32.f32 %v2064
      %v2129 = vcvt.s32.f32 %v2065
      %v2130 = vcvt.s32.f32 %v2066
      %v2131 = vcvt.s32.f32 %v2067
      %v2132 = vcvt.s32.f32 %v2068
      %v2133 = vcvt.s32.f32 %v2069
      %v2134 = vcvt.s32.f32 %v2070
      %v2135 = vcvt.s32.f32 %v2071
      %v2136 = vcvt.s32.f32 %v2072
      %v2137 = vcvt.s32.f32 %v2073
      %v2138 = vcvt.s32.f32 %v2074
      %v2139 = vcvt.s32.f32 %v2075
      %v2140 = vcvt.s32.f32 %v2076
      %v2141 = vcvt.s32.f32 %v2077
      %v2142 = vcvt.s32.f32 %v2078
      %v2143 = vcvt.s32.f32 %v2079
      %v2144 = vcvt.s32.f32 %v2080
      %v2145 = vcvt.s32.f32 %v2081
      %v2146 = vcvt.s32.f32 %v2082
      %v2147 = vcvt.s32.f32 %v2083
      %v2148 = vcvt.s32.f32 %v2084
      %v2149 = vcvt.s32.f32 %v2085
      %v2150 = vcvt.s32.f32 %v2086
      %v2151 = vcvt.s32.f32 %v2087
      %v2152 = vcvt.s32.f32 %v2088
      %v2153 = vcvt.s32.f32 %v2089
      %v2154 = vcvt.s32.f32 %v2090
      %v2155 = vcvt.s32.f32 %v2091
      %v2156 = vcvt.s32.f32 %v2092
      %v2157 = vcvt.s32.f32 %v2093
      %v2158 = vcvt.s32.f32 %v2094
      %v2159 = vcvt.s32.f32 %v2095
      %v2160 = vcvt.s32.f32 %v2096
      %v2161 = vcvt.s32.f32 %v2097
      %v2162 = vcvt.s32.f32 %v2098
      %v2163 = vcvt.s32.f32 %v2099
      %v2164 = vcvt.s32.f32 %v2100
      %v2165 = vcvt.s32.f32 %v2101
      %2166 = vmatprep.subr.bf16.mxu0 %v1427
      %2167 = vmatpush1.bf16.msra.mxu0 %v1426
      %2168 = vmatprep.subr.bf16.mxu0 %v1425
      %2169 = vmatpush1.bf16.msra.mxu0 %v1424
      %2170 = vmatprep.subr.bf16.mxu0 %v1423
      %2171 = vmatpush1.bf16.msra.mxu0 %v1422
      %2172 = vmatprep.subr.bf16.mxu0 %v1421
      %2173 = vmatpush1.bf16.msra.mxu0 %v1420
      %2174 = vmatprep.subr.bf16.mxu0 %v1419
      %2175 = vmatpush1.bf16.msra.mxu0 %v1418
      %2176 = vmatprep.subr.bf16.mxu0 %v1417
      %2177 = vmatpush1.bf16.msra.mxu0 %v1416
      %2178 = vmatprep.subr.bf16.mxu0 %v1415
      %2179 = vmatpush1.bf16.msra.mxu0 %v1414
      %2180 = vmatprep.subr.bf16.mxu0 %v1413
      %2181 = vmatpush1.bf16.msra.mxu0 %v1412
      %2182 = vmatprep.subr.bf16.mxu0 %v1443
      %2183 = vmatpush2.bf16.msra.mxu0 %v1442
      %2184 = vmatprep.subr.bf16.mxu0 %v1441
      %2185 = vmatpush2.bf16.msra.mxu0 %v1440
      %2186 = vmatprep.subr.bf16.mxu0 %v1439
      %2187 = vmatpush2.bf16.msra.mxu0 %v1438
      %2188 = vmatprep.subr.bf16.mxu0 %v1437
      %2189 = vmatpush2.bf16.msra.mxu0 %v1436
      %2190 = vmatprep.subr.bf16.mxu0 %v1435
      %2191 = vmatpush2.bf16.msra.mxu0 %v1434
      %2192 = vmatprep.subr.bf16.mxu0 %v1433
      %2193 = vmatpush2.bf16.msra.mxu0 %v1432
      %2194 = vmatprep.subr.bf16.mxu0 %v1431
      %2195 = vmatpush2.bf16.msra.mxu0 %v1430
      %2196 = vmatprep.subr.bf16.mxu0 %v1429
      %2197 = vmatpush2.bf16.msra.mxu0 %v1428
      %2198 = vmatprep.mubr.bf16.mxu0 %v1911
      %2199 = vmatmul.mubr.bf16.gmra.mxu0 %v1910
      %v2200 = vpop.f32.mrf.mxu0
      %v2201 = vadd.f32 %v2102, %v2200
      %v2202 = vpop.f32.mrf.mxu0
      %v2203 = vadd.f32 %v2103, %v2202
      %v2204 = vpop.f32.mrf.mxu0
      %v2205 = vadd.f32 %v2104, %v2204
      %v2206 = vpop.f32.mrf.mxu0
      %v2207 = vadd.f32 %v2105, %v2206
      %2208 = vmatprep.mubr.bf16.mxu0 %v1915
      %2209 = vmatmul.mubr.bf16.gmra.mxu0 %v1914
      %v2210 = vpop.f32.mrf.mxu0
      %v2211 = vadd.f32 %v2106, %v2210
      %v2212 = vpop.f32.mrf.mxu0
      %v2213 = vadd.f32 %v2107, %v2212
      %v2214 = vpop.f32.mrf.mxu0
      %v2215 = vadd.f32 %v2108, %v2214
      %v2216 = vpop.f32.mrf.mxu0
      %v2217 = vadd.f32 %v2109, %v2216
      %2218 = vmatprep.mubr.bf16.mxu0 %v1919
      %2219 = vmatmul.mubr.bf16.gmra.mxu0 %v1918
      %v2220 = vpop.f32.mrf.mxu0
      %v2221 = vadd.f32 %v2110, %v2220
      %v2222 = vpop.f32.mrf.mxu0
      %v2223 = vadd.f32 %v2111, %v2222
      %v2224 = vpop.f32.mrf.mxu0
      %v2225 = vadd.f32 %v2112, %v2224
      %v2226 = vpop.f32.mrf.mxu0
      %v2227 = vadd.f32 %v2113, %v2226
      %2228 = vmatprep.mubr.bf16.mxu0 %v1923
      %2229 = vmatmul.mubr.bf16.gmra.mxu0 %v1922
      %v2230 = vpop.f32.mrf.mxu0
      %v2231 = vadd.f32 %v2114, %v2230
      %v2232 = vpop.f32.mrf.mxu0
      %v2233 = vadd.f32 %v2115, %v2232
      %v2234 = vpop.f32.mrf.mxu0
      %v2235 = vadd.f32 %v2116, %v2234
      %v2236 = vpop.f32.mrf.mxu0
      %v2237 = vadd.f32 %v2117, %v2236
      %2238 = vmatprep.mubr.bf16.mxu0 %v1927
      %2239 = vmatmul.mubr.bf16.gmra.mxu0 %v1926
      %v2240 = vpop.f32.mrf.mxu0
      %v2241 = vadd.f32 %v2118, %v2240
      %v2242 = vpop.f32.mrf.mxu0
      %v2243 = vadd.f32 %v2119, %v2242
      %v2244 = vpop.f32.mrf.mxu0
      %v2245 = vadd.f32 %v2120, %v2244
      %v2246 = vpop.f32.mrf.mxu0
      %v2247 = vadd.f32 %v2121, %v2246
      %2248 = vmatprep.mubr.bf16.mxu0 %v1931
      %2249 = vmatmul.mubr.bf16.gmra.mxu0 %v1930
      %v2250 = vpop.f32.mrf.mxu0
      %v2251 = vadd.f32 %v2122, %v2250
      %v2252 = vpop.f32.mrf.mxu0
      %v2253 = vadd.f32 %v2123, %v2252
      %v2254 = vpop.f32.mrf.mxu0
      %v2255 = vadd.f32 %v2124, %v2254
      %v2256 = vpop.f32.mrf.mxu0
      %v2257 = vadd.f32 %v2125, %v2256
      %2258 = vmatprep.mubr.bf16.mxu0 %v1935
      %2259 = vmatmul.mubr.bf16.gmra.mxu0 %v1934
      %v2260 = vpop.f32.mrf.mxu0
      %v2261 = vadd.f32 %v2126, %v2260
      %v2262 = vpop.f32.mrf.mxu0
      %v2263 = vadd.f32 %v2127, %v2262
      %v2264 = vpop.f32.mrf.mxu0
      %v2265 = vadd.f32 %v2128, %v2264
      %v2266 = vpop.f32.mrf.mxu0
      %v2267 = vadd.f32 %v2129, %v2266
      %2268 = vmatprep.mubr.bf16.mxu0 %v1939
      %2269 = vmatmul.mubr.bf16.gmra.mxu0 %v1938
      %v2270 = vpop.f32.mrf.mxu0
      %v2271 = vadd.f32 %v2130, %v2270
      %v2272 = vpop.f32.mrf.mxu0
      %v2273 = vadd.f32 %v2131, %v2272
      %v2274 = vpop.f32.mrf.mxu0
      %v2275 = vadd.f32 %v2132, %v2274
      %v2276 = vpop.f32.mrf.mxu0
      %v2277 = vadd.f32 %v2133, %v2276
      %2278 = vmatprep.mubr.bf16.mxu0 %v1943
      %2279 = vmatmul.mubr.bf16.gmra.mxu0 %v1942
      %v2280 = vpop.f32.mrf.mxu0
      %v2281 = vadd.f32 %v2134, %v2280
      %v2282 = vpop.f32.mrf.mxu0
      %v2283 = vadd.f32 %v2135, %v2282
      %v2284 = vpop.f32.mrf.mxu0
      %v2285 = vadd.f32 %v2136, %v2284
      %v2286 = vpop.f32.mrf.mxu0
      %v2287 = vadd.f32 %v2137, %v2286
      %2288 = vmatprep.mubr.bf16.mxu0 %v1947
      %2289 = vmatmul.mubr.bf16.gmra.mxu0 %v1946
      %v2290 = vpop.f32.mrf.mxu0
      %v2291 = vadd.f32 %v2138, %v2290
      %v2292 = vpop.f32.mrf.mxu0
      %v2293 = vadd.f32 %v2139, %v2292
      %v2294 = vpop.f32.mrf.mxu0
      %v2295 = vadd.f32 %v2140, %v2294
      %v2296 = vpop.f32.mrf.mxu0
      %v2297 = vadd.f32 %v2141, %v2296
      %2298 = vmatprep.mubr.bf16.mxu0 %v1951
      %2299 = vmatmul.mubr.bf16.gmra.mxu0 %v1950
      %v2300 = vpop.f32.mrf.mxu0
      %v2301 = vadd.f32 %v2142, %v2300
      %v2302 = vpop.f32.mrf.mxu0
      %v2303 = vadd.f32 %v2143, %v2302
      %v2304 = vpop.f32.mrf.mxu0
      %v2305 = vadd.f32 %v2144, %v2304
      %v2306 = vpop.f32.mrf.mxu0
      %v2307 = vadd.f32 %v2145, %v2306
      %2308 = vmatprep.mubr.bf16.mxu0 %v1955
      %2309 = vmatmul.mubr.bf16.gmra.mxu0 %v1954
      %v2310 = vpop.f32.mrf.mxu0
      %v2311 = vadd.f32 %v2146, %v2310
      %v2312 = vpop.f32.mrf.mxu0
      %v2313 = vadd.f32 %v2147, %v2312
      %v2314 = vpop.f32.mrf.mxu0
      %v2315 = vadd.f32 %v2148, %v2314
      %v2316 = vpop.f32.mrf.mxu0
      %v2317 = vadd.f32 %v2149, %v2316
      %2318 = vmatprep.mubr.bf16.mxu0 %v1959
      %2319 = vmatmul.mubr.bf16.gmra.mxu0 %v1958
      %v2320 = vpop.f32.mrf.mxu0
      %v2321 = vadd.f32 %v2150, %v2320
      %v2322 = vpop.f32.mrf.mxu0
      %v2323 = vadd.f32 %v2151, %v2322
      %v2324 = vpop.f32.mrf.mxu0
      %v2325 = vadd.f32 %v2152, %v2324
      %v2326 = vpop.f32.mrf.mxu0
      %v2327 = vadd.f32 %v2153, %v2326
      %2328 = vmatprep.mubr.bf16.mxu0 %v1963
      %2329 = vmatmul.mubr.bf16.gmra.mxu0 %v1962
      %v2330 = vpop.f32.mrf.mxu0
      %v2331 = vadd.f32 %v2154, %v2330
      %v2332 = vpop.f32.mrf.mxu0
      %v2333 = vadd.f32 %v2155, %v2332
      %v2334 = vpop.f32.mrf.mxu0
      %v2335 = vadd.f32 %v2156, %v2334
      %v2336 = vpop.f32.mrf.mxu0
      %v2337 = vadd.f32 %v2157, %v2336
      %2338 = vmatprep.mubr.bf16.mxu0 %v1967
      %2339 = vmatmul.mubr.bf16.gmra.mxu0 %v1966
      %v2340 = vpop.f32.mrf.mxu0
      %v2341 = vadd.f32 %v2158, %v2340
      %v2342 = vpop.f32.mrf.mxu0
      %v2343 = vadd.f32 %v2159, %v2342
      %v2344 = vpop.f32.mrf.mxu0
      %v2345 = vadd.f32 %v2160, %v2344
      %v2346 = vpop.f32.mrf.mxu0
      %v2347 = vadd.f32 %v2161, %v2346
      %2348 = vmatprep.mubr.bf16.mxu0 %v1971
      %2349 = vmatmul.mubr.bf16.gmra.mxu0 %v1970
      %v2350 = vpop.f32.mrf.mxu0
      %v2351 = vadd.f32 %v2162, %v2350
      %v2352 = vpop.f32.mrf.mxu0
      %v2353 = vadd.f32 %v2163, %v2352
      %v2354 = vpop.f32.mrf.mxu0
      %v2355 = vadd.f32 %v2164, %v2354
      %v2356 = vpop.f32.mrf.mxu0
      %v2357 = vadd.f32 %v2165, %v2356
      %2358 = vdwg.mxu0
      %2359 = vmatprep.subr.bf16.mxu0 %v1459
      %2360 = vmatpush1.bf16.msra.mxu0 %v1458
      %2361 = vmatprep.subr.bf16.mxu0 %v1457
      %2362 = vmatpush1.bf16.msra.mxu0 %v1456
      %2363 = vmatprep.subr.bf16.mxu0 %v1455
      %2364 = vmatpush1.bf16.msra.mxu0 %v1454
      %2365 = vmatprep.subr.bf16.mxu0 %v1453
      %2366 = vmatpush1.bf16.msra.mxu0 %v1452
      %2367 = vmatprep.subr.bf16.mxu0 %v1451
      %2368 = vmatpush1.bf16.msra.mxu0 %v1450
      %2369 = vmatprep.subr.bf16.mxu0 %v1449
      %2370 = vmatpush1.bf16.msra.mxu0 %v1448
      %2371 = vmatprep.subr.bf16.mxu0 %v1447
      %2372 = vmatpush1.bf16.msra.mxu0 %v1446
      %2373 = vmatprep.subr.bf16.mxu0 %v1445
      %2374 = vmatpush1.bf16.msra.mxu0 %v1444
      %2375 = vmatprep.subr.bf16.mxu0 %v1475
      %2376 = vmatpush2.bf16.msra.mxu0 %v1474
      %2377 = vmatprep.subr.bf16.mxu0 %v1473
      %2378 = vmatpush2.bf16.msra.mxu0 %v1472
      %2379 = vmatprep.subr.bf16.mxu0 %v1471
      %2380 = vmatpush2.bf16.msra.mxu0 %v1470
      %2381 = vmatprep.subr.bf16.mxu0 %v1469
      %2382 = vmatpush2.bf16.msra.mxu0 %v1468
      %2383 = vmatprep.subr.bf16.mxu0 %v1467
      %2384 = vmatpush2.bf16.msra.mxu0 %v1466
      %2385 = vmatprep.subr.bf16.mxu0 %v1465
      %2386 = vmatpush2.bf16.msra.mxu0 %v1464
      %2387 = vmatprep.subr.bf16.mxu0 %v1463
      %2388 = vmatpush2.bf16.msra.mxu0 %v1462
      %2389 = vmatprep.subr.bf16.mxu0 %v1461
      %2390 = vmatpush2.bf16.msra.mxu0 %v1460
      %2391 = vmatprep.mubr.bf16.mxu0 %v1913
      %2392 = vmatmul.mubr.bf16.gmra.mxu0 %v1912
      %v2393 = vpop.f32.mrf.mxu0
      %v2394 = vadd.f32 %v2201, %v2393
      %v2395 = vpop.f32.mrf.mxu0
      %v2396 = vadd.f32 %v2203, %v2395
      %v2397 = vpop.f32.mrf.mxu0
      %v2398 = vadd.f32 %v2205, %v2397
      %v2399 = vpop.f32.mrf.mxu0
      %v2400 = vadd.f32 %v2207, %v2399
      %2401 = vmatprep.mubr.bf16.mxu0 %v1917
      %2402 = vmatmul.mubr.bf16.gmra.mxu0 %v1916
      %v2403 = vpop.f32.mrf.mxu0
      %v2404 = vadd.f32 %v2211, %v2403
      %v2405 = vpop.f32.mrf.mxu0
      %v2406 = vadd.f32 %v2213, %v2405
      %v2407 = vpop.f32.mrf.mxu0
      %v2408 = vadd.f32 %v2215, %v2407
      %v2409 = vpop.f32.mrf.mxu0
      %v2410 = vadd.f32 %v2217, %v2409
      %2411 = vmatprep.mubr.bf16.mxu0 %v1921
      %2412 = vmatmul.mubr.bf16.gmra.mxu0 %v1920
      %v2413 = vpop.f32.mrf.mxu0
      %v2414 = vadd.f32 %v2221, %v2413
      %v2415 = vpop.f32.mrf.mxu0
      %v2416 = vadd.f32 %v2223, %v2415
      %v2417 = vpop.f32.mrf.mxu0
      %v2418 = vadd.f32 %v2225, %v2417
      %v2419 = vpop.f32.mrf.mxu0
      %v2420 = vadd.f32 %v2227, %v2419
      %2421 = vmatprep.mubr.bf16.mxu0 %v1925
      %2422 = vmatmul.mubr.bf16.gmra.mxu0 %v1924
      %v2423 = vpop.f32.mrf.mxu0
      %v2424 = vadd.f32 %v2231, %v2423
      %v2425 = vpop.f32.mrf.mxu0
      %v2426 = vadd.f32 %v2233, %v2425
      %v2427 = vpop.f32.mrf.mxu0
      %v2428 = vadd.f32 %v2235, %v2427
      %v2429 = vpop.f32.mrf.mxu0
      %v2430 = vadd.f32 %v2237, %v2429
      %2431 = vmatprep.mubr.bf16.mxu0 %v1929
      %2432 = vmatmul.mubr.bf16.gmra.mxu0 %v1928
      %v2433 = vpop.f32.mrf.mxu0
      %v2434 = vadd.f32 %v2241, %v2433
      %v2435 = vpop.f32.mrf.mxu0
      %v2436 = vadd.f32 %v2243, %v2435
      %v2437 = vpop.f32.mrf.mxu0
      %v2438 = vadd.f32 %v2245, %v2437
      %v2439 = vpop.f32.mrf.mxu0
      %v2440 = vadd.f32 %v2247, %v2439
      %2441 = vmatprep.mubr.bf16.mxu0 %v1933
      %2442 = vmatmul.mubr.bf16.gmra.mxu0 %v1932
      %v2443 = vpop.f32.mrf.mxu0
      %v2444 = vadd.f32 %v2251, %v2443
      %v2445 = vpop.f32.mrf.mxu0
      %v2446 = vadd.f32 %v2253, %v2445
      %v2447 = vpop.f32.mrf.mxu0
      %v2448 = vadd.f32 %v2255, %v2447
      %v2449 = vpop.f32.mrf.mxu0
      %v2450 = vadd.f32 %v2257, %v2449
      %2451 = vmatprep.mubr.bf16.mxu0 %v1937
      %2452 = vmatmul.mubr.bf16.gmra.mxu0 %v1936
      %v2453 = vpop.f32.mrf.mxu0
      %v2454 = vadd.f32 %v2261, %v2453
      %v2455 = vpop.f32.mrf.mxu0
      %v2456 = vadd.f32 %v2263, %v2455
      %v2457 = vpop.f32.mrf.mxu0
      %v2458 = vadd.f32 %v2265, %v2457
      %v2459 = vpop.f32.mrf.mxu0
      %v2460 = vadd.f32 %v2267, %v2459
      %2461 = vmatprep.mubr.bf16.mxu0 %v1941
      %2462 = vmatmul.mubr.bf16.gmra.mxu0 %v1940
      %v2463 = vpop.f32.mrf.mxu0
      %v2464 = vadd.f32 %v2271, %v2463
      %v2465 = vpop.f32.mrf.mxu0
      %v2466 = vadd.f32 %v2273, %v2465
      %v2467 = vpop.f32.mrf.mxu0
      %v2468 = vadd.f32 %v2275, %v2467
      %v2469 = vpop.f32.mrf.mxu0
      %v2470 = vadd.f32 %v2277, %v2469
      %2471 = vmatprep.mubr.bf16.mxu0 %v1945
      %2472 = vmatmul.mubr.bf16.gmra.mxu0 %v1944
      %v2473 = vpop.f32.mrf.mxu0
      %v2474 = vadd.f32 %v2281, %v2473
      %v2475 = vpop.f32.mrf.mxu0
      %v2476 = vadd.f32 %v2283, %v2475
      %v2477 = vpop.f32.mrf.mxu0
      %v2478 = vadd.f32 %v2285, %v2477
      %v2479 = vpop.f32.mrf.mxu0
      %v2480 = vadd.f32 %v2287, %v2479
      %2481 = vmatprep.mubr.bf16.mxu0 %v1949
      %2482 = vmatmul.mubr.bf16.gmra.mxu0 %v1948
      %v2483 = vpop.f32.mrf.mxu0
      %v2484 = vadd.f32 %v2291, %v2483
      %v2485 = vpop.f32.mrf.mxu0
      %v2486 = vadd.f32 %v2293, %v2485
      %v2487 = vpop.f32.mrf.mxu0
      %v2488 = vadd.f32 %v2295, %v2487
      %v2489 = vpop.f32.mrf.mxu0
      %v2490 = vadd.f32 %v2297, %v2489
      %2491 = vmatprep.mubr.bf16.mxu0 %v1953
      %2492 = vmatmul.mubr.bf16.gmra.mxu0 %v1952
      %v2493 = vpop.f32.mrf.mxu0
      %v2494 = vadd.f32 %v2301, %v2493
      %v2495 = vpop.f32.mrf.mxu0
      %v2496 = vadd.f32 %v2303, %v2495
      %v2497 = vpop.f32.mrf.mxu0
      %v2498 = vadd.f32 %v2305, %v2497
      %v2499 = vpop.f32.mrf.mxu0
      %v2500 = vadd.f32 %v2307, %v2499
      %2501 = vmatprep.mubr.bf16.mxu0 %v1957
      %2502 = vmatmul.mubr.bf16.gmra.mxu0 %v1956
      %v2503 = vpop.f32.mrf.mxu0
      %v2504 = vadd.f32 %v2311, %v2503
      %v2505 = vpop.f32.mrf.mxu0
      %v2506 = vadd.f32 %v2313, %v2505
      %v2507 = vpop.f32.mrf.mxu0
      %v2508 = vadd.f32 %v2315, %v2507
      %v2509 = vpop.f32.mrf.mxu0
      %v2510 = vadd.f32 %v2317, %v2509
      %2511 = vmatprep.mubr.bf16.mxu0 %v1961
      %2512 = vmatmul.mubr.bf16.gmra.mxu0 %v1960
      %v2513 = vpop.f32.mrf.mxu0
      %v2514 = vadd.f32 %v2321, %v2513
      %v2515 = vpop.f32.mrf.mxu0
      %v2516 = vadd.f32 %v2323, %v2515
      %v2517 = vpop.f32.mrf.mxu0
      %v2518 = vadd.f32 %v2325, %v2517
      %v2519 = vpop.f32.mrf.mxu0
      %v2520 = vadd.f32 %v2327, %v2519
      %2521 = vmatprep.mubr.bf16.mxu0 %v1965
      %2522 = vmatmul.mubr.bf16.gmra.mxu0 %v1964
      %v2523 = vpop.f32.mrf.mxu0
      %v2524 = vadd.f32 %v2331, %v2523
      %v2525 = vpop.f32.mrf.mxu0
      %v2526 = vadd.f32 %v2333, %v2525
      %v2527 = vpop.f32.mrf.mxu0
      %v2528 = vadd.f32 %v2335, %v2527
      %v2529 = vpop.f32.mrf.mxu0
      %v2530 = vadd.f32 %v2337, %v2529
      %2531 = vmatprep.mubr.bf16.mxu0 %v1969
      %2532 = vmatmul.mubr.bf16.gmra.mxu0 %v1968
      %v2533 = vpop.f32.mrf.mxu0
      %v2534 = vadd.f32 %v2341, %v2533
      %v2535 = vpop.f32.mrf.mxu0
      %v2536 = vadd.f32 %v2343, %v2535
      %v2537 = vpop.f32.mrf.mxu0
      %v2538 = vadd.f32 %v2345, %v2537
      %v2539 = vpop.f32.mrf.mxu0
      %v2540 = vadd.f32 %v2347, %v2539
      %2541 = vmatprep.mubr.bf16.mxu0 %v1973
      %2542 = vmatmul.mubr.bf16.gmra.mxu0 %v1972
      %v2543 = vpop.f32.mrf.mxu0
      %v2544 = vadd.f32 %v2351, %v2543
      %v2545 = vpop.f32.mrf.mxu0
      %v2546 = vadd.f32 %v2353, %v2545
      %v2547 = vpop.f32.mrf.mxu0
      %v2548 = vadd.f32 %v2355, %v2547
      %v2549 = vpop.f32.mrf.mxu0
      %v2550 = vadd.f32 %v2357, %v2549
      %2551 = vdwg.mxu0
      %v2552 = vpack.c.bf16 %v2398, %v2394
      %v2553 = vpack.c.bf16 %v2400, %v2396
      %v2554 = vpack.c.bf16 %v2408, %v2404
      %v2555 = vpack.c.bf16 %v2410, %v2406
      %v2556 = vpack.c.bf16 %v2418, %v2414
      %v2557 = vpack.c.bf16 %v2420, %v2416
      %v2558 = vpack.c.bf16 %v2428, %v2424
      %v2559 = vpack.c.bf16 %v2430, %v2426
      %v2560 = vpack.c.bf16 %v2438, %v2434
      %v2561 = vpack.c.bf16 %v2440, %v2436
      %v2562 = vpack.c.bf16 %v2448, %v2444
      %v2563 = vpack.c.bf16 %v2450, %v2446
      %v2564 = vpack.c.bf16 %v2458, %v2454
      %v2565 = vpack.c.bf16 %v2460, %v2456
      %v2566 = vpack.c.bf16 %v2468, %v2464
      %v2567 = vpack.c.bf16 %v2470, %v2466
      %v2568 = vpack.c.bf16 %v2478, %v2474
      %v2569 = vpack.c.bf16 %v2480, %v2476
      %v2570 = vpack.c.bf16 %v2488, %v2484
      %v2571 = vpack.c.bf16 %v2490, %v2486
      %v2572 = vpack.c.bf16 %v2498, %v2494
      %v2573 = vpack.c.bf16 %v2500, %v2496
      %v2574 = vpack.c.bf16 %v2508, %v2504
      %v2575 = vpack.c.bf16 %v2510, %v2506
      %v2576 = vpack.c.bf16 %v2518, %v2514
      %v2577 = vpack.c.bf16 %v2520, %v2516
      %v2578 = vpack.c.bf16 %v2528, %v2524
      %v2579 = vpack.c.bf16 %v2530, %v2526
      %v2580 = vpack.c.bf16 %v2538, %v2534
      %v2581 = vpack.c.bf16 %v2540, %v2536
      %v2582 = vpack.c.bf16 %v2548, %v2544
      %v2583 = vpack.c.bf16 %v2550, %v2546
      %v2584 = vpack.c.bf16 %v648, %v645
      %v2585 = vpack.c.bf16 %v656, %v653
      %v2586 = vpack.c.bf16 %v664, %v661
      %v2587 = vpack.c.bf16 %v672, %v669
      %v2588 = vpack.c.bf16 %v680, %v677
      %v2589 = vpack.c.bf16 %v688, %v685
      %v2590 = vpack.c.bf16 %v696, %v693
      %v2591 = vpack.c.bf16 %v704, %v701
      %v2592 = vpack.c.bf16 %v712, %v709
      %v2593 = vpack.c.bf16 %v720, %v717
      %v2594 = vpack.c.bf16 %v728, %v725
      %v2595 = vpack.c.bf16 %v736, %v733
      %v2596 = vpack.c.bf16 %v744, %v741
      %v2597 = vpack.c.bf16 %v752, %v749
      %v2598 = vpack.c.bf16 %v760, %v757
      %v2599 = vpack.c.bf16 %v768, %v765
      %2600 = vmatprep.subr.bf16.mxu0 0
      %2601 = vmatpush1.bf16.msra.mxu0 %v2591
      %2602 = vmatprep.subr.bf16.mxu0 0
      %2603 = vmatpush1.bf16.msra.mxu0 %v2590
      %2604 = vmatprep.subr.bf16.mxu0 0
      %2605 = vmatpush1.bf16.msra.mxu0 %v2589
      %2606 = vmatprep.subr.bf16.mxu0 0
      %2607 = vmatpush1.bf16.msra.mxu0 %v2588
      %2608 = vmatprep.subr.bf16.mxu0 0
      %2609 = vmatpush1.bf16.msra.mxu0 %v2587
      %2610 = vmatprep.subr.bf16.mxu0 0
      %2611 = vmatpush1.bf16.msra.mxu0 %v2586
      %2612 = vmatprep.subr.bf16.mxu0 0
      %2613 = vmatpush1.bf16.msra.mxu0 %v2585
      %2614 = vmatprep.subr.bf16.mxu0 0
      %2615 = vmatpush1.bf16.msra.mxu0 %v2584
      %2616 = vmatprep.subr.bf16.mxu0 0
      %2617 = vmatpush2.bf16.msra.mxu0 %v2599
      %2618 = vmatprep.subr.bf16.mxu0 0
      %2619 = vmatpush2.bf16.msra.mxu0 %v2598
      %2620 = vmatprep.subr.bf16.mxu0 0
      %2621 = vmatpush2.bf16.msra.mxu0 %v2597
      %2622 = vmatprep.subr.bf16.mxu0 0
      %2623 = vmatpush2.bf16.msra.mxu0 %v2596
      %2624 = vmatprep.subr.bf16.mxu0 0
      %2625 = vmatpush2.bf16.msra.mxu0 %v2595
      %2626 = vmatprep.subr.bf16.mxu0 0
      %2627 = vmatpush2.bf16.msra.mxu0 %v2594
      %2628 = vmatprep.subr.bf16.mxu0 0
      %2629 = vmatpush2.bf16.msra.mxu0 %v2593
      %2630 = vmatprep.subr.bf16.mxu0 0
      %2631 = vmatpush2.bf16.msra.mxu0 %v2592
      %2632 = vmatprep.mubr.bf16.mxu0 %v2553
      %2633 = vmatmul.mubr.bf16.gmra.mxu0 %v2552
      %v2634 = vpop.f32.mrf.mxu0
      %v2635 = vadd.f32 0.0, %v2634
      %v2636 = vpop.f32.mrf.mxu0
      %v2637 = vpop.f32.mrf.mxu0
      %v2638 = vadd.f32 0.0, %v2637
      %v2639 = vpop.f32.mrf.mxu0
      %2640 = vmatprep.mubr.bf16.mxu0 %v2555
      %2641 = vmatmul.mubr.bf16.gmra.mxu0 %v2554
      %v2642 = vpop.f32.mrf.mxu0
      %v2643 = vadd.f32 0.0, %v2642
      %v2644 = vpop.f32.mrf.mxu0
      %v2645 = vpop.f32.mrf.mxu0
      %v2646 = vadd.f32 0.0, %v2645
      %v2647 = vpop.f32.mrf.mxu0
      %2648 = vmatprep.mubr.bf16.mxu0 %v2557
      %2649 = vmatmul.mubr.bf16.gmra.mxu0 %v2556
      %v2650 = vpop.f32.mrf.mxu0
      %v2651 = vadd.f32 0.0, %v2650
      %v2652 = vpop.f32.mrf.mxu0
      %v2653 = vpop.f32.mrf.mxu0
      %v2654 = vadd.f32 0.0, %v2653
      %v2655 = vpop.f32.mrf.mxu0
      %2656 = vmatprep.mubr.bf16.mxu0 %v2559
      %2657 = vmatmul.mubr.bf16.gmra.mxu0 %v2558
      %v2658 = vpop.f32.mrf.mxu0
      %v2659 = vadd.f32 0.0, %v2658
      %v2660 = vpop.f32.mrf.mxu0
      %v2661 = vpop.f32.mrf.mxu0
      %v2662 = vadd.f32 0.0, %v2661
      %v2663 = vpop.f32.mrf.mxu0
      %2664 = vmatprep.mubr.bf16.mxu0 %v2561
      %2665 = vmatmul.mubr.bf16.gmra.mxu0 %v2560
      %v2666 = vpop.f32.mrf.mxu0
      %v2667 = vadd.f32 0.0, %v2666
      %v2668 = vpop.f32.mrf.mxu0
      %v2669 = vpop.f32.mrf.mxu0
      %v2670 = vadd.f32 0.0, %v2669
      %v2671 = vpop.f32.mrf.mxu0
      %2672 = vmatprep.mubr.bf16.mxu0 %v2563
      %2673 = vmatmul.mubr.bf16.gmra.mxu0 %v2562
      %v2674 = vpop.f32.mrf.mxu0
      %v2675 = vadd.f32 0.0, %v2674
      %v2676 = vpop.f32.mrf.mxu0
      %v2677 = vpop.f32.mrf.mxu0
      %v2678 = vadd.f32 0.0, %v2677
      %v2679 = vpop.f32.mrf.mxu0
      %2680 = vmatprep.mubr.bf16.mxu0 %v2565
      %2681 = vmatmul.mubr.bf16.gmra.mxu0 %v2564
      %v2682 = vpop.f32.mrf.mxu0
      %v2683 = vadd.f32 0.0, %v2682
      %v2684 = vpop.f32.mrf.mxu0
      %v2685 = vpop.f32.mrf.mxu0
      %v2686 = vadd.f32 0.0, %v2685
      %v2687 = vpop.f32.mrf.mxu0
      %2688 = vmatprep.mubr.bf16.mxu0 %v2567
      %2689 = vmatmul.mubr.bf16.gmra.mxu0 %v2566
      %v2690 = vpop.f32.mrf.mxu0
      %v2691 = vadd.f32 0.0, %v2690
      %v2692 = vpop.f32.mrf.mxu0
      %v2693 = vpop.f32.mrf.mxu0
      %v2694 = vadd.f32 0.0, %v2693
      %v2695 = vpop.f32.mrf.mxu0
      %2696 = vmatprep.mubr.bf16.mxu0 %v2569
      %2697 = vmatmul.mubr.bf16.gmra.mxu0 %v2568
      %v2698 = vpop.f32.mrf.mxu0
      %v2699 = vadd.f32 0.0, %v2698
      %v2700 = vpop.f32.mrf.mxu0
      %v2701 = vpop.f32.mrf.mxu0
      %v2702 = vadd.f32 0.0, %v2701
      %v2703 = vpop.f32.mrf.mxu0
      %2704 = vmatprep.mubr.bf16.mxu0 %v2571
      %2705 = vmatmul.mubr.bf16.gmra.mxu0 %v2570
      %v2706 = vpop.f32.mrf.mxu0
      %v2707 = vadd.f32 0.0, %v2706
      %v2708 = vpop.f32.mrf.mxu0
      %v2709 = vpop.f32.mrf.mxu0
      %v2710 = vadd.f32 0.0, %v2709
      %v2711 = vpop.f32.mrf.mxu0
      %2712 = vmatprep.mubr.bf16.mxu0 %v2573
      %2713 = vmatmul.mubr.bf16.gmra.mxu0 %v2572
      %v2714 = vpop.f32.mrf.mxu0
      %v2715 = vadd.f32 0.0, %v2714
      %v2716 = vpop.f32.mrf.mxu0
      %v2717 = vpop.f32.mrf.mxu0
      %v2718 = vadd.f32 0.0, %v2717
      %v2719 = vpop.f32.mrf.mxu0
      %2720 = vmatprep.mubr.bf16.mxu0 %v2575
      %2721 = vmatmul.mubr.bf16.gmra.mxu0 %v2574
      %v2722 = vpop.f32.mrf.mxu0
      %v2723 = vadd.f32 0.0, %v2722
      %v2724 = vpop.f32.mrf.mxu0
      %v2725 = vpop.f32.mrf.mxu0
      %v2726 = vadd.f32 0.0, %v2725
      %v2727 = vpop.f32.mrf.mxu0
      %2728 = vmatprep.mubr.bf16.mxu0 %v2577
      %2729 = vmatmul.mubr.bf16.gmra.mxu0 %v2576
      %v2730 = vpop.f32.mrf.mxu0
      %v2731 = vadd.f32 0.0, %v2730
      %v2732 = vpop.f32.mrf.mxu0
      %v2733 = vpop.f32.mrf.mxu0
      %v2734 = vadd.f32 0.0, %v2733
      %v2735 = vpop.f32.mrf.mxu0
      %2736 = vmatprep.mubr.bf16.mxu0 %v2579
      %2737 = vmatmul.mubr.bf16.gmra.mxu0 %v2578
      %v2738 = vpop.f32.mrf.mxu0
      %v2739 = vadd.f32 0.0, %v2738
      %v2740 = vpop.f32.mrf.mxu0
      %v2741 = vpop.f32.mrf.mxu0
      %v2742 = vadd.f32 0.0, %v2741
      %v2743 = vpop.f32.mrf.mxu0
      %2744 = vmatprep.mubr.bf16.mxu0 %v2581
      %2745 = vmatmul.mubr.bf16.gmra.mxu0 %v2580
      %v2746 = vpop.f32.mrf.mxu0
      %v2747 = vadd.f32 0.0, %v2746
      %v2748 = vpop.f32.mrf.mxu0
      %v2749 = vpop.f32.mrf.mxu0
      %v2750 = vadd.f32 0.0, %v2749
      %v2751 = vpop.f32.mrf.mxu0
      %2752 = vmatprep.mubr.bf16.mxu0 %v2583
      %2753 = vmatmul.mubr.bf16.gmra.mxu0 %v2582
      %v2754 = vpop.f32.mrf.mxu0
      %v2755 = vadd.f32 0.0, %v2754
      %v2756 = vpop.f32.mrf.mxu0
      %v2757 = vpop.f32.mrf.mxu0
      %v2758 = vadd.f32 0.0, %v2757
      %v2759 = vpop.f32.mrf.mxu0
      %2760 = vdwg.mxu0
      %v2761 = vpack.c.bf16 %v2638, %v2635
      %v2762 = vpack.c.bf16 %v2646, %v2643
      %v2763 = vpack.c.bf16 %v2654, %v2651
      %v2764 = vpack.c.bf16 %v2662, %v2659
      %v2765 = vpack.c.bf16 %v2670, %v2667
      %v2766 = vpack.c.bf16 %v2678, %v2675
      %v2767 = vpack.c.bf16 %v2686, %v2683
      %v2768 = vpack.c.bf16 %v2694, %v2691
      %v2769 = vpack.c.bf16 %v2702, %v2699
      %v2770 = vpack.c.bf16 %v2710, %v2707
      %v2771 = vpack.c.bf16 %v2718, %v2715
      %v2772 = vpack.c.bf16 %v2726, %v2723
      %v2773 = vpack.c.bf16 %v2734, %v2731
      %v2774 = vpack.c.bf16 %v2742, %v2739
      %v2775 = vpack.c.bf16 %v2750, %v2747
      %v2776 = vpack.c.bf16 %v2758, %v2755
      %v2777 = vld [vmem:[%s4] sm:$0xf]
      %v2778 = vld [vmem:[%s4 + $0x4] sm:$0xf]
      %v2779 = vld [vmem:[%s4 + $0x8] sm:$0xf]
      %v2780 = vld [vmem:[%s4 + $0xc] sm:$0xf]
      %v2781 = vld [vmem:[%s4 + $0x10] sm:$0xf]
      %v2782 = vld [vmem:[%s4 + $0x14] sm:$0xf]
      %v2783 = vld [vmem:[%s4 + $0x18] sm:$0xf]
      %v2784 = vld [vmem:[%s4 + $0x1c] sm:$0xf]
      %v2785 = vld [vmem:[%s4 + $0x20] sm:$0xf]
      %v2786 = vld [vmem:[%s4 + $0x24] sm:$0xf]
      %v2787 = vld [vmem:[%s4 + $0x28] sm:$0xf]
      %v2788 = vld [vmem:[%s4 + $0x2c] sm:$0xf]
      %v2789 = vld [vmem:[%s4 + $0x30] sm:$0xf]
      %v2790 = vld [vmem:[%s4 + $0x34] sm:$0xf]
      %v2791 = vld [vmem:[%s4 + $0x38] sm:$0xf]
      %v2792 = vld [vmem:[%s4 + $0x3c] sm:$0xf]
      %v2793 = vld [vmem:[%s9] sm:$0x1]
      %v2794 = vlaneseq
      %v2795 = vshrl.u32 %v2794, 7
      %v2796 = vsub.s32 0, %v2795
      %v2797 = vrot.slane %v2793, %v2796
      %v2814 = vunpack.c.l.b16 %v2777
      %v2815 = vunpack.c.l.b16 %v2778
      %v2816 = vunpack.c.l.b16 %v2779
      %v2817 = vunpack.c.l.b16 %v2780
      %v2818 = vunpack.c.l.b16 %v2781
      %v2819 = vunpack.c.l.b16 %v2782
      %v2820 = vunpack.c.l.b16 %v2783
      %v2821 = vunpack.c.l.b16 %v2784
      %v2822 = vunpack.c.l.b16 %v2785
      %v2823 = vunpack.c.l.b16 %v2786
      %v2824 = vunpack.c.l.b16 %v2787
      %v2825 = vunpack.c.l.b16 %v2788
      %v2826 = vunpack.c.l.b16 %v2789
      %v2827 = vunpack.c.l.b16 %v2790
      %v2828 = vunpack.c.l.b16 %v2791
      %v2829 = vunpack.c.l.b16 %v2792
      %v2830 = vpack.c.b16 %v2815, %v2814
      %v2831 = vpack.c.b16 %v2817, %v2816
      %v2832 = vpack.c.b16 %v2819, %v2818
      %v2833 = vpack.c.b16 %v2821, %v2820
      %v2834 = vpack.c.b16 %v2823, %v2822
      %v2835 = vpack.c.b16 %v2825, %v2824
      %v2836 = vpack.c.b16 %v2827, %v2826
      %v2837 = vpack.c.b16 %v2829, %v2828
      %2846 = vmatprep.subr.bf16.mxu0 0
      %2847 = vmatpush1.bf16.msra.mxu0 %v2837
      %2848 = vmatprep.subr.bf16.mxu0 0
      %2849 = vmatpush1.bf16.msra.mxu0 %v2836
      %2850 = vmatprep.subr.bf16.mxu0 0
      %2851 = vmatpush1.bf16.msra.mxu0 %v2835
      %2852 = vmatprep.subr.bf16.mxu0 0
      %2853 = vmatpush1.bf16.msra.mxu0 %v2834
      %2854 = vmatprep.subr.bf16.mxu0 0
      %2855 = vmatpush1.bf16.msra.mxu0 %v2833
      %2856 = vmatprep.subr.bf16.mxu0 0
      %2857 = vmatpush1.bf16.msra.mxu0 %v2832
      %2858 = vmatprep.subr.bf16.mxu0 0
      %2859 = vmatpush1.bf16.msra.mxu0 %v2831
      %2860 = vmatprep.subr.bf16.mxu0 0
      %2861 = vmatpush1.bf16.msra.mxu0 %v2830
      %2862 = vmatprep.subr.bf16.mxu0 0
      %2863 = vmatpush2.bf16.msra.mxu0 0
      %2864 = vmatprep.subr.bf16.mxu0 0
      %2865 = vmatpush2.bf16.msra.mxu0 0
      %2866 = vmatprep.subr.bf16.mxu0 0
      %2867 = vmatpush2.bf16.msra.mxu0 0
      %2868 = vmatprep.subr.bf16.mxu0 0
      %2869 = vmatpush2.bf16.msra.mxu0 0
      %2870 = vmatprep.subr.bf16.mxu0 0
      %2871 = vmatpush2.bf16.msra.mxu0 0
      %2872 = vmatprep.subr.bf16.mxu0 0
      %2873 = vmatpush2.bf16.msra.mxu0 0
      %2874 = vmatprep.subr.bf16.mxu0 0
      %2875 = vmatpush2.bf16.msra.mxu0 0
      %2876 = vmatprep.subr.bf16.mxu0 0
      %2877 = vmatpush2.bf16.msra.mxu0 0
      %2878 = vmatprep.mubr.bf16.mxu0 0
      %2879 = vmatmul.mubr.bf16.gmra.mxu0 %v2761
      %v2880 = vpop.f32.mrf.mxu0
      %v2881 = vadd.f32 %v2797, %v2880
      %v2882 = vpop.f32.mrf.mxu0
      %v2883 = vpop.f32.mrf.mxu0
      %v2884 = vadd.f32 %v2797, %v2883
      %v2885 = vpop.f32.mrf.mxu0
      %2886 = vmatprep.mubr.bf16.mxu0 0
      %2887 = vmatmul.mubr.bf16.gmra.mxu0 %v2762
      %v2888 = vpop.f32.mrf.mxu0
      %v2889 = vadd.f32 %v2797, %v2888
      %v2890 = vpop.f32.mrf.mxu0
      %v2891 = vpop.f32.mrf.mxu0
      %v2892 = vadd.f32 %v2797, %v2891
      %v2893 = vpop.f32.mrf.mxu0
      %2894 = vmatprep.mubr.bf16.mxu0 0
      %2895 = vmatmul.mubr.bf16.gmra.mxu0 %v2763
      %v2896 = vpop.f32.mrf.mxu0
      %v2897 = vadd.f32 %v2797, %v2896
      %v2898 = vpop.f32.mrf.mxu0
      %v2899 = vpop.f32.mrf.mxu0
      %v2900 = vadd.f32 %v2797, %v2899
      %v2901 = vpop.f32.mrf.mxu0
      %2902 = vmatprep.mubr.bf16.mxu0 0
      %2903 = vmatmul.mubr.bf16.gmra.mxu0 %v2764
      %v2904 = vpop.f32.mrf.mxu0
      %v2905 = vadd.f32 %v2797, %v2904
      %v2906 = vpop.f32.mrf.mxu0
      %v2907 = vpop.f32.mrf.mxu0
      %v2908 = vadd.f32 %v2797, %v2907
      %v2909 = vpop.f32.mrf.mxu0
      %2910 = vmatprep.mubr.bf16.mxu0 0
      %2911 = vmatmul.mubr.bf16.gmra.mxu0 %v2765
      %v2912 = vpop.f32.mrf.mxu0
      %v2913 = vadd.f32 %v2797, %v2912
      %v2914 = vpop.f32.mrf.mxu0
      %v2915 = vpop.f32.mrf.mxu0
      %v2916 = vadd.f32 %v2797, %v2915
      %v2917 = vpop.f32.mrf.mxu0
      %2918 = vmatprep.mubr.bf16.mxu0 0
      %2919 = vmatmul.mubr.bf16.gmra.mxu0 %v2766
      %v2920 = vpop.f32.mrf.mxu0
      %v2921 = vadd.f32 %v2797, %v2920
      %v2922 = vpop.f32.mrf.mxu0
      %v2923 = vpop.f32.mrf.mxu0
      %v2924 = vadd.f32 %v2797, %v2923
      %v2925 = vpop.f32.mrf.mxu0
      %2926 = vmatprep.mubr.bf16.mxu0 0
      %2927 = vmatmul.mubr.bf16.gmra.mxu0 %v2767
      %v2928 = vpop.f32.mrf.mxu0
      %v2929 = vadd.f32 %v2797, %v2928
      %v2930 = vpop.f32.mrf.mxu0
      %v2931 = vpop.f32.mrf.mxu0
      %v2932 = vadd.f32 %v2797, %v2931
      %v2933 = vpop.f32.mrf.mxu0
      %2934 = vmatprep.mubr.bf16.mxu0 0
      %2935 = vmatmul.mubr.bf16.gmra.mxu0 %v2768
      %v2936 = vpop.f32.mrf.mxu0
      %v2937 = vadd.f32 %v2797, %v2936
      %v2938 = vpop.f32.mrf.mxu0
      %v2939 = vpop.f32.mrf.mxu0
      %v2940 = vadd.f32 %v2797, %v2939
      %v2941 = vpop.f32.mrf.mxu0
      %2942 = vmatprep.mubr.bf16.mxu0 0
      %2943 = vmatmul.mubr.bf16.gmra.mxu0 %v2769
      %v2944 = vpop.f32.mrf.mxu0
      %v2945 = vadd.f32 %v2797, %v2944
      %v2946 = vpop.f32.mrf.mxu0
      %v2947 = vpop.f32.mrf.mxu0
      %v2948 = vadd.f32 %v2797, %v2947
      %v2949 = vpop.f32.mrf.mxu0
      %2950 = vmatprep.mubr.bf16.mxu0 0
      %2951 = vmatmul.mubr.bf16.gmra.mxu0 %v2770
      %v2952 = vpop.f32.mrf.mxu0
      %v2953 = vadd.f32 %v2797, %v2952
      %v2954 = vpop.f32.mrf.mxu0
      %v2955 = vpop.f32.mrf.mxu0
      %v2956 = vadd.f32 %v2797, %v2955
      %v2957 = vpop.f32.mrf.mxu0
      %2958 = vmatprep.mubr.bf16.mxu0 0
      %2959 = vmatmul.mubr.bf16.gmra.mxu0 %v2771
      %v2960 = vpop.f32.mrf.mxu0
      %v2961 = vadd.f32 %v2797, %v2960
      %v2962 = vpop.f32.mrf.mxu0
      %v2963 = vpop.f32.mrf.mxu0
      %v2964 = vadd.f32 %v2797, %v2963
      %v2965 = vpop.f32.mrf.mxu0
      %2966 = vmatprep.mubr.bf16.mxu0 0
      %2967 = vmatmul.mubr.bf16.gmra.mxu0 %v2772
      %v2968 = vpop.f32.mrf.mxu0
      %v2969 = vadd.f32 %v2797, %v2968
      %v2970 = vpop.f32.mrf.mxu0
      %v2971 = vpop.f32.mrf.mxu0
      %v2972 = vadd.f32 %v2797, %v2971
      %v2973 = vpop.f32.mrf.mxu0
      %2974 = vmatprep.mubr.bf16.mxu0 0
      %2975 = vmatmul.mubr.bf16.gmra.mxu0 %v2773
      %v2976 = vpop.f32.mrf.mxu0
      %v2977 = vadd.f32 %v2797, %v2976
      %v2978 = vpop.f32.mrf.mxu0
      %v2979 = vpop.f32.mrf.mxu0
      %v2980 = vadd.f32 %v2797, %v2979
      %v2981 = vpop.f32.mrf.mxu0
      %2982 = vmatprep.mubr.bf16.mxu0 0
      %2983 = vmatmul.mubr.bf16.gmra.mxu0 %v2774
      %v2984 = vpop.f32.mrf.mxu0
      %v2985 = vadd.f32 %v2797, %v2984
      %v2986 = vpop.f32.mrf.mxu0
      %v2987 = vpop.f32.mrf.mxu0
      %v2988 = vadd.f32 %v2797, %v2987
      %v2989 = vpop.f32.mrf.mxu0
      %2990 = vmatprep.mubr.bf16.mxu0 0
      %2991 = vmatmul.mubr.bf16.gmra.mxu0 %v2775
      %v2992 = vpop.f32.mrf.mxu0
      %v2993 = vadd.f32 %v2797, %v2992
      %v2994 = vpop.f32.mrf.mxu0
      %v2995 = vpop.f32.mrf.mxu0
      %v2996 = vadd.f32 %v2797, %v2995
      %v2997 = vpop.f32.mrf.mxu0
      %2998 = vmatprep.mubr.bf16.mxu0 0
      %2999 = vmatmul.mubr.bf16.gmra.mxu0 %v2776
      %v3000 = vpop.f32.mrf.mxu0
      %v3001 = vadd.f32 %v2797, %v3000
      %v3002 = vpop.f32.mrf.mxu0
      %v3003 = vpop.f32.mrf.mxu0
      %v3004 = vadd.f32 %v2797, %v3003
      %v3005 = vpop.f32.mrf.mxu0
      %3006 = vdwg.mxu0
      %v3007 = vmax.f32 %v2881, 0.0
      %v3008 = vmax.f32 %v2884, 0.0
      %v3009 = vmax.f32 %v2889, 0.0
      %v3010 = vmax.f32 %v2892, 0.0
      %v3011 = vmax.f32 %v2897, 0.0
      %v3012 = vmax.f32 %v2900, 0.0
      %v3013 = vmax.f32 %v2905, 0.0
      %v3014 = vmax.f32 %v2908, 0.0
      %v3015 = vmax.f32 %v2913, 0.0
      %v3016 = vmax.f32 %v2916, 0.0
      %v3017 = vmax.f32 %v2921, 0.0
      %v3018 = vmax.f32 %v2924, 0.0
      %v3019 = vmax.f32 %v2929, 0.0
      %v3020 = vmax.f32 %v2932, 0.0
      %v3021 = vmax.f32 %v2937, 0.0
      %v3022 = vmax.f32 %v2940, 0.0
      %v3023 = vmax.f32 %v2945, 0.0
      %v3024 = vmax.f32 %v2948, 0.0
      %v3025 = vmax.f32 %v2953, 0.0
      %v3026 = vmax.f32 %v2956, 0.0
      %v3027 = vmax.f32 %v2961, 0.0
      %v3028 = vmax.f32 %v2964, 0.0
      %v3029 = vmax.f32 %v2969, 0.0
      %v3030 = vmax.f32 %v2972, 0.0
      %v3031 = vmax.f32 %v2977, 0.0
      %v3032 = vmax.f32 %v2980, 0.0
      %v3033 = vmax.f32 %v2985, 0.0
      %v3034 = vmax.f32 %v2988, 0.0
      %v3035 = vmax.f32 %v2993, 0.0
      %v3036 = vmax.f32 %v2996, 0.0
      %v3037 = vmax.f32 %v3001, 0.0
      %v3038 = vmax.f32 %v3004, 0.0
      %v3039 = vpack.c.bf16 %v3008, %v3007
      %v3040 = vpack.c.bf16 %v3010, %v3009
      %v3041 = vpack.c.bf16 %v3012, %v3011
      %v3042 = vpack.c.bf16 %v3014, %v3013
      %v3043 = vpack.c.bf16 %v3016, %v3015
      %v3044 = vpack.c.bf16 %v3018, %v3017
      %v3045 = vpack.c.bf16 %v3020, %v3019
      %v3046 = vpack.c.bf16 %v3022, %v3021
      %v3047 = vpack.c.bf16 %v3024, %v3023
      %v3048 = vpack.c.bf16 %v3026, %v3025
      %v3049 = vpack.c.bf16 %v3028, %v3027
      %v3050 = vpack.c.bf16 %v3030, %v3029
      %v3051 = vpack.c.bf16 %v3032, %v3031
      %v3052 = vpack.c.bf16 %v3034, %v3033
      %v3053 = vpack.c.bf16 %v3036, %v3035
      %v3054 = vpack.c.bf16 %v3038, %v3037
      %v3055 = vld [vmem:[%s5] sm:$0xf]
      %v3056 = vld [vmem:[%s5 + $0x4] sm:$0xf]
      %v3057 = vld [vmem:[%s5 + $0x8] sm:$0xf]
      %v3058 = vld [vmem:[%s5 + $0xc] sm:$0xf]
      %v3059 = vld [vmem:[%s5 + $0x10] sm:$0xf]
      %v3060 = vld [vmem:[%s5 + $0x14] sm:$0xf]
      %v3061 = vld [vmem:[%s5 + $0x18] sm:$0xf]
      %v3062 = vld [vmem:[%s5 + $0x1c] sm:$0xf]
      %v3063 = vld [vmem:[%s5 + $0x20] sm:$0xf]
      %v3064 = vld [vmem:[%s5 + $0x24] sm:$0xf]
      %v3065 = vld [vmem:[%s5 + $0x28] sm:$0xf]
      %v3066 = vld [vmem:[%s5 + $0x2c] sm:$0xf]
      %v3067 = vld [vmem:[%s5 + $0x30] sm:$0xf]
      %v3068 = vld [vmem:[%s5 + $0x34] sm:$0xf]
      %v3069 = vld [vmem:[%s5 + $0x38] sm:$0xf]
      %v3070 = vld [vmem:[%s5 + $0x3c] sm:$0xf]
      %v3071 = vld [vmem:[%s9 + $0x3] sm:$0x1]
      %v3072 = vlaneseq
      %v3073 = vshrl.u32 %v3072, 7
      %v3074 = vsub.s32 0, %v3073
      %v3075 = vrot.slane %v3071, %v3074
      %v3092 = vunpack.c.l.b16 %v3055
      %v3093 = vunpack.c.l.b16 %v3056
      %v3094 = vunpack.c.l.b16 %v3057
      %v3095 = vunpack.c.l.b16 %v3058
      %v3096 = vunpack.c.l.b16 %v3059
      %v3097 = vunpack.c.l.b16 %v3060
      %v3098 = vunpack.c.l.b16 %v3061
      %v3099 = vunpack.c.l.b16 %v3062
      %v3100 = vunpack.c.l.b16 %v3063
      %v3101 = vunpack.c.l.b16 %v3064
      %v3102 = vunpack.c.l.b16 %v3065
      %v3103 = vunpack.c.l.b16 %v3066
      %v3104 = vunpack.c.l.b16 %v3067
      %v3105 = vunpack.c.l.b16 %v3068
      %v3106 = vunpack.c.l.b16 %v3069
      %v3107 = vunpack.c.l.b16 %v3070
      %v3108 = vpack.c.b16 %v3093, %v3092
      %v3109 = vpack.c.b16 %v3095, %v3094
      %v3110 = vpack.c.b16 %v3097, %v3096
      %v3111 = vpack.c.b16 %v3099, %v3098
      %v3112 = vpack.c.b16 %v3101, %v3100
      %v3113 = vpack.c.b16 %v3103, %v3102
      %v3114 = vpack.c.b16 %v3105, %v3104
      %v3115 = vpack.c.b16 %v3107, %v3106
      %3124 = vmatprep.subr.bf16.mxu0 0
      %3125 = vmatpush1.bf16.msra.mxu0 %v3115
      %3126 = vmatprep.subr.bf16.mxu0 0
      %3127 = vmatpush1.bf16.msra.mxu0 %v3114
      %3128 = vmatprep.subr.bf16.mxu0 0
      %3129 = vmatpush1.bf16.msra.mxu0 %v3113
      %3130 = vmatprep.subr.bf16.mxu0 0
      %3131 = vmatpush1.bf16.msra.mxu0 %v3112
      %3132 = vmatprep.subr.bf16.mxu0 0
      %3133 = vmatpush1.bf16.msra.mxu0 %v3111
      %3134 = vmatprep.subr.bf16.mxu0 0
      %3135 = vmatpush1.bf16.msra.mxu0 %v3110
      %3136 = vmatprep.subr.bf16.mxu0 0
      %3137 = vmatpush1.bf16.msra.mxu0 %v3109
      %3138 = vmatprep.subr.bf16.mxu0 0
      %3139 = vmatpush1.bf16.msra.mxu0 %v3108
      %3140 = vmatprep.subr.bf16.mxu0 0
      %3141 = vmatpush2.bf16.msra.mxu0 0
      %3142 = vmatprep.subr.bf16.mxu0 0
      %3143 = vmatpush2.bf16.msra.mxu0 0
      %3144 = vmatprep.subr.bf16.mxu0 0
      %3145 = vmatpush2.bf16.msra.mxu0 0
      %3146 = vmatprep.subr.bf16.mxu0 0
      %3147 = vmatpush2.bf16.msra.mxu0 0
      %3148 = vmatprep.subr.bf16.mxu0 0
      %3149 = vmatpush2.bf16.msra.mxu0 0
      %3150 = vmatprep.subr.bf16.mxu0 0
      %3151 = vmatpush2.bf16.msra.mxu0 0
      %3152 = vmatprep.subr.bf16.mxu0 0
      %3153 = vmatpush2.bf16.msra.mxu0 0
      %3154 = vmatprep.subr.bf16.mxu0 0
      %3155 = vmatpush2.bf16.msra.mxu0 0
      %3156 = vmatprep.mubr.bf16.mxu0 0
      %3157 = vmatmul.mubr.bf16.gmra.mxu0 %v3039
      %v3158 = vpop.f32.mrf.mxu0
      %v3159 = vadd.f32 %v3075, %v3158
      %v3160 = vpop.f32.mrf.mxu0
      %v3161 = vpop.f32.mrf.mxu0
      %v3162 = vadd.f32 %v3075, %v3161
      %v3163 = vpop.f32.mrf.mxu0
      %3164 = vmatprep.mubr.bf16.mxu0 0
      %3165 = vmatmul.mubr.bf16.gmra.mxu0 %v3040
      %v3166 = vpop.f32.mrf.mxu0
      %v3167 = vadd.f32 %v3075, %v3166
      %v3168 = vpop.f32.mrf.mxu0
      %v3169 = vpop.f32.mrf.mxu0
      %v3170 = vadd.f32 %v3075, %v3169
      %v3171 = vpop.f32.mrf.mxu0
      %3172 = vmatprep.mubr.bf16.mxu0 0
      %3173 = vmatmul.mubr.bf16.gmra.mxu0 %v3041
      %v3174 = vpop.f32.mrf.mxu0
      %v3175 = vadd.f32 %v3075, %v3174
      %v3176 = vpop.f32.mrf.mxu0
      %v3177 = vpop.f32.mrf.mxu0
      %v3178 = vadd.f32 %v3075, %v3177
      %v3179 = vpop.f32.mrf.mxu0
      %3180 = vmatprep.mubr.bf16.mxu0 0
      %3181 = vmatmul.mubr.bf16.gmra.mxu0 %v3042
      %v3182 = vpop.f32.mrf.mxu0
      %v3183 = vadd.f32 %v3075, %v3182
      %v3184 = vpop.f32.mrf.mxu0
      %v3185 = vpop.f32.mrf.mxu0
      %v3186 = vadd.f32 %v3075, %v3185
      %v3187 = vpop.f32.mrf.mxu0
      %3188 = vmatprep.mubr.bf16.mxu0 0
      %3189 = vmatmul.mubr.bf16.gmra.mxu0 %v3043
      %v3190 = vpop.f32.mrf.mxu0
      %v3191 = vadd.f32 %v3075, %v3190
      %v3192 = vpop.f32.mrf.mxu0
      %v3193 = vpop.f32.mrf.mxu0
      %v3194 = vadd.f32 %v3075, %v3193
      %v3195 = vpop.f32.mrf.mxu0
      %3196 = vmatprep.mubr.bf16.mxu0 0
      %3197 = vmatmul.mubr.bf16.gmra.mxu0 %v3044
      %v3198 = vpop.f32.mrf.mxu0
      %v3199 = vadd.f32 %v3075, %v3198
      %v3200 = vpop.f32.mrf.mxu0
      %v3201 = vpop.f32.mrf.mxu0
      %v3202 = vadd.f32 %v3075, %v3201
      %v3203 = vpop.f32.mrf.mxu0
      %3204 = vmatprep.mubr.bf16.mxu0 0
      %3205 = vmatmul.mubr.bf16.gmra.mxu0 %v3045
      %v3206 = vpop.f32.mrf.mxu0
      %v3207 = vadd.f32 %v3075, %v3206
      %v3208 = vpop.f32.mrf.mxu0
      %v3209 = vpop.f32.mrf.mxu0
      %v3210 = vadd.f32 %v3075, %v3209
      %v3211 = vpop.f32.mrf.mxu0
      %3212 = vmatprep.mubr.bf16.mxu0 0
      %3213 = vmatmul.mubr.bf16.gmra.mxu0 %v3046
      %v3214 = vpop.f32.mrf.mxu0
      %v3215 = vadd.f32 %v3075, %v3214
      %v3216 = vpop.f32.mrf.mxu0
      %v3217 = vpop.f32.mrf.mxu0
      %v3218 = vadd.f32 %v3075, %v3217
      %v3219 = vpop.f32.mrf.mxu0
      %3220 = vmatprep.mubr.bf16.mxu0 0
      %3221 = vmatmul.mubr.bf16.gmra.mxu0 %v3047
      %v3222 = vpop.f32.mrf.mxu0
      %v3223 = vadd.f32 %v3075, %v3222
      %v3224 = vpop.f32.mrf.mxu0
      %v3225 = vpop.f32.mrf.mxu0
      %v3226 = vadd.f32 %v3075, %v3225
      %v3227 = vpop.f32.mrf.mxu0
      %3228 = vmatprep.mubr.bf16.mxu0 0
      %3229 = vmatmul.mubr.bf16.gmra.mxu0 %v3048
      %v3230 = vpop.f32.mrf.mxu0
      %v3231 = vadd.f32 %v3075, %v3230
      %v3232 = vpop.f32.mrf.mxu0
      %v3233 = vpop.f32.mrf.mxu0
      %v3234 = vadd.f32 %v3075, %v3233
      %v3235 = vpop.f32.mrf.mxu0
      %3236 = vmatprep.mubr.bf16.mxu0 0
      %3237 = vmatmul.mubr.bf16.gmra.mxu0 %v3049
      %v3238 = vpop.f32.mrf.mxu0
      %v3239 = vadd.f32 %v3075, %v3238
      %v3240 = vpop.f32.mrf.mxu0
      %v3241 = vpop.f32.mrf.mxu0
      %v3242 = vadd.f32 %v3075, %v3241
      %v3243 = vpop.f32.mrf.mxu0
      %3244 = vmatprep.mubr.bf16.mxu0 0
      %3245 = vmatmul.mubr.bf16.gmra.mxu0 %v3050
      %v3246 = vpop.f32.mrf.mxu0
      %v3247 = vadd.f32 %v3075, %v3246
      %v3248 = vpop.f32.mrf.mxu0
      %v3249 = vpop.f32.mrf.mxu0
      %v3250 = vadd.f32 %v3075, %v3249
      %v3251 = vpop.f32.mrf.mxu0
      %3252 = vmatprep.mubr.bf16.mxu0 0
      %3253 = vmatmul.mubr.bf16.gmra.mxu0 %v3051
      %v3254 = vpop.f32.mrf.mxu0
      %v3255 = vadd.f32 %v3075, %v3254
      %v3256 = vpop.f32.mrf.mxu0
      %v3257 = vpop.f32.mrf.mxu0
      %v3258 = vadd.f32 %v3075, %v3257
      %v3259 = vpop.f32.mrf.mxu0
      %3260 = vmatprep.mubr.bf16.mxu0 0
      %3261 = vmatmul.mubr.bf16.gmra.mxu0 %v3052
      %v3262 = vpop.f32.mrf.mxu0
      %v3263 = vadd.f32 %v3075, %v3262
      %v3264 = vpop.f32.mrf.mxu0
      %v3265 = vpop.f32.mrf.mxu0
      %v3266 = vadd.f32 %v3075, %v3265
      %v3267 = vpop.f32.mrf.mxu0
      %3268 = vmatprep.mubr.bf16.mxu0 0
      %3269 = vmatmul.mubr.bf16.gmra.mxu0 %v3053
      %v3270 = vpop.f32.mrf.mxu0
      %v3271 = vadd.f32 %v3075, %v3270
      %v3272 = vpop.f32.mrf.mxu0
      %v3273 = vpop.f32.mrf.mxu0
      %v3274 = vadd.f32 %v3075, %v3273
      %v3275 = vpop.f32.mrf.mxu0
      %3276 = vmatprep.mubr.bf16.mxu0 0
      %3277 = vmatmul.mubr.bf16.gmra.mxu0 %v3054
      %v3278 = vpop.f32.mrf.mxu0
      %v3279 = vadd.f32 %v3075, %v3278
      %v3280 = vpop.f32.mrf.mxu0
      %v3281 = vpop.f32.mrf.mxu0
      %v3282 = vadd.f32 %v3075, %v3281
      %v3283 = vpop.f32.mrf.mxu0
      %3284 = vdwg.mxu0
      %v3285 = vpack.c.bf16 %v3162, %v3159
      %v3286 = vpack.c.bf16 %v3170, %v3167
      %v3287 = vpack.c.bf16 %v3178, %v3175
      %v3288 = vpack.c.bf16 %v3186, %v3183
      %v3289 = vpack.c.bf16 %v3194, %v3191
      %v3290 = vpack.c.bf16 %v3202, %v3199
      %v3291 = vpack.c.bf16 %v3210, %v3207
      %v3292 = vpack.c.bf16 %v3218, %v3215
      %v3293 = vpack.c.bf16 %v3226, %v3223
      %v3294 = vpack.c.bf16 %v3234, %v3231
      %v3295 = vpack.c.bf16 %v3242, %v3239
      %v3296 = vpack.c.bf16 %v3250, %v3247
      %v3297 = vpack.c.bf16 %v3258, %v3255
      %v3298 = vpack.c.bf16 %v3266, %v3263
      %v3299 = vpack.c.bf16 %v3274, %v3271
      %v3300 = vpack.c.bf16 %v3282, %v3279
      %3301 = vmatprep.subr.bf16.mxu0 0
      %3302 = vmatpush1.bf16.msra.mxu0 %v3292
      %3303 = vmatprep.subr.bf16.mxu0 0
      %3304 = vmatpush1.bf16.msra.mxu0 %v3291
      %3305 = vmatprep.subr.bf16.mxu0 0
      %3306 = vmatpush1.bf16.msra.mxu0 %v3290
      %3307 = vmatprep.subr.bf16.mxu0 0
      %3308 = vmatpush1.bf16.msra.mxu0 %v3289
      %3309 = vmatprep.subr.bf16.mxu0 0
      %3310 = vmatpush1.bf16.msra.mxu0 %v3288
      %3311 = vmatprep.subr.bf16.mxu0 0
      %3312 = vmatpush1.bf16.msra.mxu0 %v3287
      %3313 = vmatprep.subr.bf16.mxu0 0
      %3314 = vmatpush1.bf16.msra.mxu0 %v3286
      %3315 = vmatprep.subr.bf16.mxu0 0
      %3316 = vmatpush1.bf16.msra.mxu0 %v3285
      %3317 = vmatprep.subr.bf16.mxu0 0
      %3318 = vmatpush2.bf16.msra.mxu0 %v3300
      %3319 = vmatprep.subr.bf16.mxu0 0
      %3320 = vmatpush2.bf16.msra.mxu0 %v3299
      %3321 = vmatprep.subr.bf16.mxu0 0
      %3322 = vmatpush2.bf16.msra.mxu0 %v3298
      %3323 = vmatprep.subr.bf16.mxu0 0
      %3324 = vmatpush2.bf16.msra.mxu0 %v3297
      %3325 = vmatprep.subr.bf16.mxu0 0
      %3326 = vmatpush2.bf16.msra.mxu0 %v3296
      %3327 = vmatprep.subr.bf16.mxu0 0
      %3328 = vmatpush2.bf16.msra.mxu0 %v3295
      %3329 = vmatprep.subr.bf16.mxu0 0
      %3330 = vmatpush2.bf16.msra.mxu0 %v3294
      %3331 = vmatprep.subr.bf16.mxu0 0
      %3332 = vmatpush2.bf16.msra.mxu0 %v3293
      %3333 = vmatprep.mubr.bf16.mxu0 %v2553
      %3334 = vmatmul.mubr.bf16.gmra.mxu0 %v2552
      %v3335 = vpop.f32.mrf.mxu0
      %v3336 = vadd.f32 0.0, %v3335
      %v3337 = vpop.f32.mrf.mxu0
      %v3338 = vpop.f32.mrf.mxu0
      %v3339 = vadd.f32 0.0, %v3338
      %v3340 = vpop.f32.mrf.mxu0
      %3341 = vmatprep.mubr.bf16.mxu0 %v2555
      %3342 = vmatmul.mubr.bf16.gmra.mxu0 %v2554
      %v3343 = vpop.f32.mrf.mxu0
      %v3344 = vadd.f32 0.0, %v3343
      %v3345 = vpop.f32.mrf.mxu0
      %v3346 = vpop.f32.mrf.mxu0
      %v3347 = vadd.f32 0.0, %v3346
      %v3348 = vpop.f32.mrf.mxu0
      %3349 = vmatprep.mubr.bf16.mxu0 %v2557
      %3350 = vmatmul.mubr.bf16.gmra.mxu0 %v2556
      %v3351 = vpop.f32.mrf.mxu0
      %v3352 = vadd.f32 0.0, %v3351
      %v3353 = vpop.f32.mrf.mxu0
      %v3354 = vpop.f32.mrf.mxu0
      %v3355 = vadd.f32 0.0, %v3354
      %v3356 = vpop.f32.mrf.mxu0
      %3357 = vmatprep.mubr.bf16.mxu0 %v2559
      %3358 = vmatmul.mubr.bf16.gmra.mxu0 %v2558
      %v3359 = vpop.f32.mrf.mxu0
      %v3360 = vadd.f32 0.0, %v3359
      %v3361 = vpop.f32.mrf.mxu0
      %v3362 = vpop.f32.mrf.mxu0
      %v3363 = vadd.f32 0.0, %v3362
      %v3364 = vpop.f32.mrf.mxu0
      %3365 = vmatprep.mubr.bf16.mxu0 %v2561
      %3366 = vmatmul.mubr.bf16.gmra.mxu0 %v2560
      %v3367 = vpop.f32.mrf.mxu0
      %v3368 = vadd.f32 0.0, %v3367
      %v3369 = vpop.f32.mrf.mxu0
      %v3370 = vpop.f32.mrf.mxu0
      %v3371 = vadd.f32 0.0, %v3370
      %v3372 = vpop.f32.mrf.mxu0
      %3373 = vmatprep.mubr.bf16.mxu0 %v2563
      %3374 = vmatmul.mubr.bf16.gmra.mxu0 %v2562
      %v3375 = vpop.f32.mrf.mxu0
      %v3376 = vadd.f32 0.0, %v3375
      %v3377 = vpop.f32.mrf.mxu0
      %v3378 = vpop.f32.mrf.mxu0
      %v3379 = vadd.f32 0.0, %v3378
      %v3380 = vpop.f32.mrf.mxu0
      %3381 = vmatprep.mubr.bf16.mxu0 %v2565
      %3382 = vmatmul.mubr.bf16.gmra.mxu0 %v2564
      %v3383 = vpop.f32.mrf.mxu0
      %v3384 = vadd.f32 0.0, %v3383
      %v3385 = vpop.f32.mrf.mxu0
      %v3386 = vpop.f32.mrf.mxu0
      %v3387 = vadd.f32 0.0, %v3386
      %v3388 = vpop.f32.mrf.mxu0
      %3389 = vmatprep.mubr.bf16.mxu0 %v2567
      %3390 = vmatmul.mubr.bf16.gmra.mxu0 %v2566
      %v3391 = vpop.f32.mrf.mxu0
      %v3392 = vadd.f32 0.0, %v3391
      %v3393 = vpop.f32.mrf.mxu0
      %v3394 = vpop.f32.mrf.mxu0
      %v3395 = vadd.f32 0.0, %v3394
      %v3396 = vpop.f32.mrf.mxu0
      %3397 = vmatprep.mubr.bf16.mxu0 %v2569
      %3398 = vmatmul.mubr.bf16.gmra.mxu0 %v2568
      %v3399 = vpop.f32.mrf.mxu0
      %v3400 = vadd.f32 0.0, %v3399
      %v3401 = vpop.f32.mrf.mxu0
      %v3402 = vpop.f32.mrf.mxu0
      %v3403 = vadd.f32 0.0, %v3402
      %v3404 = vpop.f32.mrf.mxu0
      %3405 = vmatprep.mubr.bf16.mxu0 %v2571
      %3406 = vmatmul.mubr.bf16.gmra.mxu0 %v2570
      %v3407 = vpop.f32.mrf.mxu0
      %v3408 = vadd.f32 0.0, %v3407
      %v3409 = vpop.f32.mrf.mxu0
      %v3410 = vpop.f32.mrf.mxu0
      %v3411 = vadd.f32 0.0, %v3410
      %v3412 = vpop.f32.mrf.mxu0
      %3413 = vmatprep.mubr.bf16.mxu0 %v2573
      %3414 = vmatmul.mubr.bf16.gmra.mxu0 %v2572
      %v3415 = vpop.f32.mrf.mxu0
      %v3416 = vadd.f32 0.0, %v3415
      %v3417 = vpop.f32.mrf.mxu0
      %v3418 = vpop.f32.mrf.mxu0
      %v3419 = vadd.f32 0.0, %v3418
      %v3420 = vpop.f32.mrf.mxu0
      %3421 = vmatprep.mubr.bf16.mxu0 %v2575
      %3422 = vmatmul.mubr.bf16.gmra.mxu0 %v2574
      %v3423 = vpop.f32.mrf.mxu0
      %v3424 = vadd.f32 0.0, %v3423
      %v3425 = vpop.f32.mrf.mxu0
      %v3426 = vpop.f32.mrf.mxu0
      %v3427 = vadd.f32 0.0, %v3426
      %v3428 = vpop.f32.mrf.mxu0
      %3429 = vmatprep.mubr.bf16.mxu0 %v2577
      %3430 = vmatmul.mubr.bf16.gmra.mxu0 %v2576
      %v3431 = vpop.f32.mrf.mxu0
      %v3432 = vadd.f32 0.0, %v3431
      %v3433 = vpop.f32.mrf.mxu0
      %v3434 = vpop.f32.mrf.mxu0
      %v3435 = vadd.f32 0.0, %v3434
      %v3436 = vpop.f32.mrf.mxu0
      %3437 = vmatprep.mubr.bf16.mxu0 %v2579
      %3438 = vmatmul.mubr.bf16.gmra.mxu0 %v2578
      %v3439 = vpop.f32.mrf.mxu0
      %v3440 = vadd.f32 0.0, %v3439
      %v3441 = vpop.f32.mrf.mxu0
      %v3442 = vpop.f32.mrf.mxu0
      %v3443 = vadd.f32 0.0, %v3442
      %v3444 = vpop.f32.mrf.mxu0
      %3445 = vmatprep.mubr.bf16.mxu0 %v2581
      %3446 = vmatmul.mubr.bf16.gmra.mxu0 %v2580
      %v3447 = vpop.f32.mrf.mxu0
      %v3448 = vadd.f32 0.0, %v3447
      %v3449 = vpop.f32.mrf.mxu0
      %v3450 = vpop.f32.mrf.mxu0
      %v3451 = vadd.f32 0.0, %v3450
      %v3452 = vpop.f32.mrf.mxu0
      %3453 = vmatprep.mubr.bf16.mxu0 %v2583
      %3454 = vmatmul.mubr.bf16.gmra.mxu0 %v2582
      %v3455 = vpop.f32.mrf.mxu0
      %v3456 = vadd.f32 0.0, %v3455
      %v3457 = vpop.f32.mrf.mxu0
      %v3458 = vpop.f32.mrf.mxu0
      %v3459 = vadd.f32 0.0, %v3458
      %v3460 = vpop.f32.mrf.mxu0
      %3461 = vdwg.mxu0
      %v3462 = vpack.c.bf16 %v3339, %v3336
      %v3463 = vpack.c.bf16 %v3347, %v3344
      %v3464 = vpack.c.bf16 %v3355, %v3352
      %v3465 = vpack.c.bf16 %v3363, %v3360
      %v3466 = vpack.c.bf16 %v3371, %v3368
      %v3467 = vpack.c.bf16 %v3379, %v3376
      %v3468 = vpack.c.bf16 %v3387, %v3384
      %v3469 = vpack.c.bf16 %v3395, %v3392
      %v3470 = vpack.c.bf16 %v3403, %v3400
      %v3471 = vpack.c.bf16 %v3411, %v3408
      %v3472 = vpack.c.bf16 %v3419, %v3416
      %v3473 = vpack.c.bf16 %v3427, %v3424
      %v3474 = vpack.c.bf16 %v3435, %v3432
      %v3475 = vpack.c.bf16 %v3443, %v3440
      %v3476 = vpack.c.bf16 %v3451, %v3448
      %v3477 = vpack.c.bf16 %v3459, %v3456
      %s3478 = scalar_lea.vmem %s4, 64
      %v3479 = vld [vmem:[%s3478] sm:$0xf]
      %v3480 = vld [vmem:[%s3478 + $0x4] sm:$0xf]
      %v3481 = vld [vmem:[%s3478 + $0x8] sm:$0xf]
      %v3482 = vld [vmem:[%s3478 + $0xc] sm:$0xf]
      %v3483 = vld [vmem:[%s3478 + $0x10] sm:$0xf]
      %v3484 = vld [vmem:[%s3478 + $0x14] sm:$0xf]
      %v3485 = vld [vmem:[%s3478 + $0x18] sm:$0xf]
      %v3486 = vld [vmem:[%s3478 + $0x1c] sm:$0xf]
      %v3487 = vld [vmem:[%s3478 + $0x20] sm:$0xf]
      %v3488 = vld [vmem:[%s3478 + $0x24] sm:$0xf]
      %v3489 = vld [vmem:[%s3478 + $0x28] sm:$0xf]
      %v3490 = vld [vmem:[%s3478 + $0x2c] sm:$0xf]
      %v3491 = vld [vmem:[%s3478 + $0x30] sm:$0xf]
      %v3492 = vld [vmem:[%s3478 + $0x34] sm:$0xf]
      %v3493 = vld [vmem:[%s3478 + $0x38] sm:$0xf]
      %v3494 = vld [vmem:[%s3478 + $0x3c] sm:$0xf]
      %v3495 = vld [vmem:[%s9 + $0x1] sm:$0x1]
      %v3496 = vlaneseq
      %v3497 = vshrl.u32 %v3496, 7
      %v3498 = vsub.s32 0, %v3497
      %v3499 = vrot.slane %v3495, %v3498
      %v3516 = vunpack.c.l.b16 %v3479
      %v3517 = vunpack.c.l.b16 %v3480
      %v3518 = vunpack.c.l.b16 %v3481
      %v3519 = vunpack.c.l.b16 %v3482
      %v3520 = vunpack.c.l.b16 %v3483
      %v3521 = vunpack.c.l.b16 %v3484
      %v3522 = vunpack.c.l.b16 %v3485
      %v3523 = vunpack.c.l.b16 %v3486
      %v3524 = vunpack.c.l.b16 %v3487
      %v3525 = vunpack.c.l.b16 %v3488
      %v3526 = vunpack.c.l.b16 %v3489
      %v3527 = vunpack.c.l.b16 %v3490
      %v3528 = vunpack.c.l.b16 %v3491
      %v3529 = vunpack.c.l.b16 %v3492
      %v3530 = vunpack.c.l.b16 %v3493
      %v3531 = vunpack.c.l.b16 %v3494
      %v3532 = vpack.c.b16 %v3517, %v3516
      %v3533 = vpack.c.b16 %v3519, %v3518
      %v3534 = vpack.c.b16 %v3521, %v3520
      %v3535 = vpack.c.b16 %v3523, %v3522
      %v3536 = vpack.c.b16 %v3525, %v3524
      %v3537 = vpack.c.b16 %v3527, %v3526
      %v3538 = vpack.c.b16 %v3529, %v3528
      %v3539 = vpack.c.b16 %v3531, %v3530
      %3548 = vmatprep.subr.bf16.mxu0 0
      %3549 = vmatpush1.bf16.msra.mxu0 %v3539
      %3550 = vmatprep.subr.bf16.mxu0 0
      %3551 = vmatpush1.bf16.msra.mxu0 %v3538
      %3552 = vmatprep.subr.bf16.mxu0 0
      %3553 = vmatpush1.bf16.msra.mxu0 %v3537
      %3554 = vmatprep.subr.bf16.mxu0 0
      %3555 = vmatpush1.bf16.msra.mxu0 %v3536
      %3556 = vmatprep.subr.bf16.mxu0 0
      %3557 = vmatpush1.bf16.msra.mxu0 %v3535
      %3558 = vmatprep.subr.bf16.mxu0 0
      %3559 = vmatpush1.bf16.msra.mxu0 %v3534
      %3560 = vmatprep.subr.bf16.mxu0 0
      %3561 = vmatpush1.bf16.msra.mxu0 %v3533
      %3562 = vmatprep.subr.bf16.mxu0 0
      %3563 = vmatpush1.bf16.msra.mxu0 %v3532
      %3564 = vmatprep.subr.bf16.mxu0 0
      %3565 = vmatpush2.bf16.msra.mxu0 0
      %3566 = vmatprep.subr.bf16.mxu0 0
      %3567 = vmatpush2.bf16.msra.mxu0 0
      %3568 = vmatprep.subr.bf16.mxu0 0
      %3569 = vmatpush2.bf16.msra.mxu0 0
      %3570 = vmatprep.subr.bf16.mxu0 0
      %3571 = vmatpush2.bf16.msra.mxu0 0
      %3572 = vmatprep.subr.bf16.mxu0 0
      %3573 = vmatpush2.bf16.msra.mxu0 0
      %3574 = vmatprep.subr.bf16.mxu0 0
      %3575 = vmatpush2.bf16.msra.mxu0 0
      %3576 = vmatprep.subr.bf16.mxu0 0
      %3577 = vmatpush2.bf16.msra.mxu0 0
      %3578 = vmatprep.subr.bf16.mxu0 0
      %3579 = vmatpush2.bf16.msra.mxu0 0
      %3580 = vmatprep.mubr.bf16.mxu0 0
      %3581 = vmatmul.mubr.bf16.gmra.mxu0 %v3462
      %v3582 = vpop.f32.mrf.mxu0
      %v3583 = vadd.f32 %v3499, %v3582
      %v3584 = vpop.f32.mrf.mxu0
      %v3585 = vpop.f32.mrf.mxu0
      %v3586 = vadd.f32 %v3499, %v3585
      %v3587 = vpop.f32.mrf.mxu0
      %3588 = vmatprep.mubr.bf16.mxu0 0
      %3589 = vmatmul.mubr.bf16.gmra.mxu0 %v3463
      %v3590 = vpop.f32.mrf.mxu0
      %v3591 = vadd.f32 %v3499, %v3590
      %v3592 = vpop.f32.mrf.mxu0
      %v3593 = vpop.f32.mrf.mxu0
      %v3594 = vadd.f32 %v3499, %v3593
      %v3595 = vpop.f32.mrf.mxu0
      %3596 = vmatprep.mubr.bf16.mxu0 0
      %3597 = vmatmul.mubr.bf16.gmra.mxu0 %v3464
      %v3598 = vpop.f32.mrf.mxu0
      %v3599 = vadd.f32 %v3499, %v3598
      %v3600 = vpop.f32.mrf.mxu0
      %v3601 = vpop.f32.mrf.mxu0
      %v3602 = vadd.f32 %v3499, %v3601
      %v3603 = vpop.f32.mrf.mxu0
      %3604 = vmatprep.mubr.bf16.mxu0 0
      %3605 = vmatmul.mubr.bf16.gmra.mxu0 %v3465
      %v3606 = vpop.f32.mrf.mxu0
      %v3607 = vadd.f32 %v3499, %v3606
      %v3608 = vpop.f32.mrf.mxu0
      %v3609 = vpop.f32.mrf.mxu0
      %v3610 = vadd.f32 %v3499, %v3609
      %v3611 = vpop.f32.mrf.mxu0
      %3612 = vmatprep.mubr.bf16.mxu0 0
      %3613 = vmatmul.mubr.bf16.gmra.mxu0 %v3466
      %v3614 = vpop.f32.mrf.mxu0
      %v3615 = vadd.f32 %v3499, %v3614
      %v3616 = vpop.f32.mrf.mxu0
      %v3617 = vpop.f32.mrf.mxu0
      %v3618 = vadd.f32 %v3499, %v3617
      %v3619 = vpop.f32.mrf.mxu0
      %3620 = vmatprep.mubr.bf16.mxu0 0
      %3621 = vmatmul.mubr.bf16.gmra.mxu0 %v3467
      %v3622 = vpop.f32.mrf.mxu0
      %v3623 = vadd.f32 %v3499, %v3622
      %v3624 = vpop.f32.mrf.mxu0
      %v3625 = vpop.f32.mrf.mxu0
      %v3626 = vadd.f32 %v3499, %v3625
      %v3627 = vpop.f32.mrf.mxu0
      %3628 = vmatprep.mubr.bf16.mxu0 0
      %3629 = vmatmul.mubr.bf16.gmra.mxu0 %v3468
      %v3630 = vpop.f32.mrf.mxu0
      %v3631 = vadd.f32 %v3499, %v3630
      %v3632 = vpop.f32.mrf.mxu0
      %v3633 = vpop.f32.mrf.mxu0
      %v3634 = vadd.f32 %v3499, %v3633
      %v3635 = vpop.f32.mrf.mxu0
      %3636 = vmatprep.mubr.bf16.mxu0 0
      %3637 = vmatmul.mubr.bf16.gmra.mxu0 %v3469
      %v3638 = vpop.f32.mrf.mxu0
      %v3639 = vadd.f32 %v3499, %v3638
      %v3640 = vpop.f32.mrf.mxu0
      %v3641 = vpop.f32.mrf.mxu0
      %v3642 = vadd.f32 %v3499, %v3641
      %v3643 = vpop.f32.mrf.mxu0
      %3644 = vmatprep.mubr.bf16.mxu0 0
      %3645 = vmatmul.mubr.bf16.gmra.mxu0 %v3470
      %v3646 = vpop.f32.mrf.mxu0
      %v3647 = vadd.f32 %v3499, %v3646
      %v3648 = vpop.f32.mrf.mxu0
      %v3649 = vpop.f32.mrf.mxu0
      %v3650 = vadd.f32 %v3499, %v3649
      %v3651 = vpop.f32.mrf.mxu0
      %3652 = vmatprep.mubr.bf16.mxu0 0
      %3653 = vmatmul.mubr.bf16.gmra.mxu0 %v3471
      %v3654 = vpop.f32.mrf.mxu0
      %v3655 = vadd.f32 %v3499, %v3654
      %v3656 = vpop.f32.mrf.mxu0
      %v3657 = vpop.f32.mrf.mxu0
      %v3658 = vadd.f32 %v3499, %v3657
      %v3659 = vpop.f32.mrf.mxu0
      %3660 = vmatprep.mubr.bf16.mxu0 0
      %3661 = vmatmul.mubr.bf16.gmra.mxu0 %v3472
      %v3662 = vpop.f32.mrf.mxu0
      %v3663 = vadd.f32 %v3499, %v3662
      %v3664 = vpop.f32.mrf.mxu0
      %v3665 = vpop.f32.mrf.mxu0
      %v3666 = vadd.f32 %v3499, %v3665
      %v3667 = vpop.f32.mrf.mxu0
      %3668 = vmatprep.mubr.bf16.mxu0 0
      %3669 = vmatmul.mubr.bf16.gmra.mxu0 %v3473
      %v3670 = vpop.f32.mrf.mxu0
      %v3671 = vadd.f32 %v3499, %v3670
      %v3672 = vpop.f32.mrf.mxu0
      %v3673 = vpop.f32.mrf.mxu0
      %v3674 = vadd.f32 %v3499, %v3673
      %v3675 = vpop.f32.mrf.mxu0
      %3676 = vmatprep.mubr.bf16.mxu0 0
      %3677 = vmatmul.mubr.bf16.gmra.mxu0 %v3474
      %v3678 = vpop.f32.mrf.mxu0
      %v3679 = vadd.f32 %v3499, %v3678
      %v3680 = vpop.f32.mrf.mxu0
      %v3681 = vpop.f32.mrf.mxu0
      %v3682 = vadd.f32 %v3499, %v3681
      %v3683 = vpop.f32.mrf.mxu0
      %3684 = vmatprep.mubr.bf16.mxu0 0
      %3685 = vmatmul.mubr.bf16.gmra.mxu0 %v3475
      %v3686 = vpop.f32.mrf.mxu0
      %v3687 = vadd.f32 %v3499, %v3686
      %v3688 = vpop.f32.mrf.mxu0
      %v3689 = vpop.f32.mrf.mxu0
      %v3690 = vadd.f32 %v3499, %v3689
      %v3691 = vpop.f32.mrf.mxu0
      %3692 = vmatprep.mubr.bf16.mxu0 0
      %3693 = vmatmul.mubr.bf16.gmra.mxu0 %v3476
      %v3694 = vpop.f32.mrf.mxu0
      %v3695 = vadd.f32 %v3499, %v3694
      %v3696 = vpop.f32.mrf.mxu0
      %v3697 = vpop.f32.mrf.mxu0
      %v3698 = vadd.f32 %v3499, %v3697
      %v3699 = vpop.f32.mrf.mxu0
      %3700 = vmatprep.mubr.bf16.mxu0 0
      %3701 = vmatmul.mubr.bf16.gmra.mxu0 %v3477
      %v3702 = vpop.f32.mrf.mxu0
      %v3703 = vadd.f32 %v3499, %v3702
      %v3704 = vpop.f32.mrf.mxu0
      %v3705 = vpop.f32.mrf.mxu0
      %v3706 = vadd.f32 %v3499, %v3705
      %v3707 = vpop.f32.mrf.mxu0
      %3708 = vdwg.mxu0
      %v3709 = vmax.f32 %v3583, 0.0
      %v3710 = vmax.f32 %v3586, 0.0
      %v3711 = vmax.f32 %v3591, 0.0
      %v3712 = vmax.f32 %v3594, 0.0
      %v3713 = vmax.f32 %v3599, 0.0
      %v3714 = vmax.f32 %v3602, 0.0
      %v3715 = vmax.f32 %v3607, 0.0
      %v3716 = vmax.f32 %v3610, 0.0
      %v3717 = vmax.f32 %v3615, 0.0
      %v3718 = vmax.f32 %v3618, 0.0
      %v3719 = vmax.f32 %v3623, 0.0
      %v3720 = vmax.f32 %v3626, 0.0
      %v3721 = vmax.f32 %v3631, 0.0
      %v3722 = vmax.f32 %v3634, 0.0
      %v3723 = vmax.f32 %v3639, 0.0
      %v3724 = vmax.f32 %v3642, 0.0
      %v3725 = vmax.f32 %v3647, 0.0
      %v3726 = vmax.f32 %v3650, 0.0
      %v3727 = vmax.f32 %v3655, 0.0
      %v3728 = vmax.f32 %v3658, 0.0
      %v3729 = vmax.f32 %v3663, 0.0
      %v3730 = vmax.f32 %v3666, 0.0
      %v3731 = vmax.f32 %v3671, 0.0
      %v3732 = vmax.f32 %v3674, 0.0
      %v3733 = vmax.f32 %v3679, 0.0
      %v3734 = vmax.f32 %v3682, 0.0
      %v3735 = vmax.f32 %v3687, 0.0
      %v3736 = vmax.f32 %v3690, 0.0
      %v3737 = vmax.f32 %v3695, 0.0
      %v3738 = vmax.f32 %v3698, 0.0
      %v3739 = vmax.f32 %v3703, 0.0
      %v3740 = vmax.f32 %v3706, 0.0
      %v3741 = vpack.c.bf16 %v3710, %v3709
      %v3742 = vpack.c.bf16 %v3712, %v3711
      %v3743 = vpack.c.bf16 %v3714, %v3713
      %v3744 = vpack.c.bf16 %v3716, %v3715
      %v3745 = vpack.c.bf16 %v3718, %v3717
      %v3746 = vpack.c.bf16 %v3720, %v3719
      %v3747 = vpack.c.bf16 %v3722, %v3721
      %v3748 = vpack.c.bf16 %v3724, %v3723
      %v3749 = vpack.c.bf16 %v3726, %v3725
      %v3750 = vpack.c.bf16 %v3728, %v3727
      %v3751 = vpack.c.bf16 %v3730, %v3729
      %v3752 = vpack.c.bf16 %v3732, %v3731
      %v3753 = vpack.c.bf16 %v3734, %v3733
      %v3754 = vpack.c.bf16 %v3736, %v3735
      %v3755 = vpack.c.bf16 %v3738, %v3737
      %v3756 = vpack.c.bf16 %v3740, %v3739
      %s3757 = scalar_lea.vmem %s5, 64
      %v3758 = vld [vmem:[%s3757] sm:$0xf]
      %v3759 = vld [vmem:[%s3757 + $0x4] sm:$0xf]
      %v3760 = vld [vmem:[%s3757 + $0x8] sm:$0xf]
      %v3761 = vld [vmem:[%s3757 + $0xc] sm:$0xf]
      %v3762 = vld [vmem:[%s3757 + $0x10] sm:$0xf]
      %v3763 = vld [vmem:[%s3757 + $0x14] sm:$0xf]
      %v3764 = vld [vmem:[%s3757 + $0x18] sm:$0xf]
      %v3765 = vld [vmem:[%s3757 + $0x1c] sm:$0xf]
      %v3766 = vld [vmem:[%s3757 + $0x20] sm:$0xf]
      %v3767 = vld [vmem:[%s3757 + $0x24] sm:$0xf]
      %v3768 = vld [vmem:[%s3757 + $0x28] sm:$0xf]
      %v3769 = vld [vmem:[%s3757 + $0x2c] sm:$0xf]
      %v3770 = vld [vmem:[%s3757 + $0x30] sm:$0xf]
      %v3771 = vld [vmem:[%s3757 + $0x34] sm:$0xf]
      %v3772 = vld [vmem:[%s3757 + $0x38] sm:$0xf]
      %v3773 = vld [vmem:[%s3757 + $0x3c] sm:$0xf]
      %v3774 = vld [vmem:[%s9 + $0x4] sm:$0x1]
      %v3775 = vlaneseq
      %v3776 = vshrl.u32 %v3775, 7
      %v3777 = vsub.s32 0, %v3776
      %v3778 = vrot.slane %v3774, %v3777
      %v3795 = vunpack.c.l.b16 %v3758
      %v3796 = vunpack.c.l.b16 %v3759
      %v3797 = vunpack.c.l.b16 %v3760
      %v3798 = vunpack.c.l.b16 %v3761
      %v3799 = vunpack.c.l.b16 %v3762
      %v3800 = vunpack.c.l.b16 %v3763
      %v3801 = vunpack.c.l.b16 %v3764
      %v3802 = vunpack.c.l.b16 %v3765
      %v3803 = vunpack.c.l.b16 %v3766
      %v3804 = vunpack.c.l.b16 %v3767
      %v3805 = vunpack.c.l.b16 %v3768
      %v3806 = vunpack.c.l.b16 %v3769
      %v3807 = vunpack.c.l.b16 %v3770
      %v3808 = vunpack.c.l.b16 %v3771
      %v3809 = vunpack.c.l.b16 %v3772
      %v3810 = vunpack.c.l.b16 %v3773
      %v3811 = vpack.c.b16 %v3796, %v3795
      %v3812 = vpack.c.b16 %v3798, %v3797
      %v3813 = vpack.c.b16 %v3800, %v3799
      %v3814 = vpack.c.b16 %v3802, %v3801
      %v3815 = vpack.c.b16 %v3804, %v3803
      %v3816 = vpack.c.b16 %v3806, %v3805
      %v3817 = vpack.c.b16 %v3808, %v3807
      %v3818 = vpack.c.b16 %v3810, %v3809
      %3827 = vmatprep.subr.bf16.mxu0 0
      %3828 = vmatpush1.bf16.msra.mxu0 %v3818
      %3829 = vmatprep.subr.bf16.mxu0 0
      %3830 = vmatpush1.bf16.msra.mxu0 %v3817
      %3831 = vmatprep.subr.bf16.mxu0 0
      %3832 = vmatpush1.bf16.msra.mxu0 %v3816
      %3833 = vmatprep.subr.bf16.mxu0 0
      %3834 = vmatpush1.bf16.msra.mxu0 %v3815
      %3835 = vmatprep.subr.bf16.mxu0 0
      %3836 = vmatpush1.bf16.msra.mxu0 %v3814
      %3837 = vmatprep.subr.bf16.mxu0 0
      %3838 = vmatpush1.bf16.msra.mxu0 %v3813
      %3839 = vmatprep.subr.bf16.mxu0 0
      %3840 = vmatpush1.bf16.msra.mxu0 %v3812
      %3841 = vmatprep.subr.bf16.mxu0 0
      %3842 = vmatpush1.bf16.msra.mxu0 %v3811
      %3843 = vmatprep.subr.bf16.mxu0 0
      %3844 = vmatpush2.bf16.msra.mxu0 0
      %3845 = vmatprep.subr.bf16.mxu0 0
      %3846 = vmatpush2.bf16.msra.mxu0 0
      %3847 = vmatprep.subr.bf16.mxu0 0
      %3848 = vmatpush2.bf16.msra.mxu0 0
      %3849 = vmatprep.subr.bf16.mxu0 0
      %3850 = vmatpush2.bf16.msra.mxu0 0
      %3851 = vmatprep.subr.bf16.mxu0 0
      %3852 = vmatpush2.bf16.msra.mxu0 0
      %3853 = vmatprep.subr.bf16.mxu0 0
      %3854 = vmatpush2.bf16.msra.mxu0 0
      %3855 = vmatprep.subr.bf16.mxu0 0
      %3856 = vmatpush2.bf16.msra.mxu0 0
      %3857 = vmatprep.subr.bf16.mxu0 0
      %3858 = vmatpush2.bf16.msra.mxu0 0
      %3859 = vmatprep.mubr.bf16.mxu0 0
      %3860 = vmatmul.mubr.bf16.gmra.mxu0 %v3741
      %v3861 = vpop.f32.mrf.mxu0
      %v3862 = vadd.f32 %v3778, %v3861
      %v3863 = vpop.f32.mrf.mxu0
      %v3864 = vpop.f32.mrf.mxu0
      %v3865 = vadd.f32 %v3778, %v3864
      %v3866 = vpop.f32.mrf.mxu0
      %3867 = vmatprep.mubr.bf16.mxu0 0
      %3868 = vmatmul.mubr.bf16.gmra.mxu0 %v3742
      %v3869 = vpop.f32.mrf.mxu0
      %v3870 = vadd.f32 %v3778, %v3869
      %v3871 = vpop.f32.mrf.mxu0
      %v3872 = vpop.f32.mrf.mxu0
      %v3873 = vadd.f32 %v3778, %v3872
      %v3874 = vpop.f32.mrf.mxu0
      %3875 = vmatprep.mubr.bf16.mxu0 0
      %3876 = vmatmul.mubr.bf16.gmra.mxu0 %v3743
      %v3877 = vpop.f32.mrf.mxu0
      %v3878 = vadd.f32 %v3778, %v3877
      %v3879 = vpop.f32.mrf.mxu0
      %v3880 = vpop.f32.mrf.mxu0
      %v3881 = vadd.f32 %v3778, %v3880
      %v3882 = vpop.f32.mrf.mxu0
      %3883 = vmatprep.mubr.bf16.mxu0 0
      %3884 = vmatmul.mubr.bf16.gmra.mxu0 %v3744
      %v3885 = vpop.f32.mrf.mxu0
      %v3886 = vadd.f32 %v3778, %v3885
      %v3887 = vpop.f32.mrf.mxu0
      %v3888 = vpop.f32.mrf.mxu0
      %v3889 = vadd.f32 %v3778, %v3888
      %v3890 = vpop.f32.mrf.mxu0
      %3891 = vmatprep.mubr.bf16.mxu0 0
      %3892 = vmatmul.mubr.bf16.gmra.mxu0 %v3745
      %v3893 = vpop.f32.mrf.mxu0
      %v3894 = vadd.f32 %v3778, %v3893
      %v3895 = vpop.f32.mrf.mxu0
      %v3896 = vpop.f32.mrf.mxu0
      %v3897 = vadd.f32 %v3778, %v3896
      %v3898 = vpop.f32.mrf.mxu0
      %3899 = vmatprep.mubr.bf16.mxu0 0
      %3900 = vmatmul.mubr.bf16.gmra.mxu0 %v3746
      %v3901 = vpop.f32.mrf.mxu0
      %v3902 = vadd.f32 %v3778, %v3901
      %v3903 = vpop.f32.mrf.mxu0
      %v3904 = vpop.f32.mrf.mxu0
      %v3905 = vadd.f32 %v3778, %v3904
      %v3906 = vpop.f32.mrf.mxu0
      %3907 = vmatprep.mubr.bf16.mxu0 0
      %3908 = vmatmul.mubr.bf16.gmra.mxu0 %v3747
      %v3909 = vpop.f32.mrf.mxu0
      %v3910 = vadd.f32 %v3778, %v3909
      %v3911 = vpop.f32.mrf.mxu0
      %v3912 = vpop.f32.mrf.mxu0
      %v3913 = vadd.f32 %v3778, %v3912
      %v3914 = vpop.f32.mrf.mxu0
      %3915 = vmatprep.mubr.bf16.mxu0 0
      %3916 = vmatmul.mubr.bf16.gmra.mxu0 %v3748
      %v3917 = vpop.f32.mrf.mxu0
      %v3918 = vadd.f32 %v3778, %v3917
      %v3919 = vpop.f32.mrf.mxu0
      %v3920 = vpop.f32.mrf.mxu0
      %v3921 = vadd.f32 %v3778, %v3920
      %v3922 = vpop.f32.mrf.mxu0
      %3923 = vmatprep.mubr.bf16.mxu0 0
      %3924 = vmatmul.mubr.bf16.gmra.mxu0 %v3749
      %v3925 = vpop.f32.mrf.mxu0
      %v3926 = vadd.f32 %v3778, %v3925
      %v3927 = vpop.f32.mrf.mxu0
      %v3928 = vpop.f32.mrf.mxu0
      %v3929 = vadd.f32 %v3778, %v3928
      %v3930 = vpop.f32.mrf.mxu0
      %3931 = vmatprep.mubr.bf16.mxu0 0
      %3932 = vmatmul.mubr.bf16.gmra.mxu0 %v3750
      %v3933 = vpop.f32.mrf.mxu0
      %v3934 = vadd.f32 %v3778, %v3933
      %v3935 = vpop.f32.mrf.mxu0
      %v3936 = vpop.f32.mrf.mxu0
      %v3937 = vadd.f32 %v3778, %v3936
      %v3938 = vpop.f32.mrf.mxu0
      %3939 = vmatprep.mubr.bf16.mxu0 0
      %3940 = vmatmul.mubr.bf16.gmra.mxu0 %v3751
      %v3941 = vpop.f32.mrf.mxu0
      %v3942 = vadd.f32 %v3778, %v3941
      %v3943 = vpop.f32.mrf.mxu0
      %v3944 = vpop.f32.mrf.mxu0
      %v3945 = vadd.f32 %v3778, %v3944
      %v3946 = vpop.f32.mrf.mxu0
      %3947 = vmatprep.mubr.bf16.mxu0 0
      %3948 = vmatmul.mubr.bf16.gmra.mxu0 %v3752
      %v3949 = vpop.f32.mrf.mxu0
      %v3950 = vadd.f32 %v3778, %v3949
      %v3951 = vpop.f32.mrf.mxu0
      %v3952 = vpop.f32.mrf.mxu0
      %v3953 = vadd.f32 %v3778, %v3952
      %v3954 = vpop.f32.mrf.mxu0
      %3955 = vmatprep.mubr.bf16.mxu0 0
      %3956 = vmatmul.mubr.bf16.gmra.mxu0 %v3753
      %v3957 = vpop.f32.mrf.mxu0
      %v3958 = vadd.f32 %v3778, %v3957
      %v3959 = vpop.f32.mrf.mxu0
      %v3960 = vpop.f32.mrf.mxu0
      %v3961 = vadd.f32 %v3778, %v3960
      %v3962 = vpop.f32.mrf.mxu0
      %3963 = vmatprep.mubr.bf16.mxu0 0
      %3964 = vmatmul.mubr.bf16.gmra.mxu0 %v3754
      %v3965 = vpop.f32.mrf.mxu0
      %v3966 = vadd.f32 %v3778, %v3965
      %v3967 = vpop.f32.mrf.mxu0
      %v3968 = vpop.f32.mrf.mxu0
      %v3969 = vadd.f32 %v3778, %v3968
      %v3970 = vpop.f32.mrf.mxu0
      %3971 = vmatprep.mubr.bf16.mxu0 0
      %3972 = vmatmul.mubr.bf16.gmra.mxu0 %v3755
      %v3973 = vpop.f32.mrf.mxu0
      %v3974 = vadd.f32 %v3778, %v3973
      %v3975 = vpop.f32.mrf.mxu0
      %v3976 = vpop.f32.mrf.mxu0
      %v3977 = vadd.f32 %v3778, %v3976
      %v3978 = vpop.f32.mrf.mxu0
      %3979 = vmatprep.mubr.bf16.mxu0 0
      %3980 = vmatmul.mubr.bf16.gmra.mxu0 %v3756
      %v3981 = vpop.f32.mrf.mxu0
      %v3982 = vadd.f32 %v3778, %v3981
      %v3983 = vpop.f32.mrf.mxu0
      %v3984 = vpop.f32.mrf.mxu0
      %v3985 = vadd.f32 %v3778, %v3984
      %v3986 = vpop.f32.mrf.mxu0
      %3987 = vdwg.mxu0
      %v3988 = vpack.c.bf16 %v3865, %v3862
      %v3989 = vpack.c.bf16 %v3873, %v3870
      %v3990 = vpack.c.bf16 %v3881, %v3878
      %v3991 = vpack.c.bf16 %v3889, %v3886
      %v3992 = vpack.c.bf16 %v3897, %v3894
      %v3993 = vpack.c.bf16 %v3905, %v3902
      %v3994 = vpack.c.bf16 %v3913, %v3910
      %v3995 = vpack.c.bf16 %v3921, %v3918
      %v3996 = vpack.c.bf16 %v3929, %v3926
      %v3997 = vpack.c.bf16 %v3937, %v3934
      %v3998 = vpack.c.bf16 %v3945, %v3942
      %v3999 = vpack.c.bf16 %v3953, %v3950
      %v4000 = vpack.c.bf16 %v3961, %v3958
      %v4001 = vpack.c.bf16 %v3969, %v3966
      %v4002 = vpack.c.bf16 %v3977, %v3974
      %v4003 = vpack.c.bf16 %v3985, %v3982
      %4004 = vmatprep.subr.bf16.mxu0 0
      %4005 = vmatpush1.bf16.msra.mxu0 %v3995
      %4006 = vmatprep.subr.bf16.mxu0 0
      %4007 = vmatpush1.bf16.msra.mxu0 %v3994
      %4008 = vmatprep.subr.bf16.mxu0 0
      %4009 = vmatpush1.bf16.msra.mxu0 %v3993
      %4010 = vmatprep.subr.bf16.mxu0 0
      %4011 = vmatpush1.bf16.msra.mxu0 %v3992
      %4012 = vmatprep.subr.bf16.mxu0 0
      %4013 = vmatpush1.bf16.msra.mxu0 %v3991
      %4014 = vmatprep.subr.bf16.mxu0 0
      %4015 = vmatpush1.bf16.msra.mxu0 %v3990
      %4016 = vmatprep.subr.bf16.mxu0 0
      %4017 = vmatpush1.bf16.msra.mxu0 %v3989
      %4018 = vmatprep.subr.bf16.mxu0 0
      %4019 = vmatpush1.bf16.msra.mxu0 %v3988
      %4020 = vmatprep.subr.bf16.mxu0 0
      %4021 = vmatpush2.bf16.msra.mxu0 %v4003
      %4022 = vmatprep.subr.bf16.mxu0 0
      %4023 = vmatpush2.bf16.msra.mxu0 %v4002
      %4024 = vmatprep.subr.bf16.mxu0 0
      %4025 = vmatpush2.bf16.msra.mxu0 %v4001
      %4026 = vmatprep.subr.bf16.mxu0 0
      %4027 = vmatpush2.bf16.msra.mxu0 %v4000
      %4028 = vmatprep.subr.bf16.mxu0 0
      %4029 = vmatpush2.bf16.msra.mxu0 %v3999
      %4030 = vmatprep.subr.bf16.mxu0 0
      %4031 = vmatpush2.bf16.msra.mxu0 %v3998
      %4032 = vmatprep.subr.bf16.mxu0 0
      %4033 = vmatpush2.bf16.msra.mxu0 %v3997
      %4034 = vmatprep.subr.bf16.mxu0 0
      %4035 = vmatpush2.bf16.msra.mxu0 %v3996
      %4036 = vmatprep.mubr.bf16.mxu0 %v2553
      %4037 = vmatmul.mubr.bf16.gmra.mxu0 %v2552
      %v4038 = vpop.f32.mrf.mxu0
      %v4039 = vadd.f32 0.0, %v4038
      %v4040 = vpop.f32.mrf.mxu0
      %v4041 = vpop.f32.mrf.mxu0
      %v4042 = vadd.f32 0.0, %v4041
      %v4043 = vpop.f32.mrf.mxu0
      %4044 = vmatprep.mubr.bf16.mxu0 %v2555
      %4045 = vmatmul.mubr.bf16.gmra.mxu0 %v2554
      %v4046 = vpop.f32.mrf.mxu0
      %v4047 = vadd.f32 0.0, %v4046
      %v4048 = vpop.f32.mrf.mxu0
      %v4049 = vpop.f32.mrf.mxu0
      %v4050 = vadd.f32 0.0, %v4049
      %v4051 = vpop.f32.mrf.mxu0
      %4052 = vmatprep.mubr.bf16.mxu0 %v2557
      %4053 = vmatmul.mubr.bf16.gmra.mxu0 %v2556
      %v4054 = vpop.f32.mrf.mxu0
      %v4055 = vadd.f32 0.0, %v4054
      %v4056 = vpop.f32.mrf.mxu0
      %v4057 = vpop.f32.mrf.mxu0
      %v4058 = vadd.f32 0.0, %v4057
      %v4059 = vpop.f32.mrf.mxu0
      %4060 = vmatprep.mubr.bf16.mxu0 %v2559
      %4061 = vmatmul.mubr.bf16.gmra.mxu0 %v2558
      %v4062 = vpop.f32.mrf.mxu0
      %v4063 = vadd.f32 0.0, %v4062
      %v4064 = vpop.f32.mrf.mxu0
      %v4065 = vpop.f32.mrf.mxu0
      %v4066 = vadd.f32 0.0, %v4065
      %v4067 = vpop.f32.mrf.mxu0
      %4068 = vmatprep.mubr.bf16.mxu0 %v2561
      %4069 = vmatmul.mubr.bf16.gmra.mxu0 %v2560
      %v4070 = vpop.f32.mrf.mxu0
      %v4071 = vadd.f32 0.0, %v4070
      %v4072 = vpop.f32.mrf.mxu0
      %v4073 = vpop.f32.mrf.mxu0
      %v4074 = vadd.f32 0.0, %v4073
      %v4075 = vpop.f32.mrf.mxu0
      %4076 = vmatprep.mubr.bf16.mxu0 %v2563
      %4077 = vmatmul.mubr.bf16.gmra.mxu0 %v2562
      %v4078 = vpop.f32.mrf.mxu0
      %v4079 = vadd.f32 0.0, %v4078
      %v4080 = vpop.f32.mrf.mxu0
      %v4081 = vpop.f32.mrf.mxu0
      %v4082 = vadd.f32 0.0, %v4081
      %v4083 = vpop.f32.mrf.mxu0
      %4084 = vmatprep.mubr.bf16.mxu0 %v2565
      %4085 = vmatmul.mubr.bf16.gmra.mxu0 %v2564
      %v4086 = vpop.f32.mrf.mxu0
      %v4087 = vadd.f32 0.0, %v4086
      %v4088 = vpop.f32.mrf.mxu0
      %v4089 = vpop.f32.mrf.mxu0
      %v4090 = vadd.f32 0.0, %v4089
      %v4091 = vpop.f32.mrf.mxu0
      %4092 = vmatprep.mubr.bf16.mxu0 %v2567
      %4093 = vmatmul.mubr.bf16.gmra.mxu0 %v2566
      %v4094 = vpop.f32.mrf.mxu0
      %v4095 = vadd.f32 0.0, %v4094
      %v4096 = vpop.f32.mrf.mxu0
      %v4097 = vpop.f32.mrf.mxu0
      %v4098 = vadd.f32 0.0, %v4097
      %v4099 = vpop.f32.mrf.mxu0
      %4100 = vmatprep.mubr.bf16.mxu0 %v2569
      %4101 = vmatmul.mubr.bf16.gmra.mxu0 %v2568
      %v4102 = vpop.f32.mrf.mxu0
      %v4103 = vadd.f32 0.0, %v4102
      %v4104 = vpop.f32.mrf.mxu0
      %v4105 = vpop.f32.mrf.mxu0
      %v4106 = vadd.f32 0.0, %v4105
      %v4107 = vpop.f32.mrf.mxu0
      %4108 = vmatprep.mubr.bf16.mxu0 %v2571
      %4109 = vmatmul.mubr.bf16.gmra.mxu0 %v2570
      %v4110 = vpop.f32.mrf.mxu0
      %v4111 = vadd.f32 0.0, %v4110
      %v4112 = vpop.f32.mrf.mxu0
      %v4113 = vpop.f32.mrf.mxu0
      %v4114 = vadd.f32 0.0, %v4113
      %v4115 = vpop.f32.mrf.mxu0
      %4116 = vmatprep.mubr.bf16.mxu0 %v2573
      %4117 = vmatmul.mubr.bf16.gmra.mxu0 %v2572
      %v4118 = vpop.f32.mrf.mxu0
      %v4119 = vadd.f32 0.0, %v4118
      %v4120 = vpop.f32.mrf.mxu0
      %v4121 = vpop.f32.mrf.mxu0
      %v4122 = vadd.f32 0.0, %v4121
      %v4123 = vpop.f32.mrf.mxu0
      %4124 = vmatprep.mubr.bf16.mxu0 %v2575
      %4125 = vmatmul.mubr.bf16.gmra.mxu0 %v2574
      %v4126 = vpop.f32.mrf.mxu0
      %v4127 = vadd.f32 0.0, %v4126
      %v4128 = vpop.f32.mrf.mxu0
      %v4129 = vpop.f32.mrf.mxu0
      %v4130 = vadd.f32 0.0, %v4129
      %v4131 = vpop.f32.mrf.mxu0
      %4132 = vmatprep.mubr.bf16.mxu0 %v2577
      %4133 = vmatmul.mubr.bf16.gmra.mxu0 %v2576
      %v4134 = vpop.f32.mrf.mxu0
      %v4135 = vadd.f32 0.0, %v4134
      %v4136 = vpop.f32.mrf.mxu0
      %v4137 = vpop.f32.mrf.mxu0
      %v4138 = vadd.f32 0.0, %v4137
      %v4139 = vpop.f32.mrf.mxu0
      %4140 = vmatprep.mubr.bf16.mxu0 %v2579
      %4141 = vmatmul.mubr.bf16.gmra.mxu0 %v2578
      %v4142 = vpop.f32.mrf.mxu0
      %v4143 = vadd.f32 0.0, %v4142
      %v4144 = vpop.f32.mrf.mxu0
      %v4145 = vpop.f32.mrf.mxu0
      %v4146 = vadd.f32 0.0, %v4145
      %v4147 = vpop.f32.mrf.mxu0
      %4148 = vmatprep.mubr.bf16.mxu0 %v2581
      %4149 = vmatmul.mubr.bf16.gmra.mxu0 %v2580
      %v4150 = vpop.f32.mrf.mxu0
      %v4151 = vadd.f32 0.0, %v4150
      %v4152 = vpop.f32.mrf.mxu0
      %v4153 = vpop.f32.mrf.mxu0
      %v4154 = vadd.f32 0.0, %v4153
      %v4155 = vpop.f32.mrf.mxu0
      %4156 = vmatprep.mubr.bf16.mxu0 %v2583
      %4157 = vmatmul.mubr.bf16.gmra.mxu0 %v2582
      %v4158 = vpop.f32.mrf.mxu0
      %v4159 = vadd.f32 0.0, %v4158
      %v4160 = vpop.f32.mrf.mxu0
      %v4161 = vpop.f32.mrf.mxu0
      %v4162 = vadd.f32 0.0, %v4161
      %v4163 = vpop.f32.mrf.mxu0
      %4164 = vdwg.mxu0
      %v4165 = vpack.c.bf16 %v4042, %v4039
      %v4166 = vpack.c.bf16 %v4050, %v4047
      %v4167 = vpack.c.bf16 %v4058, %v4055
      %v4168 = vpack.c.bf16 %v4066, %v4063
      %v4169 = vpack.c.bf16 %v4074, %v4071
      %v4170 = vpack.c.bf16 %v4082, %v4079
      %v4171 = vpack.c.bf16 %v4090, %v4087
      %v4172 = vpack.c.bf16 %v4098, %v4095
      %v4173 = vpack.c.bf16 %v4106, %v4103
      %v4174 = vpack.c.bf16 %v4114, %v4111
      %v4175 = vpack.c.bf16 %v4122, %v4119
      %v4176 = vpack.c.bf16 %v4130, %v4127
      %v4177 = vpack.c.bf16 %v4138, %v4135
      %v4178 = vpack.c.bf16 %v4146, %v4143
      %v4179 = vpack.c.bf16 %v4154, %v4151
      %v4180 = vpack.c.bf16 %v4162, %v4159
      %s4181 = scalar_lea.vmem %s4, 128
      %v4182 = vld [vmem:[%s4181] sm:$0xf]
      %v4183 = vld [vmem:[%s4181 + $0x4] sm:$0xf]
      %v4184 = vld [vmem:[%s4181 + $0x8] sm:$0xf]
      %v4185 = vld [vmem:[%s4181 + $0xc] sm:$0xf]
      %v4186 = vld [vmem:[%s4181 + $0x10] sm:$0xf]
      %v4187 = vld [vmem:[%s4181 + $0x14] sm:$0xf]
      %v4188 = vld [vmem:[%s4181 + $0x18] sm:$0xf]
      %v4189 = vld [vmem:[%s4181 + $0x1c] sm:$0xf]
      %v4190 = vld [vmem:[%s4181 + $0x20] sm:$0xf]
      %v4191 = vld [vmem:[%s4181 + $0x24] sm:$0xf]
      %v4192 = vld [vmem:[%s4181 + $0x28] sm:$0xf]
      %v4193 = vld [vmem:[%s4181 + $0x2c] sm:$0xf]
      %v4194 = vld [vmem:[%s4181 + $0x30] sm:$0xf]
      %v4195 = vld [vmem:[%s4181 + $0x34] sm:$0xf]
      %v4196 = vld [vmem:[%s4181 + $0x38] sm:$0xf]
      %v4197 = vld [vmem:[%s4181 + $0x3c] sm:$0xf]
      %v4198 = vld [vmem:[%s9 + $0x2] sm:$0x1]
      %v4199 = vlaneseq
      %v4200 = vshrl.u32 %v4199, 7
      %v4201 = vsub.s32 0, %v4200
      %v4202 = vrot.slane %v4198, %v4201
      %v4219 = vunpack.c.l.b16 %v4182
      %v4220 = vunpack.c.l.b16 %v4183
      %v4221 = vunpack.c.l.b16 %v4184
      %v4222 = vunpack.c.l.b16 %v4185
      %v4223 = vunpack.c.l.b16 %v4186
      %v4224 = vunpack.c.l.b16 %v4187
      %v4225 = vunpack.c.l.b16 %v4188
      %v4226 = vunpack.c.l.b16 %v4189
      %v4227 = vunpack.c.l.b16 %v4190
      %v4228 = vunpack.c.l.b16 %v4191
      %v4229 = vunpack.c.l.b16 %v4192
      %v4230 = vunpack.c.l.b16 %v4193
      %v4231 = vunpack.c.l.b16 %v4194
      %v4232 = vunpack.c.l.b16 %v4195
      %v4233 = vunpack.c.l.b16 %v4196
      %v4234 = vunpack.c.l.b16 %v4197
      %v4235 = vpack.c.b16 %v4220, %v4219
      %v4236 = vpack.c.b16 %v4222, %v4221
      %v4237 = vpack.c.b16 %v4224, %v4223
      %v4238 = vpack.c.b16 %v4226, %v4225
      %v4239 = vpack.c.b16 %v4228, %v4227
      %v4240 = vpack.c.b16 %v4230, %v4229
      %v4241 = vpack.c.b16 %v4232, %v4231
      %v4242 = vpack.c.b16 %v4234, %v4233
      %4251 = vmatprep.subr.bf16.mxu0 0
      %4252 = vmatpush1.bf16.msra.mxu0 %v4242
      %4253 = vmatprep.subr.bf16.mxu0 0
      %4254 = vmatpush1.bf16.msra.mxu0 %v4241
      %4255 = vmatprep.subr.bf16.mxu0 0
      %4256 = vmatpush1.bf16.msra.mxu0 %v4240
      %4257 = vmatprep.subr.bf16.mxu0 0
      %4258 = vmatpush1.bf16.msra.mxu0 %v4239
      %4259 = vmatprep.subr.bf16.mxu0 0
      %4260 = vmatpush1.bf16.msra.mxu0 %v4238
      %4261 = vmatprep.subr.bf16.mxu0 0
      %4262 = vmatpush1.bf16.msra.mxu0 %v4237
      %4263 = vmatprep.subr.bf16.mxu0 0
      %4264 = vmatpush1.bf16.msra.mxu0 %v4236
      %4265 = vmatprep.subr.bf16.mxu0 0
      %4266 = vmatpush1.bf16.msra.mxu0 %v4235
      %4267 = vmatprep.subr.bf16.mxu0 0
      %4268 = vmatpush2.bf16.msra.mxu0 0
      %4269 = vmatprep.subr.bf16.mxu0 0
      %4270 = vmatpush2.bf16.msra.mxu0 0
      %4271 = vmatprep.subr.bf16.mxu0 0
      %4272 = vmatpush2.bf16.msra.mxu0 0
      %4273 = vmatprep.subr.bf16.mxu0 0
      %4274 = vmatpush2.bf16.msra.mxu0 0
      %4275 = vmatprep.subr.bf16.mxu0 0
      %4276 = vmatpush2.bf16.msra.mxu0 0
      %4277 = vmatprep.subr.bf16.mxu0 0
      %4278 = vmatpush2.bf16.msra.mxu0 0
      %4279 = vmatprep.subr.bf16.mxu0 0
      %4280 = vmatpush2.bf16.msra.mxu0 0
      %4281 = vmatprep.subr.bf16.mxu0 0
      %4282 = vmatpush2.bf16.msra.mxu0 0
      %4283 = vmatprep.mubr.bf16.mxu0 0
      %4284 = vmatmul.mubr.bf16.gmra.mxu0 %v4165
      %v4285 = vpop.f32.mrf.mxu0
      %v4286 = vadd.f32 %v4202, %v4285
      %v4287 = vpop.f32.mrf.mxu0
      %v4288 = vpop.f32.mrf.mxu0
      %v4289 = vadd.f32 %v4202, %v4288
      %v4290 = vpop.f32.mrf.mxu0
      %4291 = vmatprep.mubr.bf16.mxu0 0
      %4292 = vmatmul.mubr.bf16.gmra.mxu0 %v4166
      %v4293 = vpop.f32.mrf.mxu0
      %v4294 = vadd.f32 %v4202, %v4293
      %v4295 = vpop.f32.mrf.mxu0
      %v4296 = vpop.f32.mrf.mxu0
      %v4297 = vadd.f32 %v4202, %v4296
      %v4298 = vpop.f32.mrf.mxu0
      %4299 = vmatprep.mubr.bf16.mxu0 0
      %4300 = vmatmul.mubr.bf16.gmra.mxu0 %v4167
      %v4301 = vpop.f32.mrf.mxu0
      %v4302 = vadd.f32 %v4202, %v4301
      %v4303 = vpop.f32.mrf.mxu0
      %v4304 = vpop.f32.mrf.mxu0
      %v4305 = vadd.f32 %v4202, %v4304
      %v4306 = vpop.f32.mrf.mxu0
      %4307 = vmatprep.mubr.bf16.mxu0 0
      %4308 = vmatmul.mubr.bf16.gmra.mxu0 %v4168
      %v4309 = vpop.f32.mrf.mxu0
      %v4310 = vadd.f32 %v4202, %v4309
      %v4311 = vpop.f32.mrf.mxu0
      %v4312 = vpop.f32.mrf.mxu0
      %v4313 = vadd.f32 %v4202, %v4312
      %v4314 = vpop.f32.mrf.mxu0
      %4315 = vmatprep.mubr.bf16.mxu0 0
      %4316 = vmatmul.mubr.bf16.gmra.mxu0 %v4169
      %v4317 = vpop.f32.mrf.mxu0
      %v4318 = vadd.f32 %v4202, %v4317
      %v4319 = vpop.f32.mrf.mxu0
      %v4320 = vpop.f32.mrf.mxu0
      %v4321 = vadd.f32 %v4202, %v4320
      %v4322 = vpop.f32.mrf.mxu0
      %4323 = vmatprep.mubr.bf16.mxu0 0
      %4324 = vmatmul.mubr.bf16.gmra.mxu0 %v4170
      %v4325 = vpop.f32.mrf.mxu0
      %v4326 = vadd.f32 %v4202, %v4325
      %v4327 = vpop.f32.mrf.mxu0
      %v4328 = vpop.f32.mrf.mxu0
      %v4329 = vadd.f32 %v4202, %v4328
      %v4330 = vpop.f32.mrf.mxu0
      %4331 = vmatprep.mubr.bf16.mxu0 0
      %4332 = vmatmul.mubr.bf16.gmra.mxu0 %v4171
      %v4333 = vpop.f32.mrf.mxu0
      %v4334 = vadd.f32 %v4202, %v4333
      %v4335 = vpop.f32.mrf.mxu0
      %v4336 = vpop.f32.mrf.mxu0
      %v4337 = vadd.f32 %v4202, %v4336
      %v4338 = vpop.f32.mrf.mxu0
      %4339 = vmatprep.mubr.bf16.mxu0 0
      %4340 = vmatmul.mubr.bf16.gmra.mxu0 %v4172
      %v4341 = vpop.f32.mrf.mxu0
      %v4342 = vadd.f32 %v4202, %v4341
      %v4343 = vpop.f32.mrf.mxu0
      %v4344 = vpop.f32.mrf.mxu0
      %v4345 = vadd.f32 %v4202, %v4344
      %v4346 = vpop.f32.mrf.mxu0
      %4347 = vmatprep.mubr.bf16.mxu0 0
      %4348 = vmatmul.mubr.bf16.gmra.mxu0 %v4173
      %v4349 = vpop.f32.mrf.mxu0
      %v4350 = vadd.f32 %v4202, %v4349
      %v4351 = vpop.f32.mrf.mxu0
      %v4352 = vpop.f32.mrf.mxu0
      %v4353 = vadd.f32 %v4202, %v4352
      %v4354 = vpop.f32.mrf.mxu0
      %4355 = vmatprep.mubr.bf16.mxu0 0
      %4356 = vmatmul.mubr.bf16.gmra.mxu0 %v4174
      %v4357 = vpop.f32.mrf.mxu0
      %v4358 = vadd.f32 %v4202, %v4357
      %v4359 = vpop.f32.mrf.mxu0
      %v4360 = vpop.f32.mrf.mxu0
      %v4361 = vadd.f32 %v4202, %v4360
      %v4362 = vpop.f32.mrf.mxu0
      %4363 = vmatprep.mubr.bf16.mxu0 0
      %4364 = vmatmul.mubr.bf16.gmra.mxu0 %v4175
      %v4365 = vpop.f32.mrf.mxu0
      %v4366 = vadd.f32 %v4202, %v4365
      %v4367 = vpop.f32.mrf.mxu0
      %v4368 = vpop.f32.mrf.mxu0
      %v4369 = vadd.f32 %v4202, %v4368
      %v4370 = vpop.f32.mrf.mxu0
      %4371 = vmatprep.mubr.bf16.mxu0 0
      %4372 = vmatmul.mubr.bf16.gmra.mxu0 %v4176
      %v4373 = vpop.f32.mrf.mxu0
      %v4374 = vadd.f32 %v4202, %v4373
      %v4375 = vpop.f32.mrf.mxu0
      %v4376 = vpop.f32.mrf.mxu0
      %v4377 = vadd.f32 %v4202, %v4376
      %v4378 = vpop.f32.mrf.mxu0
      %4379 = vmatprep.mubr.bf16.mxu0 0
      %4380 = vmatmul.mubr.bf16.gmra.mxu0 %v4177
      %v4381 = vpop.f32.mrf.mxu0
      %v4382 = vadd.f32 %v4202, %v4381
      %v4383 = vpop.f32.mrf.mxu0
      %v4384 = vpop.f32.mrf.mxu0
      %v4385 = vadd.f32 %v4202, %v4384
      %v4386 = vpop.f32.mrf.mxu0
      %4387 = vmatprep.mubr.bf16.mxu0 0
      %4388 = vmatmul.mubr.bf16.gmra.mxu0 %v4178
      %v4389 = vpop.f32.mrf.mxu0
      %v4390 = vadd.f32 %v4202, %v4389
      %v4391 = vpop.f32.mrf.mxu0
      %v4392 = vpop.f32.mrf.mxu0
      %v4393 = vadd.f32 %v4202, %v4392
      %v4394 = vpop.f32.mrf.mxu0
      %4395 = vmatprep.mubr.bf16.mxu0 0
      %4396 = vmatmul.mubr.bf16.gmra.mxu0 %v4179
      %v4397 = vpop.f32.mrf.mxu0
      %v4398 = vadd.f32 %v4202, %v4397
      %v4399 = vpop.f32.mrf.mxu0
      %v4400 = vpop.f32.mrf.mxu0
      %v4401 = vadd.f32 %v4202, %v4400
      %v4402 = vpop.f32.mrf.mxu0
      %4403 = vmatprep.mubr.bf16.mxu0 0
      %4404 = vmatmul.mubr.bf16.gmra.mxu0 %v4180
      %v4405 = vpop.f32.mrf.mxu0
      %v4406 = vadd.f32 %v4202, %v4405
      %v4407 = vpop.f32.mrf.mxu0
      %v4408 = vpop.f32.mrf.mxu0
      %v4409 = vadd.f32 %v4202, %v4408
      %v4410 = vpop.f32.mrf.mxu0
      %4411 = vdwg.mxu0
      %v4412 = vmax.f32 %v4286, 0.0
      %v4413 = vmax.f32 %v4289, 0.0
      %v4414 = vmax.f32 %v4294, 0.0
      %v4415 = vmax.f32 %v4297, 0.0
      %v4416 = vmax.f32 %v4302, 0.0
      %v4417 = vmax.f32 %v4305, 0.0
      %v4418 = vmax.f32 %v4310, 0.0
      %v4419 = vmax.f32 %v4313, 0.0
      %v4420 = vmax.f32 %v4318, 0.0
      %v4421 = vmax.f32 %v4321, 0.0
      %v4422 = vmax.f32 %v4326, 0.0
      %v4423 = vmax.f32 %v4329, 0.0
      %v4424 = vmax.f32 %v4334, 0.0
      %v4425 = vmax.f32 %v4337, 0.0
      %v4426 = vmax.f32 %v4342, 0.0
      %v4427 = vmax.f32 %v4345, 0.0
      %v4428 = vmax.f32 %v4350, 0.0
      %v4429 = vmax.f32 %v4353, 0.0
      %v4430 = vmax.f32 %v4358, 0.0
      %v4431 = vmax.f32 %v4361, 0.0
      %v4432 = vmax.f32 %v4366, 0.0
      %v4433 = vmax.f32 %v4369, 0.0
      %v4434 = vmax.f32 %v4374, 0.0
      %v4435 = vmax.f32 %v4377, 0.0
      %v4436 = vmax.f32 %v4382, 0.0
      %v4437 = vmax.f32 %v4385, 0.0
      %v4438 = vmax.f32 %v4390, 0.0
      %v4439 = vmax.f32 %v4393, 0.0
      %v4440 = vmax.f32 %v4398, 0.0
      %v4441 = vmax.f32 %v4401, 0.0
      %v4442 = vmax.f32 %v4406, 0.0
      %v4443 = vmax.f32 %v4409, 0.0
      %v4444 = vpack.c.bf16 %v4413, %v4412
      %v4445 = vpack.c.bf16 %v4415, %v4414
      %v4446 = vpack.c.bf16 %v4417, %v4416
      %v4447 = vpack.c.bf16 %v4419, %v4418
      %v4448 = vpack.c.bf16 %v4421, %v4420
      %v4449 = vpack.c.bf16 %v4423, %v4422
      %v4450 = vpack.c.bf16 %v4425, %v4424
      %v4451 = vpack.c.bf16 %v4427, %v4426
      %v4452 = vpack.c.bf16 %v4429, %v4428
      %v4453 = vpack.c.bf16 %v4431, %v4430
      %v4454 = vpack.c.bf16 %v4433, %v4432
      %v4455 = vpack.c.bf16 %v4435, %v4434
      %v4456 = vpack.c.bf16 %v4437, %v4436
      %v4457 = vpack.c.bf16 %v4439, %v4438
      %v4458 = vpack.c.bf16 %v4441, %v4440
      %v4459 = vpack.c.bf16 %v4443, %v4442
      %s4460 = scalar_lea.vmem %s5, 128
      %v4461 = vld [vmem:[%s4460] sm:$0xf]
      %v4462 = vld [vmem:[%s4460 + $0x4] sm:$0xf]
      %v4463 = vld [vmem:[%s4460 + $0x8] sm:$0xf]
      %v4464 = vld [vmem:[%s4460 + $0xc] sm:$0xf]
      %v4465 = vld [vmem:[%s4460 + $0x10] sm:$0xf]
      %v4466 = vld [vmem:[%s4460 + $0x14] sm:$0xf]
      %v4467 = vld [vmem:[%s4460 + $0x18] sm:$0xf]
      %v4468 = vld [vmem:[%s4460 + $0x1c] sm:$0xf]
      %v4469 = vld [vmem:[%s4460 + $0x20] sm:$0xf]
      %v4470 = vld [vmem:[%s4460 + $0x24] sm:$0xf]
      %v4471 = vld [vmem:[%s4460 + $0x28] sm:$0xf]
      %v4472 = vld [vmem:[%s4460 + $0x2c] sm:$0xf]
      %v4473 = vld [vmem:[%s4460 + $0x30] sm:$0xf]
      %v4474 = vld [vmem:[%s4460 + $0x34] sm:$0xf]
      %v4475 = vld [vmem:[%s4460 + $0x38] sm:$0xf]
      %v4476 = vld [vmem:[%s4460 + $0x3c] sm:$0xf]
      %v4477 = vld [vmem:[%s9 + $0x5] sm:$0x1]
      %v4478 = vlaneseq
      %v4479 = vshrl.u32 %v4478, 7
      %v4480 = vsub.s32 0, %v4479
      %v4481 = vrot.slane %v4477, %v4480
      %v4498 = vunpack.c.l.b16 %v4461
      %v4499 = vunpack.c.l.b16 %v4462
      %v4500 = vunpack.c.l.b16 %v4463
      %v4501 = vunpack.c.l.b16 %v4464
      %v4502 = vunpack.c.l.b16 %v4465
      %v4503 = vunpack.c.l.b16 %v4466
      %v4504 = vunpack.c.l.b16 %v4467
      %v4505 = vunpack.c.l.b16 %v4468
      %v4506 = vunpack.c.l.b16 %v4469
      %v4507 = vunpack.c.l.b16 %v4470
      %v4508 = vunpack.c.l.b16 %v4471
      %v4509 = vunpack.c.l.b16 %v4472
      %v4510 = vunpack.c.l.b16 %v4473
      %v4511 = vunpack.c.l.b16 %v4474
      %v4512 = vunpack.c.l.b16 %v4475
      %v4513 = vunpack.c.l.b16 %v4476
      %v4514 = vpack.c.b16 %v4499, %v4498
      %v4515 = vpack.c.b16 %v4501, %v4500
      %v4516 = vpack.c.b16 %v4503, %v4502
      %v4517 = vpack.c.b16 %v4505, %v4504
      %v4518 = vpack.c.b16 %v4507, %v4506
      %v4519 = vpack.c.b16 %v4509, %v4508
      %v4520 = vpack.c.b16 %v4511, %v4510
      %v4521 = vpack.c.b16 %v4513, %v4512
      %4530 = vmatprep.subr.bf16.mxu0 0
      %4531 = vmatpush1.bf16.msra.mxu0 %v4521
      %4532 = vmatprep.subr.bf16.mxu0 0
      %4533 = vmatpush1.bf16.msra.mxu0 %v4520
      %4534 = vmatprep.subr.bf16.mxu0 0
      %4535 = vmatpush1.bf16.msra.mxu0 %v4519
      %4536 = vmatprep.subr.bf16.mxu0 0
      %4537 = vmatpush1.bf16.msra.mxu0 %v4518
      %4538 = vmatprep.subr.bf16.mxu0 0
      %4539 = vmatpush1.bf16.msra.mxu0 %v4517
      %4540 = vmatprep.subr.bf16.mxu0 0
      %4541 = vmatpush1.bf16.msra.mxu0 %v4516
      %4542 = vmatprep.subr.bf16.mxu0 0
      %4543 = vmatpush1.bf16.msra.mxu0 %v4515
      %4544 = vmatprep.subr.bf16.mxu0 0
      %4545 = vmatpush1.bf16.msra.mxu0 %v4514
      %4546 = vmatprep.subr.bf16.mxu0 0
      %4547 = vmatpush2.bf16.msra.mxu0 0
      %4548 = vmatprep.subr.bf16.mxu0 0
      %4549 = vmatpush2.bf16.msra.mxu0 0
      %4550 = vmatprep.subr.bf16.mxu0 0
      %4551 = vmatpush2.bf16.msra.mxu0 0
      %4552 = vmatprep.subr.bf16.mxu0 0
      %4553 = vmatpush2.bf16.msra.mxu0 0
      %4554 = vmatprep.subr.bf16.mxu0 0
      %4555 = vmatpush2.bf16.msra.mxu0 0
      %4556 = vmatprep.subr.bf16.mxu0 0
      %4557 = vmatpush2.bf16.msra.mxu0 0
      %4558 = vmatprep.subr.bf16.mxu0 0
      %4559 = vmatpush2.bf16.msra.mxu0 0
      %4560 = vmatprep.subr.bf16.mxu0 0
      %4561 = vmatpush2.bf16.msra.mxu0 0
      %4562 = vmatprep.mubr.bf16.mxu0 0
      %4563 = vmatmul.mubr.bf16.gmra.mxu0 %v4444
      %v4564 = vpop.f32.mrf.mxu0
      %v4565 = vadd.f32 %v4481, %v4564
      %v4566 = vpop.f32.mrf.mxu0
      %v4567 = vpop.f32.mrf.mxu0
      %v4568 = vadd.f32 %v4481, %v4567
      %v4569 = vpop.f32.mrf.mxu0
      %4570 = vmatprep.mubr.bf16.mxu0 0
      %4571 = vmatmul.mubr.bf16.gmra.mxu0 %v4445
      %v4572 = vpop.f32.mrf.mxu0
      %v4573 = vadd.f32 %v4481, %v4572
      %v4574 = vpop.f32.mrf.mxu0
      %v4575 = vpop.f32.mrf.mxu0
      %v4576 = vadd.f32 %v4481, %v4575
      %v4577 = vpop.f32.mrf.mxu0
      %4578 = vmatprep.mubr.bf16.mxu0 0
      %4579 = vmatmul.mubr.bf16.gmra.mxu0 %v4446
      %v4580 = vpop.f32.mrf.mxu0
      %v4581 = vadd.f32 %v4481, %v4580
      %v4582 = vpop.f32.mrf.mxu0
      %v4583 = vpop.f32.mrf.mxu0
      %v4584 = vadd.f32 %v4481, %v4583
      %v4585 = vpop.f32.mrf.mxu0
      %4586 = vmatprep.mubr.bf16.mxu0 0
      %4587 = vmatmul.mubr.bf16.gmra.mxu0 %v4447
      %v4588 = vpop.f32.mrf.mxu0
      %v4589 = vadd.f32 %v4481, %v4588
      %v4590 = vpop.f32.mrf.mxu0
      %v4591 = vpop.f32.mrf.mxu0
      %v4592 = vadd.f32 %v4481, %v4591
      %v4593 = vpop.f32.mrf.mxu0
      %4594 = vmatprep.mubr.bf16.mxu0 0
      %4595 = vmatmul.mubr.bf16.gmra.mxu0 %v4448
      %v4596 = vpop.f32.mrf.mxu0
      %v4597 = vadd.f32 %v4481, %v4596
      %v4598 = vpop.f32.mrf.mxu0
      %v4599 = vpop.f32.mrf.mxu0
      %v4600 = vadd.f32 %v4481, %v4599
      %v4601 = vpop.f32.mrf.mxu0
      %4602 = vmatprep.mubr.bf16.mxu0 0
      %4603 = vmatmul.mubr.bf16.gmra.mxu0 %v4449
      %v4604 = vpop.f32.mrf.mxu0
      %v4605 = vadd.f32 %v4481, %v4604
      %v4606 = vpop.f32.mrf.mxu0
      %v4607 = vpop.f32.mrf.mxu0
      %v4608 = vadd.f32 %v4481, %v4607
      %v4609 = vpop.f32.mrf.mxu0
      %4610 = vmatprep.mubr.bf16.mxu0 0
      %4611 = vmatmul.mubr.bf16.gmra.mxu0 %v4450
      %v4612 = vpop.f32.mrf.mxu0
      %v4613 = vadd.f32 %v4481, %v4612
      %v4614 = vpop.f32.mrf.mxu0
      %v4615 = vpop.f32.mrf.mxu0
      %v4616 = vadd.f32 %v4481, %v4615
      %v4617 = vpop.f32.mrf.mxu0
      %4618 = vmatprep.mubr.bf16.mxu0 0
      %4619 = vmatmul.mubr.bf16.gmra.mxu0 %v4451
      %v4620 = vpop.f32.mrf.mxu0
      %v4621 = vadd.f32 %v4481, %v4620
      %v4622 = vpop.f32.mrf.mxu0
      %v4623 = vpop.f32.mrf.mxu0
      %v4624 = vadd.f32 %v4481, %v4623
      %v4625 = vpop.f32.mrf.mxu0
      %4626 = vmatprep.mubr.bf16.mxu0 0
      %4627 = vmatmul.mubr.bf16.gmra.mxu0 %v4452
      %v4628 = vpop.f32.mrf.mxu0
      %v4629 = vadd.f32 %v4481, %v4628
      %v4630 = vpop.f32.mrf.mxu0
      %v4631 = vpop.f32.mrf.mxu0
      %v4632 = vadd.f32 %v4481, %v4631
      %v4633 = vpop.f32.mrf.mxu0
      %4634 = vmatprep.mubr.bf16.mxu0 0
      %4635 = vmatmul.mubr.bf16.gmra.mxu0 %v4453
      %v4636 = vpop.f32.mrf.mxu0
      %v4637 = vadd.f32 %v4481, %v4636
      %v4638 = vpop.f32.mrf.mxu0
      %v4639 = vpop.f32.mrf.mxu0
      %v4640 = vadd.f32 %v4481, %v4639
      %v4641 = vpop.f32.mrf.mxu0
      %4642 = vmatprep.mubr.bf16.mxu0 0
      %4643 = vmatmul.mubr.bf16.gmra.mxu0 %v4454
      %v4644 = vpop.f32.mrf.mxu0
      %v4645 = vadd.f32 %v4481, %v4644
      %v4646 = vpop.f32.mrf.mxu0
      %v4647 = vpop.f32.mrf.mxu0
      %v4648 = vadd.f32 %v4481, %v4647
      %v4649 = vpop.f32.mrf.mxu0
      %4650 = vmatprep.mubr.bf16.mxu0 0
      %4651 = vmatmul.mubr.bf16.gmra.mxu0 %v4455
      %v4652 = vpop.f32.mrf.mxu0
      %v4653 = vadd.f32 %v4481, %v4652
      %v4654 = vpop.f32.mrf.mxu0
      %v4655 = vpop.f32.mrf.mxu0
      %v4656 = vadd.f32 %v4481, %v4655
      %v4657 = vpop.f32.mrf.mxu0
      %4658 = vmatprep.mubr.bf16.mxu0 0
      %4659 = vmatmul.mubr.bf16.gmra.mxu0 %v4456
      %v4660 = vpop.f32.mrf.mxu0
      %v4661 = vadd.f32 %v4481, %v4660
      %v4662 = vpop.f32.mrf.mxu0
      %v4663 = vpop.f32.mrf.mxu0
      %v4664 = vadd.f32 %v4481, %v4663
      %v4665 = vpop.f32.mrf.mxu0
      %4666 = vmatprep.mubr.bf16.mxu0 0
      %4667 = vmatmul.mubr.bf16.gmra.mxu0 %v4457
      %v4668 = vpop.f32.mrf.mxu0
      %v4669 = vadd.f32 %v4481, %v4668
      %v4670 = vpop.f32.mrf.mxu0
      %v4671 = vpop.f32.mrf.mxu0
      %v4672 = vadd.f32 %v4481, %v4671
      %v4673 = vpop.f32.mrf.mxu0
      %4674 = vmatprep.mubr.bf16.mxu0 0
      %4675 = vmatmul.mubr.bf16.gmra.mxu0 %v4458
      %v4676 = vpop.f32.mrf.mxu0
      %v4677 = vadd.f32 %v4481, %v4676
      %v4678 = vpop.f32.mrf.mxu0
      %v4679 = vpop.f32.mrf.mxu0
      %v4680 = vadd.f32 %v4481, %v4679
      %v4681 = vpop.f32.mrf.mxu0
      %4682 = vmatprep.mubr.bf16.mxu0 0
      %4683 = vmatmul.mubr.bf16.gmra.mxu0 %v4459
      %v4684 = vpop.f32.mrf.mxu0
      %v4685 = vadd.f32 %v4481, %v4684
      %v4686 = vpop.f32.mrf.mxu0
      %v4687 = vpop.f32.mrf.mxu0
      %v4688 = vadd.f32 %v4481, %v4687
      %v4689 = vpop.f32.mrf.mxu0
      %4690 = vdwg.mxu0
      %v4691 = vpack.c.bf16 %v4568, %v4565
      %v4692 = vpack.c.bf16 %v4576, %v4573
      %v4693 = vpack.c.bf16 %v4584, %v4581
      %v4694 = vpack.c.bf16 %v4592, %v4589
      %v4695 = vpack.c.bf16 %v4600, %v4597
      %v4696 = vpack.c.bf16 %v4608, %v4605
      %v4697 = vpack.c.bf16 %v4616, %v4613
      %v4698 = vpack.c.bf16 %v4624, %v4621
      %v4699 = vpack.c.bf16 %v4632, %v4629
      %v4700 = vpack.c.bf16 %v4640, %v4637
      %v4701 = vpack.c.bf16 %v4648, %v4645
      %v4702 = vpack.c.bf16 %v4656, %v4653
      %v4703 = vpack.c.bf16 %v4664, %v4661
      %v4704 = vpack.c.bf16 %v4672, %v4669
      %v4705 = vpack.c.bf16 %v4680, %v4677
      %v4706 = vpack.c.bf16 %v4688, %v4685
      %v4707 = vld [vmem:[%s6] sm:$0xf]
      %v4708 = vld [vmem:[%s6 + $0x4] sm:$0xf]
      %v4709 = vld [vmem:[%s6 + $0x8] sm:$0xf]
      %v4710 = vld [vmem:[%s6 + $0xc] sm:$0xf]
      %v4711 = vld [vmem:[%s6 + $0x10] sm:$0xf]
      %v4712 = vld [vmem:[%s6 + $0x14] sm:$0xf]
      %v4713 = vld [vmem:[%s6 + $0x18] sm:$0xf]
      %v4714 = vld [vmem:[%s6 + $0x1c] sm:$0xf]
      %v4715 = vld [vmem:[%s6 + $0x20] sm:$0xf]
      %v4716 = vld [vmem:[%s6 + $0x24] sm:$0xf]
      %v4717 = vld [vmem:[%s6 + $0x28] sm:$0xf]
      %v4718 = vld [vmem:[%s6 + $0x2c] sm:$0xf]
      %v4719 = vld [vmem:[%s6 + $0x30] sm:$0xf]
      %v4720 = vld [vmem:[%s6 + $0x34] sm:$0xf]
      %v4721 = vld [vmem:[%s6 + $0x38] sm:$0xf]
      %v4722 = vld [vmem:[%s6 + $0x3c] sm:$0xf]
      %v4723 = vld [vmem:[%s9 + $0x6] sm:$0x1]
      %v4724 = vlaneseq
      %v4725 = vshrl.u32 %v4724, 7
      %v4726 = vsub.s32 0, %v4725
      %v4727 = vrot.slane %v4723, %v4726
      %v4744 = vunpack.c.l.b16 %v4707
      %v4745 = vunpack.c.l.b16 %v4708
      %v4746 = vunpack.c.l.b16 %v4709
      %v4747 = vunpack.c.l.b16 %v4710
      %v4748 = vunpack.c.l.b16 %v4711
      %v4749 = vunpack.c.l.b16 %v4712
      %v4750 = vunpack.c.l.b16 %v4713
      %v4751 = vunpack.c.l.b16 %v4714
      %v4752 = vunpack.c.l.b16 %v4715
      %v4753 = vunpack.c.l.b16 %v4716
      %v4754 = vunpack.c.l.b16 %v4717
      %v4755 = vunpack.c.l.b16 %v4718
      %v4756 = vunpack.c.l.b16 %v4719
      %v4757 = vunpack.c.l.b16 %v4720
      %v4758 = vunpack.c.l.b16 %v4721
      %v4759 = vunpack.c.l.b16 %v4722
      %v4760 = vpack.c.b16 %v4745, %v4744
      %v4761 = vpack.c.b16 %v4747, %v4746
      %v4762 = vpack.c.b16 %v4749, %v4748
      %v4763 = vpack.c.b16 %v4751, %v4750
      %v4764 = vpack.c.b16 %v4753, %v4752
      %v4765 = vpack.c.b16 %v4755, %v4754
      %v4766 = vpack.c.b16 %v4757, %v4756
      %v4767 = vpack.c.b16 %v4759, %v4758
      %4776 = vmatprep.subr.bf16.mxu0 0
      %4777 = vmatpush1.bf16.msra.mxu0 %v4767
      %4778 = vmatprep.subr.bf16.mxu0 0
      %4779 = vmatpush1.bf16.msra.mxu0 %v4766
      %4780 = vmatprep.subr.bf16.mxu0 0
      %4781 = vmatpush1.bf16.msra.mxu0 %v4765
      %4782 = vmatprep.subr.bf16.mxu0 0
      %4783 = vmatpush1.bf16.msra.mxu0 %v4764
      %4784 = vmatprep.subr.bf16.mxu0 0
      %4785 = vmatpush1.bf16.msra.mxu0 %v4763
      %4786 = vmatprep.subr.bf16.mxu0 0
      %4787 = vmatpush1.bf16.msra.mxu0 %v4762
      %4788 = vmatprep.subr.bf16.mxu0 0
      %4789 = vmatpush1.bf16.msra.mxu0 %v4761
      %4790 = vmatprep.subr.bf16.mxu0 0
      %4791 = vmatpush1.bf16.msra.mxu0 %v4760
      %4792 = vmatprep.subr.bf16.mxu0 0
      %4793 = vmatpush2.bf16.msra.mxu0 0
      %4794 = vmatprep.subr.bf16.mxu0 0
      %4795 = vmatpush2.bf16.msra.mxu0 0
      %4796 = vmatprep.subr.bf16.mxu0 0
      %4797 = vmatpush2.bf16.msra.mxu0 0
      %4798 = vmatprep.subr.bf16.mxu0 0
      %4799 = vmatpush2.bf16.msra.mxu0 0
      %4800 = vmatprep.subr.bf16.mxu0 0
      %4801 = vmatpush2.bf16.msra.mxu0 0
      %4802 = vmatprep.subr.bf16.mxu0 0
      %4803 = vmatpush2.bf16.msra.mxu0 0
      %4804 = vmatprep.subr.bf16.mxu0 0
      %4805 = vmatpush2.bf16.msra.mxu0 0
      %4806 = vmatprep.subr.bf16.mxu0 0
      %4807 = vmatpush2.bf16.msra.mxu0 0
      %4808 = vmatprep.mubr.bf16.mxu0 0
      %4809 = vmatmul.mubr.bf16.gmra.mxu0 %v4691
      %v4810 = vpop.f32.mrf.mxu0
      %v4811 = vadd.f32 %v4727, %v4810
      %v4812 = vpop.f32.mrf.mxu0
      %v4813 = vpop.f32.mrf.mxu0
      %v4814 = vadd.f32 %v4727, %v4813
      %v4815 = vpop.f32.mrf.mxu0
      %4816 = vmatprep.mubr.bf16.mxu0 0
      %4817 = vmatmul.mubr.bf16.gmra.mxu0 %v4692
      %v4818 = vpop.f32.mrf.mxu0
      %v4819 = vadd.f32 %v4727, %v4818
      %v4820 = vpop.f32.mrf.mxu0
      %v4821 = vpop.f32.mrf.mxu0
      %v4822 = vadd.f32 %v4727, %v4821
      %v4823 = vpop.f32.mrf.mxu0
      %4824 = vmatprep.mubr.bf16.mxu0 0
      %4825 = vmatmul.mubr.bf16.gmra.mxu0 %v4693
      %v4826 = vpop.f32.mrf.mxu0
      %v4827 = vadd.f32 %v4727, %v4826
      %v4828 = vpop.f32.mrf.mxu0
      %v4829 = vpop.f32.mrf.mxu0
      %v4830 = vadd.f32 %v4727, %v4829
      %v4831 = vpop.f32.mrf.mxu0
      %4832 = vmatprep.mubr.bf16.mxu0 0
      %4833 = vmatmul.mubr.bf16.gmra.mxu0 %v4694
      %v4834 = vpop.f32.mrf.mxu0
      %v4835 = vadd.f32 %v4727, %v4834
      %v4836 = vpop.f32.mrf.mxu0
      %v4837 = vpop.f32.mrf.mxu0
      %v4838 = vadd.f32 %v4727, %v4837
      %v4839 = vpop.f32.mrf.mxu0
      %4840 = vmatprep.mubr.bf16.mxu0 0
      %4841 = vmatmul.mubr.bf16.gmra.mxu0 %v4695
      %v4842 = vpop.f32.mrf.mxu0
      %v4843 = vadd.f32 %v4727, %v4842
      %v4844 = vpop.f32.mrf.mxu0
      %v4845 = vpop.f32.mrf.mxu0
      %v4846 = vadd.f32 %v4727, %v4845
      %v4847 = vpop.f32.mrf.mxu0
      %4848 = vmatprep.mubr.bf16.mxu0 0
      %4849 = vmatmul.mubr.bf16.gmra.mxu0 %v4696
      %v4850 = vpop.f32.mrf.mxu0
      %v4851 = vadd.f32 %v4727, %v4850
      %v4852 = vpop.f32.mrf.mxu0
      %v4853 = vpop.f32.mrf.mxu0
      %v4854 = vadd.f32 %v4727, %v4853
      %v4855 = vpop.f32.mrf.mxu0
      %4856 = vmatprep.mubr.bf16.mxu0 0
      %4857 = vmatmul.mubr.bf16.gmra.mxu0 %v4697
      %v4858 = vpop.f32.mrf.mxu0
      %v4859 = vadd.f32 %v4727, %v4858
      %v4860 = vpop.f32.mrf.mxu0
      %v4861 = vpop.f32.mrf.mxu0
      %v4862 = vadd.f32 %v4727, %v4861
      %v4863 = vpop.f32.mrf.mxu0
      %4864 = vmatprep.mubr.bf16.mxu0 0
      %4865 = vmatmul.mubr.bf16.gmra.mxu0 %v4698
      %v4866 = vpop.f32.mrf.mxu0
      %v4867 = vadd.f32 %v4727, %v4866
      %v4868 = vpop.f32.mrf.mxu0
      %v4869 = vpop.f32.mrf.mxu0
      %v4870 = vadd.f32 %v4727, %v4869
      %v4871 = vpop.f32.mrf.mxu0
      %4872 = vmatprep.mubr.bf16.mxu0 0
      %4873 = vmatmul.mubr.bf16.gmra.mxu0 %v4699
      %v4874 = vpop.f32.mrf.mxu0
      %v4875 = vadd.f32 %v4727, %v4874
      %v4876 = vpop.f32.mrf.mxu0
      %v4877 = vpop.f32.mrf.mxu0
      %v4878 = vadd.f32 %v4727, %v4877
      %v4879 = vpop.f32.mrf.mxu0
      %4880 = vmatprep.mubr.bf16.mxu0 0
      %4881 = vmatmul.mubr.bf16.gmra.mxu0 %v4700
      %v4882 = vpop.f32.mrf.mxu0
      %v4883 = vadd.f32 %v4727, %v4882
      %v4884 = vpop.f32.mrf.mxu0
      %v4885 = vpop.f32.mrf.mxu0
      %v4886 = vadd.f32 %v4727, %v4885
      %v4887 = vpop.f32.mrf.mxu0
      %4888 = vmatprep.mubr.bf16.mxu0 0
      %4889 = vmatmul.mubr.bf16.gmra.mxu0 %v4701
      %v4890 = vpop.f32.mrf.mxu0
      %v4891 = vadd.f32 %v4727, %v4890
      %v4892 = vpop.f32.mrf.mxu0
      %v4893 = vpop.f32.mrf.mxu0
      %v4894 = vadd.f32 %v4727, %v4893
      %v4895 = vpop.f32.mrf.mxu0
      %4896 = vmatprep.mubr.bf16.mxu0 0
      %4897 = vmatmul.mubr.bf16.gmra.mxu0 %v4702
      %v4898 = vpop.f32.mrf.mxu0
      %v4899 = vadd.f32 %v4727, %v4898
      %v4900 = vpop.f32.mrf.mxu0
      %v4901 = vpop.f32.mrf.mxu0
      %v4902 = vadd.f32 %v4727, %v4901
      %v4903 = vpop.f32.mrf.mxu0
      %4904 = vmatprep.mubr.bf16.mxu0 0
      %4905 = vmatmul.mubr.bf16.gmra.mxu0 %v4703
      %v4906 = vpop.f32.mrf.mxu0
      %v4907 = vadd.f32 %v4727, %v4906
      %v4908 = vpop.f32.mrf.mxu0
      %v4909 = vpop.f32.mrf.mxu0
      %v4910 = vadd.f32 %v4727, %v4909
      %v4911 = vpop.f32.mrf.mxu0
      %4912 = vmatprep.mubr.bf16.mxu0 0
      %4913 = vmatmul.mubr.bf16.gmra.mxu0 %v4704
      %v4914 = vpop.f32.mrf.mxu0
      %v4915 = vadd.f32 %v4727, %v4914
      %v4916 = vpop.f32.mrf.mxu0
      %v4917 = vpop.f32.mrf.mxu0
      %v4918 = vadd.f32 %v4727, %v4917
      %v4919 = vpop.f32.mrf.mxu0
      %4920 = vmatprep.mubr.bf16.mxu0 0
      %4921 = vmatmul.mubr.bf16.gmra.mxu0 %v4705
      %v4922 = vpop.f32.mrf.mxu0
      %v4923 = vadd.f32 %v4727, %v4922
      %v4924 = vpop.f32.mrf.mxu0
      %v4925 = vpop.f32.mrf.mxu0
      %v4926 = vadd.f32 %v4727, %v4925
      %v4927 = vpop.f32.mrf.mxu0
      %4928 = vmatprep.mubr.bf16.mxu0 0
      %4929 = vmatmul.mubr.bf16.gmra.mxu0 %v4706
      %v4930 = vpop.f32.mrf.mxu0
      %v4931 = vadd.f32 %v4727, %v4930
      %v4932 = vpop.f32.mrf.mxu0
      %v4933 = vpop.f32.mrf.mxu0
      %v4934 = vadd.f32 %v4727, %v4933
      %v4935 = vpop.f32.mrf.mxu0
      %4936 = vdwg.mxu0
      %v4937 = vmax.f32 %v4811, 0.0
      %v4938 = vmax.f32 %v4814, 0.0
      %v4939 = vmax.f32 %v4819, 0.0
      %v4940 = vmax.f32 %v4822, 0.0
      %v4941 = vmax.f32 %v4827, 0.0
      %v4942 = vmax.f32 %v4830, 0.0
      %v4943 = vmax.f32 %v4835, 0.0
      %v4944 = vmax.f32 %v4838, 0.0
      %v4945 = vmax.f32 %v4843, 0.0
      %v4946 = vmax.f32 %v4846, 0.0
      %v4947 = vmax.f32 %v4851, 0.0
      %v4948 = vmax.f32 %v4854, 0.0
      %v4949 = vmax.f32 %v4859, 0.0
      %v4950 = vmax.f32 %v4862, 0.0
      %v4951 = vmax.f32 %v4867, 0.0
      %v4952 = vmax.f32 %v4870, 0.0
      %v4953 = vmax.f32 %v4875, 0.0
      %v4954 = vmax.f32 %v4878, 0.0
      %v4955 = vmax.f32 %v4883, 0.0
      %v4956 = vmax.f32 %v4886, 0.0
      %v4957 = vmax.f32 %v4891, 0.0
      %v4958 = vmax.f32 %v4894, 0.0
      %v4959 = vmax.f32 %v4899, 0.0
      %v4960 = vmax.f32 %v4902, 0.0
      %v4961 = vmax.f32 %v4907, 0.0
      %v4962 = vmax.f32 %v4910, 0.0
      %v4963 = vmax.f32 %v4915, 0.0
      %v4964 = vmax.f32 %v4918, 0.0
      %v4965 = vmax.f32 %v4923, 0.0
      %v4966 = vmax.f32 %v4926, 0.0
      %v4967 = vmax.f32 %v4931, 0.0
      %v4968 = vmax.f32 %v4934, 0.0
      %v4969 = vpack.c.bf16 %v4938, %v4937
      %v4970 = vpack.c.bf16 %v4940, %v4939
      %v4971 = vpack.c.bf16 %v4942, %v4941
      %v4972 = vpack.c.bf16 %v4944, %v4943
      %v4973 = vpack.c.bf16 %v4946, %v4945
      %v4974 = vpack.c.bf16 %v4948, %v4947
      %v4975 = vpack.c.bf16 %v4950, %v4949
      %v4976 = vpack.c.bf16 %v4952, %v4951
      %v4977 = vpack.c.bf16 %v4954, %v4953
      %v4978 = vpack.c.bf16 %v4956, %v4955
      %v4979 = vpack.c.bf16 %v4958, %v4957
      %v4980 = vpack.c.bf16 %v4960, %v4959
      %v4981 = vpack.c.bf16 %v4962, %v4961
      %v4982 = vpack.c.bf16 %v4964, %v4963
      %v4983 = vpack.c.bf16 %v4966, %v4965
      %v4984 = vpack.c.bf16 %v4968, %v4967
      %v4985 = vld [vmem:[%s7] sm:$0xf]
      %v4986 = vld [vmem:[%s7 + $0x4] sm:$0xf]
      %v4987 = vld [vmem:[%s7 + $0x8] sm:$0xf]
      %v4988 = vld [vmem:[%s7 + $0xc] sm:$0xf]
      %v4989 = vld [vmem:[%s7 + $0x10] sm:$0xf]
      %v4990 = vld [vmem:[%s7 + $0x14] sm:$0xf]
      %v4991 = vld [vmem:[%s7 + $0x18] sm:$0xf]
      %v4992 = vld [vmem:[%s7 + $0x1c] sm:$0xf]
      %v4993 = vld [vmem:[%s7 + $0x20] sm:$0xf]
      %v4994 = vld [vmem:[%s7 + $0x24] sm:$0xf]
      %v4995 = vld [vmem:[%s7 + $0x28] sm:$0xf]
      %v4996 = vld [vmem:[%s7 + $0x2c] sm:$0xf]
      %v4997 = vld [vmem:[%s7 + $0x30] sm:$0xf]
      %v4998 = vld [vmem:[%s7 + $0x34] sm:$0xf]
      %v4999 = vld [vmem:[%s7 + $0x38] sm:$0xf]
      %v5000 = vld [vmem:[%s7 + $0x3c] sm:$0xf]
      %v5001 = vld [vmem:[%s9 + $0x7] sm:$0x1]
      %v5002 = vlaneseq
      %v5003 = vshrl.u32 %v5002, 7
      %v5004 = vsub.s32 0, %v5003
      %v5005 = vrot.slane %v5001, %v5004
      %v5022 = vunpack.c.l.b16 %v4985
      %v5023 = vunpack.c.l.b16 %v4986
      %v5024 = vunpack.c.l.b16 %v4987
      %v5025 = vunpack.c.l.b16 %v4988
      %v5026 = vunpack.c.l.b16 %v4989
      %v5027 = vunpack.c.l.b16 %v4990
      %v5028 = vunpack.c.l.b16 %v4991
      %v5029 = vunpack.c.l.b16 %v4992
      %v5030 = vunpack.c.l.b16 %v4993
      %v5031 = vunpack.c.l.b16 %v4994
      %v5032 = vunpack.c.l.b16 %v4995
      %v5033 = vunpack.c.l.b16 %v4996
      %v5034 = vunpack.c.l.b16 %v4997
      %v5035 = vunpack.c.l.b16 %v4998
      %v5036 = vunpack.c.l.b16 %v4999
      %v5037 = vunpack.c.l.b16 %v5000
      %v5038 = vpack.c.b16 %v5023, %v5022
      %v5039 = vpack.c.b16 %v5025, %v5024
      %v5040 = vpack.c.b16 %v5027, %v5026
      %v5041 = vpack.c.b16 %v5029, %v5028
      %v5042 = vpack.c.b16 %v5031, %v5030
      %v5043 = vpack.c.b16 %v5033, %v5032
      %v5044 = vpack.c.b16 %v5035, %v5034
      %v5045 = vpack.c.b16 %v5037, %v5036
      %5054 = vmatprep.subr.bf16.mxu0 0
      %5055 = vmatpush1.bf16.msra.mxu0 %v5045
      %5056 = vmatprep.subr.bf16.mxu0 0
      %5057 = vmatpush1.bf16.msra.mxu0 %v5044
      %5058 = vmatprep.subr.bf16.mxu0 0
      %5059 = vmatpush1.bf16.msra.mxu0 %v5043
      %5060 = vmatprep.subr.bf16.mxu0 0
      %5061 = vmatpush1.bf16.msra.mxu0 %v5042
      %5062 = vmatprep.subr.bf16.mxu0 0
      %5063 = vmatpush1.bf16.msra.mxu0 %v5041
      %5064 = vmatprep.subr.bf16.mxu0 0
      %5065 = vmatpush1.bf16.msra.mxu0 %v5040
      %5066 = vmatprep.subr.bf16.mxu0 0
      %5067 = vmatpush1.bf16.msra.mxu0 %v5039
      %5068 = vmatprep.subr.bf16.mxu0 0
      %5069 = vmatpush1.bf16.msra.mxu0 %v5038
      %5070 = vmatprep.subr.bf16.mxu0 0
      %5071 = vmatpush2.bf16.msra.mxu0 0
      %5072 = vmatprep.subr.bf16.mxu0 0
      %5073 = vmatpush2.bf16.msra.mxu0 0
      %5074 = vmatprep.subr.bf16.mxu0 0
      %5075 = vmatpush2.bf16.msra.mxu0 0
      %5076 = vmatprep.subr.bf16.mxu0 0
      %5077 = vmatpush2.bf16.msra.mxu0 0
      %5078 = vmatprep.subr.bf16.mxu0 0
      %5079 = vmatpush2.bf16.msra.mxu0 0
      %5080 = vmatprep.subr.bf16.mxu0 0
      %5081 = vmatpush2.bf16.msra.mxu0 0
      %5082 = vmatprep.subr.bf16.mxu0 0
      %5083 = vmatpush2.bf16.msra.mxu0 0
      %5084 = vmatprep.subr.bf16.mxu0 0
      %5085 = vmatpush2.bf16.msra.mxu0 0
      %5086 = vmatprep.mubr.bf16.mxu0 0
      %5087 = vmatmul.mubr.bf16.gmra.mxu0 %v4969
      %v5088 = vpop.f32.mrf.mxu0
      %v5089 = vadd.f32 %v5005, %v5088
      %v5090 = vpop.f32.mrf.mxu0
      %v5091 = vpop.f32.mrf.mxu0
      %v5092 = vadd.f32 %v5005, %v5091
      %v5093 = vpop.f32.mrf.mxu0
      %5094 = vmatprep.mubr.bf16.mxu0 0
      %5095 = vmatmul.mubr.bf16.gmra.mxu0 %v4970
      %v5096 = vpop.f32.mrf.mxu0
      %v5097 = vadd.f32 %v5005, %v5096
      %v5098 = vpop.f32.mrf.mxu0
      %v5099 = vpop.f32.mrf.mxu0
      %v5100 = vadd.f32 %v5005, %v5099
      %v5101 = vpop.f32.mrf.mxu0
      %5102 = vmatprep.mubr.bf16.mxu0 0
      %5103 = vmatmul.mubr.bf16.gmra.mxu0 %v4971
      %v5104 = vpop.f32.mrf.mxu0
      %v5105 = vadd.f32 %v5005, %v5104
      %v5106 = vpop.f32.mrf.mxu0
      %v5107 = vpop.f32.mrf.mxu0
      %v5108 = vadd.f32 %v5005, %v5107
      %v5109 = vpop.f32.mrf.mxu0
      %5110 = vmatprep.mubr.bf16.mxu0 0
      %5111 = vmatmul.mubr.bf16.gmra.mxu0 %v4972
      %v5112 = vpop.f32.mrf.mxu0
      %v5113 = vadd.f32 %v5005, %v5112
      %v5114 = vpop.f32.mrf.mxu0
      %v5115 = vpop.f32.mrf.mxu0
      %v5116 = vadd.f32 %v5005, %v5115
      %v5117 = vpop.f32.mrf.mxu0
      %5118 = vmatprep.mubr.bf16.mxu0 0
      %5119 = vmatmul.mubr.bf16.gmra.mxu0 %v4973
      %v5120 = vpop.f32.mrf.mxu0
      %v5121 = vadd.f32 %v5005, %v5120
      %v5122 = vpop.f32.mrf.mxu0
      %v5123 = vpop.f32.mrf.mxu0
      %v5124 = vadd.f32 %v5005, %v5123
      %v5125 = vpop.f32.mrf.mxu0
      %5126 = vmatprep.mubr.bf16.mxu0 0
      %5127 = vmatmul.mubr.bf16.gmra.mxu0 %v4974
      %v5128 = vpop.f32.mrf.mxu0
      %v5129 = vadd.f32 %v5005, %v5128
      %v5130 = vpop.f32.mrf.mxu0
      %v5131 = vpop.f32.mrf.mxu0
      %v5132 = vadd.f32 %v5005, %v5131
      %v5133 = vpop.f32.mrf.mxu0
      %5134 = vmatprep.mubr.bf16.mxu0 0
      %5135 = vmatmul.mubr.bf16.gmra.mxu0 %v4975
      %v5136 = vpop.f32.mrf.mxu0
      %v5137 = vadd.f32 %v5005, %v5136
      %v5138 = vpop.f32.mrf.mxu0
      %v5139 = vpop.f32.mrf.mxu0
      %v5140 = vadd.f32 %v5005, %v5139
      %v5141 = vpop.f32.mrf.mxu0
      %5142 = vmatprep.mubr.bf16.mxu0 0
      %5143 = vmatmul.mubr.bf16.gmra.mxu0 %v4976
      %v5144 = vpop.f32.mrf.mxu0
      %v5145 = vadd.f32 %v5005, %v5144
      %v5146 = vpop.f32.mrf.mxu0
      %v5147 = vpop.f32.mrf.mxu0
      %v5148 = vadd.f32 %v5005, %v5147
      %v5149 = vpop.f32.mrf.mxu0
      %5150 = vmatprep.mubr.bf16.mxu0 0
      %5151 = vmatmul.mubr.bf16.gmra.mxu0 %v4977
      %v5152 = vpop.f32.mrf.mxu0
      %v5153 = vadd.f32 %v5005, %v5152
      %v5154 = vpop.f32.mrf.mxu0
      %v5155 = vpop.f32.mrf.mxu0
      %v5156 = vadd.f32 %v5005, %v5155
      %v5157 = vpop.f32.mrf.mxu0
      %5158 = vmatprep.mubr.bf16.mxu0 0
      %5159 = vmatmul.mubr.bf16.gmra.mxu0 %v4978
      %v5160 = vpop.f32.mrf.mxu0
      %v5161 = vadd.f32 %v5005, %v5160
      %v5162 = vpop.f32.mrf.mxu0
      %v5163 = vpop.f32.mrf.mxu0
      %v5164 = vadd.f32 %v5005, %v5163
      %v5165 = vpop.f32.mrf.mxu0
      %5166 = vmatprep.mubr.bf16.mxu0 0
      %5167 = vmatmul.mubr.bf16.gmra.mxu0 %v4979
      %v5168 = vpop.f32.mrf.mxu0
      %v5169 = vadd.f32 %v5005, %v5168
      %v5170 = vpop.f32.mrf.mxu0
      %v5171 = vpop.f32.mrf.mxu0
      %v5172 = vadd.f32 %v5005, %v5171
      %v5173 = vpop.f32.mrf.mxu0
      %5174 = vmatprep.mubr.bf16.mxu0 0
      %5175 = vmatmul.mubr.bf16.gmra.mxu0 %v4980
      %v5176 = vpop.f32.mrf.mxu0
      %v5177 = vadd.f32 %v5005, %v5176
      %v5178 = vpop.f32.mrf.mxu0
      %v5179 = vpop.f32.mrf.mxu0
      %v5180 = vadd.f32 %v5005, %v5179
      %v5181 = vpop.f32.mrf.mxu0
      %5182 = vmatprep.mubr.bf16.mxu0 0
      %5183 = vmatmul.mubr.bf16.gmra.mxu0 %v4981
      %v5184 = vpop.f32.mrf.mxu0
      %v5185 = vadd.f32 %v5005, %v5184
      %v5186 = vpop.f32.mrf.mxu0
      %v5187 = vpop.f32.mrf.mxu0
      %v5188 = vadd.f32 %v5005, %v5187
      %v5189 = vpop.f32.mrf.mxu0
      %5190 = vmatprep.mubr.bf16.mxu0 0
      %5191 = vmatmul.mubr.bf16.gmra.mxu0 %v4982
      %v5192 = vpop.f32.mrf.mxu0
      %v5193 = vadd.f32 %v5005, %v5192
      %v5194 = vpop.f32.mrf.mxu0
      %v5195 = vpop.f32.mrf.mxu0
      %v5196 = vadd.f32 %v5005, %v5195
      %v5197 = vpop.f32.mrf.mxu0
      %5198 = vmatprep.mubr.bf16.mxu0 0
      %5199 = vmatmul.mubr.bf16.gmra.mxu0 %v4983
      %v5200 = vpop.f32.mrf.mxu0
      %v5201 = vadd.f32 %v5005, %v5200
      %v5202 = vpop.f32.mrf.mxu0
      %v5203 = vpop.f32.mrf.mxu0
      %v5204 = vadd.f32 %v5005, %v5203
      %v5205 = vpop.f32.mrf.mxu0
      %5206 = vmatprep.mubr.bf16.mxu0 0
      %5207 = vmatmul.mubr.bf16.gmra.mxu0 %v4984
      %v5208 = vpop.f32.mrf.mxu0
      %v5209 = vadd.f32 %v5005, %v5208
      %v5210 = vpop.f32.mrf.mxu0
      %v5211 = vpop.f32.mrf.mxu0
      %v5212 = vadd.f32 %v5005, %v5211
      %v5213 = vpop.f32.mrf.mxu0
      %5214 = vdwg.mxu0
      %v5215 = vpack.c.bf16 %v5092, %v5089
      %v5216 = vpack.c.bf16 %v5100, %v5097
      %v5217 = vpack.c.bf16 %v5108, %v5105
      %v5218 = vpack.c.bf16 %v5116, %v5113
      %v5219 = vpack.c.bf16 %v5124, %v5121
      %v5220 = vpack.c.bf16 %v5132, %v5129
      %v5221 = vpack.c.bf16 %v5140, %v5137
      %v5222 = vpack.c.bf16 %v5148, %v5145
      %v5223 = vpack.c.bf16 %v5156, %v5153
      %v5224 = vpack.c.bf16 %v5164, %v5161
      %v5225 = vpack.c.bf16 %v5172, %v5169
      %v5226 = vpack.c.bf16 %v5180, %v5177
      %v5227 = vpack.c.bf16 %v5188, %v5185
      %v5228 = vpack.c.bf16 %v5196, %v5193
      %v5229 = vpack.c.bf16 %v5204, %v5201
      %v5230 = vpack.c.bf16 %v5212, %v5209
      %v5231 = vld [vmem:[%s8] sm:$0xf]
      %v5232 = vld [vmem:[%s8 + $0x4] sm:$0xf]
      %v5233 = vld [vmem:[%s8 + $0x8] sm:$0xf]
      %v5234 = vld [vmem:[%s8 + $0xc] sm:$0xf]
      %v5235 = vld [vmem:[%s8 + $0x10] sm:$0xf]
      %v5236 = vld [vmem:[%s8 + $0x14] sm:$0xf]
      %v5237 = vld [vmem:[%s8 + $0x18] sm:$0xf]
      %v5238 = vld [vmem:[%s8 + $0x1c] sm:$0xf]
      %v5239 = vld [vmem:[%s8 + $0x20] sm:$0xf]
      %v5240 = vld [vmem:[%s8 + $0x24] sm:$0xf]
      %v5241 = vld [vmem:[%s8 + $0x28] sm:$0xf]
      %v5242 = vld [vmem:[%s8 + $0x2c] sm:$0xf]
      %v5243 = vld [vmem:[%s8 + $0x30] sm:$0xf]
      %v5244 = vld [vmem:[%s8 + $0x34] sm:$0xf]
      %v5245 = vld [vmem:[%s8 + $0x38] sm:$0xf]
      %v5246 = vld [vmem:[%s8 + $0x3c] sm:$0xf]
      %v5247 = vld [vmem:[%s9 + $0x8] sm:$0x1]
      %v5248 = vlaneseq
      %v5249 = vshrl.u32 %v5248, 7
      %v5250 = vsub.s32 0, %v5249
      %v5251 = vrot.slane %v5247, %v5250
      %v5268 = vunpack.c.l.b16 %v5231
      %v5269 = vunpack.c.l.b16 %v5232
      %v5270 = vunpack.c.l.b16 %v5233
      %v5271 = vunpack.c.l.b16 %v5234
      %v5272 = vunpack.c.l.b16 %v5235
      %v5273 = vunpack.c.l.b16 %v5236
      %v5274 = vunpack.c.l.b16 %v5237
      %v5275 = vunpack.c.l.b16 %v5238
      %v5276 = vunpack.c.l.b16 %v5239
      %v5277 = vunpack.c.l.b16 %v5240
      %v5278 = vunpack.c.l.b16 %v5241
      %v5279 = vunpack.c.l.b16 %v5242
      %v5280 = vunpack.c.l.b16 %v5243
      %v5281 = vunpack.c.l.b16 %v5244
      %v5282 = vunpack.c.l.b16 %v5245
      %v5283 = vunpack.c.l.b16 %v5246
      %v5284 = vpack.c.b16 %v5269, %v5268
      %v5285 = vpack.c.b16 %v5271, %v5270
      %v5286 = vpack.c.b16 %v5273, %v5272
      %v5287 = vpack.c.b16 %v5275, %v5274
      %v5288 = vpack.c.b16 %v5277, %v5276
      %v5289 = vpack.c.b16 %v5279, %v5278
      %v5290 = vpack.c.b16 %v5281, %v5280
      %v5291 = vpack.c.b16 %v5283, %v5282
      %5300 = vmatprep.subr.bf16.mxu0 0
      %5301 = vmatpush1.bf16.msra.mxu0 %v5291
      %5302 = vmatprep.subr.bf16.mxu0 0
      %5303 = vmatpush1.bf16.msra.mxu0 %v5290
      %5304 = vmatprep.subr.bf16.mxu0 0
      %5305 = vmatpush1.bf16.msra.mxu0 %v5289
      %5306 = vmatprep.subr.bf16.mxu0 0
      %5307 = vmatpush1.bf16.msra.mxu0 %v5288
      %5308 = vmatprep.subr.bf16.mxu0 0
      %5309 = vmatpush1.bf16.msra.mxu0 %v5287
      %5310 = vmatprep.subr.bf16.mxu0 0
      %5311 = vmatpush1.bf16.msra.mxu0 %v5286
      %5312 = vmatprep.subr.bf16.mxu0 0
      %5313 = vmatpush1.bf16.msra.mxu0 %v5285
      %5314 = vmatprep.subr.bf16.mxu0 0
      %5315 = vmatpush1.bf16.msra.mxu0 %v5284
      %5316 = vmatprep.subr.bf16.mxu0 0
      %5317 = vmatpush2.bf16.msra.mxu0 0
      %5318 = vmatprep.subr.bf16.mxu0 0
      %5319 = vmatpush2.bf16.msra.mxu0 0
      %5320 = vmatprep.subr.bf16.mxu0 0
      %5321 = vmatpush2.bf16.msra.mxu0 0
      %5322 = vmatprep.subr.bf16.mxu0 0
      %5323 = vmatpush2.bf16.msra.mxu0 0
      %5324 = vmatprep.subr.bf16.mxu0 0
      %5325 = vmatpush2.bf16.msra.mxu0 0
      %5326 = vmatprep.subr.bf16.mxu0 0
      %5327 = vmatpush2.bf16.msra.mxu0 0
      %5328 = vmatprep.subr.bf16.mxu0 0
      %5329 = vmatpush2.bf16.msra.mxu0 0
      %5330 = vmatprep.subr.bf16.mxu0 0
      %5331 = vmatpush2.bf16.msra.mxu0 0
      %5332 = vmatprep.mubr.bf16.mxu0 0
      %5333 = vmatmul.mubr.bf16.gmra.mxu0 %v5215
      %v5334 = vpop.f32.mrf.mxu0
      %v5335 = vadd.f32 %v5251, %v5334
      %v5336 = vpop.f32.mrf.mxu0
      %v5337 = vpop.f32.mrf.mxu0
      %v5338 = vadd.f32 %v5251, %v5337
      %v5339 = vpop.f32.mrf.mxu0
      %5340 = vmatprep.mubr.bf16.mxu0 0
      %5341 = vmatmul.mubr.bf16.gmra.mxu0 %v5216
      %v5342 = vpop.f32.mrf.mxu0
      %v5343 = vadd.f32 %v5251, %v5342
      %v5344 = vpop.f32.mrf.mxu0
      %v5345 = vpop.f32.mrf.mxu0
      %v5346 = vadd.f32 %v5251, %v5345
      %v5347 = vpop.f32.mrf.mxu0
      %5348 = vmatprep.mubr.bf16.mxu0 0
      %5349 = vmatmul.mubr.bf16.gmra.mxu0 %v5217
      %v5350 = vpop.f32.mrf.mxu0
      %v5351 = vadd.f32 %v5251, %v5350
      %v5352 = vpop.f32.mrf.mxu0
      %v5353 = vpop.f32.mrf.mxu0
      %v5354 = vadd.f32 %v5251, %v5353
      %v5355 = vpop.f32.mrf.mxu0
      %5356 = vmatprep.mubr.bf16.mxu0 0
      %5357 = vmatmul.mubr.bf16.gmra.mxu0 %v5218
      %v5358 = vpop.f32.mrf.mxu0
      %v5359 = vadd.f32 %v5251, %v5358
      %v5360 = vpop.f32.mrf.mxu0
      %v5361 = vpop.f32.mrf.mxu0
      %v5362 = vadd.f32 %v5251, %v5361
      %v5363 = vpop.f32.mrf.mxu0
      %5364 = vmatprep.mubr.bf16.mxu0 0
      %5365 = vmatmul.mubr.bf16.gmra.mxu0 %v5219
      %v5366 = vpop.f32.mrf.mxu0
      %v5367 = vadd.f32 %v5251, %v5366
      %v5368 = vpop.f32.mrf.mxu0
      %v5369 = vpop.f32.mrf.mxu0
      %v5370 = vadd.f32 %v5251, %v5369
      %v5371 = vpop.f32.mrf.mxu0
      %5372 = vmatprep.mubr.bf16.mxu0 0
      %5373 = vmatmul.mubr.bf16.gmra.mxu0 %v5220
      %v5374 = vpop.f32.mrf.mxu0
      %v5375 = vadd.f32 %v5251, %v5374
      %v5376 = vpop.f32.mrf.mxu0
      %v5377 = vpop.f32.mrf.mxu0
      %v5378 = vadd.f32 %v5251, %v5377
      %v5379 = vpop.f32.mrf.mxu0
      %5380 = vmatprep.mubr.bf16.mxu0 0
      %5381 = vmatmul.mubr.bf16.gmra.mxu0 %v5221
      %v5382 = vpop.f32.mrf.mxu0
      %v5383 = vadd.f32 %v5251, %v5382
      %v5384 = vpop.f32.mrf.mxu0
      %v5385 = vpop.f32.mrf.mxu0
      %v5386 = vadd.f32 %v5251, %v5385
      %v5387 = vpop.f32.mrf.mxu0
      %5388 = vmatprep.mubr.bf16.mxu0 0
      %5389 = vmatmul.mubr.bf16.gmra.mxu0 %v5222
      %v5390 = vpop.f32.mrf.mxu0
      %v5391 = vadd.f32 %v5251, %v5390
      %v5392 = vpop.f32.mrf.mxu0
      %v5393 = vpop.f32.mrf.mxu0
      %v5394 = vadd.f32 %v5251, %v5393
      %v5395 = vpop.f32.mrf.mxu0
      %5396 = vmatprep.mubr.bf16.mxu0 0
      %5397 = vmatmul.mubr.bf16.gmra.mxu0 %v5223
      %v5398 = vpop.f32.mrf.mxu0
      %v5399 = vadd.f32 %v5251, %v5398
      %v5400 = vpop.f32.mrf.mxu0
      %v5401 = vpop.f32.mrf.mxu0
      %v5402 = vadd.f32 %v5251, %v5401
      %v5403 = vpop.f32.mrf.mxu0
      %5404 = vmatprep.mubr.bf16.mxu0 0
      %5405 = vmatmul.mubr.bf16.gmra.mxu0 %v5224
      %v5406 = vpop.f32.mrf.mxu0
      %v5407 = vadd.f32 %v5251, %v5406
      %v5408 = vpop.f32.mrf.mxu0
      %v5409 = vpop.f32.mrf.mxu0
      %v5410 = vadd.f32 %v5251, %v5409
      %v5411 = vpop.f32.mrf.mxu0
      %5412 = vmatprep.mubr.bf16.mxu0 0
      %5413 = vmatmul.mubr.bf16.gmra.mxu0 %v5225
      %v5414 = vpop.f32.mrf.mxu0
      %v5415 = vadd.f32 %v5251, %v5414
      %v5416 = vpop.f32.mrf.mxu0
      %v5417 = vpop.f32.mrf.mxu0
      %v5418 = vadd.f32 %v5251, %v5417
      %v5419 = vpop.f32.mrf.mxu0
      %5420 = vmatprep.mubr.bf16.mxu0 0
      %5421 = vmatmul.mubr.bf16.gmra.mxu0 %v5226
      %v5422 = vpop.f32.mrf.mxu0
      %v5423 = vadd.f32 %v5251, %v5422
      %v5424 = vpop.f32.mrf.mxu0
      %v5425 = vpop.f32.mrf.mxu0
      %v5426 = vadd.f32 %v5251, %v5425
      %v5427 = vpop.f32.mrf.mxu0
      %5428 = vmatprep.mubr.bf16.mxu0 0
      %5429 = vmatmul.mubr.bf16.gmra.mxu0 %v5227
      %v5430 = vpop.f32.mrf.mxu0
      %v5431 = vadd.f32 %v5251, %v5430
      %v5432 = vpop.f32.mrf.mxu0
      %v5433 = vpop.f32.mrf.mxu0
      %v5434 = vadd.f32 %v5251, %v5433
      %v5435 = vpop.f32.mrf.mxu0
      %5436 = vmatprep.mubr.bf16.mxu0 0
      %5437 = vmatmul.mubr.bf16.gmra.mxu0 %v5228
      %v5438 = vpop.f32.mrf.mxu0
      %v5439 = vadd.f32 %v5251, %v5438
      %v5440 = vpop.f32.mrf.mxu0
      %v5441 = vpop.f32.mrf.mxu0
      %v5442 = vadd.f32 %v5251, %v5441
      %v5443 = vpop.f32.mrf.mxu0
      %5444 = vmatprep.mubr.bf16.mxu0 0
      %5445 = vmatmul.mubr.bf16.gmra.mxu0 %v5229
      %v5446 = vpop.f32.mrf.mxu0
      %v5447 = vadd.f32 %v5251, %v5446
      %v5448 = vpop.f32.mrf.mxu0
      %v5449 = vpop.f32.mrf.mxu0
      %v5450 = vadd.f32 %v5251, %v5449
      %v5451 = vpop.f32.mrf.mxu0
      %5452 = vmatprep.mubr.bf16.mxu0 0
      %5453 = vmatmul.mubr.bf16.gmra.mxu0 %v5230
      %v5454 = vpop.f32.mrf.mxu0
      %v5455 = vadd.f32 %v5251, %v5454
      %v5456 = vpop.f32.mrf.mxu0
      %v5457 = vpop.f32.mrf.mxu0
      %v5458 = vadd.f32 %v5251, %v5457
      %v5459 = vpop.f32.mrf.mxu0
      %5460 = vdwg.mxu0
      %vm5461 = vcmp.ge.s32.totalorder %v400, 20
      %vm5462 = vcmp.lt.s32.totalorder %v400, 40
      %vm5463 = vmand %vm5461, %vm5462
      %vm5464 = vcmp.ge.s32.totalorder %v400, 40
      %vm5465 = vcmp.lt.s32.totalorder %v400, 60
      %vm5466 = vmand %vm5464, %vm5465
      %v5467 = vmax.f32 %v5335, 0.0
      %v5468 = vmax.f32 %v5338, 0.0
      %v5469 = vmax.f32 %v5343, 0.0
      %v5470 = vmax.f32 %v5346, 0.0
      %v5471 = vmax.f32 %v5351, 0.0
      %v5472 = vmax.f32 %v5354, 0.0
      %v5473 = vmax.f32 %v5359, 0.0
      %v5474 = vmax.f32 %v5362, 0.0
      %v5475 = vmax.f32 %v5367, 0.0
      %v5476 = vmax.f32 %v5370, 0.0
      %v5477 = vmax.f32 %v5375, 0.0
      %v5478 = vmax.f32 %v5378, 0.0
      %v5479 = vmax.f32 %v5383, 0.0
      %v5480 = vmax.f32 %v5386, 0.0
      %v5481 = vmax.f32 %v5391, 0.0
      %v5482 = vmax.f32 %v5394, 0.0
      %v5483 = vmax.f32 %v5399, 0.0
      %v5484 = vmax.f32 %v5402, 0.0
      %v5485 = vmax.f32 %v5407, 0.0
      %v5486 = vmax.f32 %v5410, 0.0
      %v5487 = vmax.f32 %v5415, 0.0
      %v5488 = vmax.f32 %v5418, 0.0
      %v5489 = vmax.f32 %v5423, 0.0
      %v5490 = vmax.f32 %v5426, 0.0
      %v5491 = vmax.f32 %v5431, 0.0
      %v5492 = vmax.f32 %v5434, 0.0
      %v5493 = vmax.f32 %v5439, 0.0
      %v5494 = vmax.f32 %v5442, 0.0
      %v5495 = vmax.f32 %v5447, 0.0
      %v5496 = vmax.f32 %v5450, 0.0
      %v5497 = vmax.f32 %v5455, 0.0
      %v5498 = vmax.f32 %v5458, 0.0
      %v5499 = vand.u32 2147483647, %v5335
      %v5500 = vand.u32 2147483647, %v5338
      %v5501 = vand.u32 2147483647, %v5343
      %v5502 = vand.u32 2147483647, %v5346
      %v5503 = vand.u32 2147483647, %v5351
      %v5504 = vand.u32 2147483647, %v5354
      %v5505 = vand.u32 2147483647, %v5359
      %v5506 = vand.u32 2147483647, %v5362
      %v5507 = vand.u32 2147483647, %v5367
      %v5508 = vand.u32 2147483647, %v5370
      %v5509 = vand.u32 2147483647, %v5375
      %v5510 = vand.u32 2147483647, %v5378
      %v5511 = vand.u32 2147483647, %v5383
      %v5512 = vand.u32 2147483647, %v5386
      %v5513 = vand.u32 2147483647, %v5391
      %v5514 = vand.u32 2147483647, %v5394
      %v5515 = vand.u32 2147483647, %v5399
      %v5516 = vand.u32 2147483647, %v5402
      %v5517 = vand.u32 2147483647, %v5407
      %v5518 = vand.u32 2147483647, %v5410
      %v5519 = vand.u32 2147483647, %v5415
      %v5520 = vand.u32 2147483647, %v5418
      %v5521 = vand.u32 2147483647, %v5423
      %v5522 = vand.u32 2147483647, %v5426
      %v5523 = vand.u32 2147483647, %v5431
      %v5524 = vand.u32 2147483647, %v5434
      %v5525 = vand.u32 2147483647, %v5439
      %v5526 = vand.u32 2147483647, %v5442
      %v5527 = vand.u32 2147483647, %v5447
      %v5528 = vand.u32 2147483647, %v5450
      %v5529 = vand.u32 2147483647, %v5455
      %v5530 = vand.u32 2147483647, %v5458
      %v5531 = vsub.f32 0.0, %v5499
      %v5532 = vsub.f32 0.0, %v5500
      %v5533 = vsub.f32 0.0, %v5501
      %v5534 = vsub.f32 0.0, %v5502
      %v5535 = vsub.f32 0.0, %v5503
      %v5536 = vsub.f32 0.0, %v5504
      %v5537 = vsub.f32 0.0, %v5505
      %v5538 = vsub.f32 0.0, %v5506
      %v5539 = vsub.f32 0.0, %v5507
      %v5540 = vsub.f32 0.0, %v5508
      %v5541 = vsub.f32 0.0, %v5509
      %v5542 = vsub.f32 0.0, %v5510
      %v5543 = vsub.f32 0.0, %v5511
      %v5544 = vsub.f32 0.0, %v5512
      %v5545 = vsub.f32 0.0, %v5513
      %v5546 = vsub.f32 0.0, %v5514
      %v5547 = vsub.f32 0.0, %v5515
      %v5548 = vsub.f32 0.0, %v5516
      %v5549 = vsub.f32 0.0, %v5517
      %v5550 = vsub.f32 0.0, %v5518
      %v5551 = vsub.f32 0.0, %v5519
      %v5552 = vsub.f32 0.0, %v5520
      %v5553 = vsub.f32 0.0, %v5521
      %v5554 = vsub.f32 0.0, %v5522
      %v5555 = vsub.f32 0.0, %v5523
      %v5556 = vsub.f32 0.0, %v5524
      %v5557 = vsub.f32 0.0, %v5525
      %v5558 = vsub.f32 0.0, %v5526
      %v5559 = vsub.f32 0.0, %v5527
      %v5560 = vsub.f32 0.0, %v5528
      %v5561 = vsub.f32 0.0, %v5529
      %v5562 = vsub.f32 0.0, %v5530
      %v5563 = vmul.f32 %v5531, 1.442695
      %v5564 = vpow.pop %v5563
      %v5565 = vmul.f32 %v5532, 1.442695
      %v5566 = vpow.pop %v5565
      %v5567 = vmul.f32 %v5533, 1.442695
      %v5568 = vpow.pop %v5567
      %v5569 = vmul.f32 %v5534, 1.442695
      %v5570 = vpow.pop %v5569
      %v5571 = vmul.f32 %v5535, 1.442695
      %v5572 = vpow.pop %v5571
      %v5573 = vmul.f32 %v5536, 1.442695
      %v5574 = vpow.pop %v5573
      %v5575 = vmul.f32 %v5537, 1.442695
      %v5576 = vpow.pop %v5575
      %v5577 = vmul.f32 %v5538, 1.442695
      %v5578 = vpow.pop %v5577
      %v5579 = vmul.f32 %v5539, 1.442695
      %v5580 = vpow.pop %v5579
      %v5581 = vmul.f32 %v5540, 1.442695
      %v5582 = vpow.pop %v5581
      %v5583 = vmul.f32 %v5541, 1.442695
      %v5584 = vpow.pop %v5583
      %v5585 = vmul.f32 %v5542, 1.442695
      %v5586 = vpow.pop %v5585
      %v5587 = vmul.f32 %v5543, 1.442695
      %v5588 = vpow.pop %v5587
      %v5589 = vmul.f32 %v5544, 1.442695
      %v5590 = vpow.pop %v5589
      %v5591 = vmul.f32 %v5545, 1.442695
      %v5592 = vpow.pop %v5591
      %v5593 = vmul.f32 %v5546, 1.442695
      %v5594 = vpow.pop %v5593
      %v5595 = vmul.f32 %v5547, 1.442695
      %v5596 = vpow.pop %v5595
      %v5597 = vmul.f32 %v5548, 1.442695
      %v5598 = vpow.pop %v5597
      %v5599 = vmul.f32 %v5549, 1.442695
      %v5600 = vpow.pop %v5599
      %v5601 = vmul.f32 %v5550, 1.442695
      %v5602 = vpow.pop %v5601
      %v5603 = vmul.f32 %v5551, 1.442695
      %v5604 = vpow.pop %v5603
      %v5605 = vmul.f32 %v5552, 1.442695
      %v5606 = vpow.pop %v5605
      %v5607 = vmul.f32 %v5553, 1.442695
      %v5608 = vpow.pop %v5607
      %v5609 = vmul.f32 %v5554, 1.442695
      %v5610 = vpow.pop %v5609
      %v5611 = vmul.f32 %v5555, 1.442695
      %v5612 = vpow.pop %v5611
      %v5613 = vmul.f32 %v5556, 1.442695
      %v5614 = vpow.pop %v5613
      %v5615 = vmul.f32 %v5557, 1.442695
      %v5616 = vpow.pop %v5615
      %v5617 = vmul.f32 %v5558, 1.442695
      %v5618 = vpow.pop %v5617
      %v5619 = vmul.f32 %v5559, 1.442695
      %v5620 = vpow.pop %v5619
      %v5621 = vmul.f32 %v5560, 1.442695
      %v5622 = vpow.pop %v5621
      %v5623 = vmul.f32 %v5561, 1.442695
      %v5624 = vpow.pop %v5623
      %v5625 = vmul.f32 %v5562, 1.442695
      %v5626 = vpow.pop %v5625
      %v5627 = vadd.f32 %v5564, 1.0
      %v5628 = vlog2.pop %v5627
      %v5629 = vmul.f32 %v5628, 0.6931472
      %v5630 = vmul.f32 -0.5, %v5564
      %v5631 = vadd.f32 %v5630, 1.0
      %v5632 = vmul.f32 %v5631, %v5564
      %v5633 = vand.u32 2147483647, %v5564
      %vm5634 = vcmp.lt.f32.partialorder %v5633, 0.0004427343
      %v5635 = vsel %vm5634, %v5632, %v5629
      %v5636 = vadd.f32 %v5566, 1.0
      %v5637 = vlog2.pop %v5636
      %v5638 = vmul.f32 %v5637, 0.6931472
      %v5639 = vmul.f32 -0.5, %v5566
      %v5640 = vadd.f32 %v5639, 1.0
      %v5641 = vmul.f32 %v5640, %v5566
      %v5642 = vand.u32 2147483647, %v5566
      %vm5643 = vcmp.lt.f32.partialorder %v5642, 0.0004427343
      %v5644 = vsel %vm5643, %v5641, %v5638
      %v5645 = vadd.f32 %v5568, 1.0
      %v5646 = vlog2.pop %v5645
      %v5647 = vmul.f32 %v5646, 0.6931472
      %v5648 = vmul.f32 -0.5, %v5568
      %v5649 = vadd.f32 %v5648, 1.0
      %v5650 = vmul.f32 %v5649, %v5568
      %v5651 = vand.u32 2147483647, %v5568
      %vm5652 = vcmp.lt.f32.partialorder %v5651, 0.0004427343
      %v5653 = vsel %vm5652, %v5650, %v5647
      %v5654 = vadd.f32 %v5570, 1.0
      %v5655 = vlog2.pop %v5654
      %v5656 = vmul.f32 %v5655, 0.6931472
      %v5657 = vmul.f32 -0.5, %v5570
      %v5658 = vadd.f32 %v5657, 1.0
      %v5659 = vmul.f32 %v5658, %v5570
      %v5660 = vand.u32 2147483647, %v5570
      %vm5661 = vcmp.lt.f32.partialorder %v5660, 0.0004427343
      %v5662 = vsel %vm5661, %v5659, %v5656
      %v5663 = vadd.f32 %v5572, 1.0
      %v5664 = vlog2.pop %v5663
      %v5665 = vmul.f32 %v5664, 0.6931472
      %v5666 = vmul.f32 -0.5, %v5572
      %v5667 = vadd.f32 %v5666, 1.0
      %v5668 = vmul.f32 %v5667, %v5572
      %v5669 = vand.u32 2147483647, %v5572
      %vm5670 = vcmp.lt.f32.partialorder %v5669, 0.0004427343
      %v5671 = vsel %vm5670, %v5668, %v5665
      %v5672 = vadd.f32 %v5574, 1.0
      %v5673 = vlog2.pop %v5672
      %v5674 = vmul.f32 %v5673, 0.6931472
      %v5675 = vmul.f32 -0.5, %v5574
      %v5676 = vadd.f32 %v5675, 1.0
      %v5677 = vmul.f32 %v5676, %v5574
      %v5678 = vand.u32 2147483647, %v5574
      %vm5679 = vcmp.lt.f32.partialorder %v5678, 0.0004427343
      %v5680 = vsel %vm5679, %v5677, %v5674
      %v5681 = vadd.f32 %v5576, 1.0
      %v5682 = vlog2.pop %v5681
      %v5683 = vmul.f32 %v5682, 0.6931472
      %v5684 = vmul.f32 -0.5, %v5576
      %v5685 = vadd.f32 %v5684, 1.0
      %v5686 = vmul.f32 %v5685, %v5576
      %v5687 = vand.u32 2147483647, %v5576
      %vm5688 = vcmp.lt.f32.partialorder %v5687, 0.0004427343
      %v5689 = vsel %vm5688, %v5686, %v5683
      %v5690 = vadd.f32 %v5578, 1.0
      %v5691 = vlog2.pop %v5690
      %v5692 = vmul.f32 %v5691, 0.6931472
      %v5693 = vmul.f32 -0.5, %v5578
      %v5694 = vadd.f32 %v5693, 1.0
      %v5695 = vmul.f32 %v5694, %v5578
      %v5696 = vand.u32 2147483647, %v5578
      %vm5697 = vcmp.lt.f32.partialorder %v5696, 0.0004427343
      %v5698 = vsel %vm5697, %v5695, %v5692
      %v5699 = vadd.f32 %v5580, 1.0
      %v5700 = vlog2.pop %v5699
      %v5701 = vmul.f32 %v5700, 0.6931472
      %v5702 = vmul.f32 -0.5, %v5580
      %v5703 = vadd.f32 %v5702, 1.0
      %v5704 = vmul.f32 %v5703, %v5580
      %v5705 = vand.u32 2147483647, %v5580
      %vm5706 = vcmp.lt.f32.partialorder %v5705, 0.0004427343
      %v5707 = vsel %vm5706, %v5704, %v5701
      %v5708 = vadd.f32 %v5582, 1.0
      %v5709 = vlog2.pop %v5708
      %v5710 = vmul.f32 %v5709, 0.6931472
      %v5711 = vmul.f32 -0.5, %v5582
      %v5712 = vadd.f32 %v5711, 1.0
      %v5713 = vmul.f32 %v5712, %v5582
      %v5714 = vand.u32 2147483647, %v5582
      %vm5715 = vcmp.lt.f32.partialorder %v5714, 0.0004427343
      %v5716 = vsel %vm5715, %v5713, %v5710
      %v5717 = vadd.f32 %v5584, 1.0
      %v5718 = vlog2.pop %v5717
      %v5719 = vmul.f32 %v5718, 0.6931472
      %v5720 = vmul.f32 -0.5, %v5584
      %v5721 = vadd.f32 %v5720, 1.0
      %v5722 = vmul.f32 %v5721, %v5584
      %v5723 = vand.u32 2147483647, %v5584
      %vm5724 = vcmp.lt.f32.partialorder %v5723, 0.0004427343
      %v5725 = vsel %vm5724, %v5722, %v5719
      %v5726 = vadd.f32 %v5586, 1.0
      %v5727 = vlog2.pop %v5726
      %v5728 = vmul.f32 %v5727, 0.6931472
      %v5729 = vmul.f32 -0.5, %v5586
      %v5730 = vadd.f32 %v5729, 1.0
      %v5731 = vmul.f32 %v5730, %v5586
      %v5732 = vand.u32 2147483647, %v5586
      %vm5733 = vcmp.lt.f32.partialorder %v5732, 0.0004427343
      %v5734 = vsel %vm5733, %v5731, %v5728
      %v5735 = vadd.f32 %v5588, 1.0
      %v5736 = vlog2.pop %v5735
      %v5737 = vmul.f32 %v5736, 0.6931472
      %v5738 = vmul.f32 -0.5, %v5588
      %v5739 = vadd.f32 %v5738, 1.0
      %v5740 = vmul.f32 %v5739, %v5588
      %v5741 = vand.u32 2147483647, %v5588
      %vm5742 = vcmp.lt.f32.partialorder %v5741, 0.0004427343
      %v5743 = vsel %vm5742, %v5740, %v5737
      %v5744 = vadd.f32 %v5590, 1.0
      %v5745 = vlog2.pop %v5744
      %v5746 = vmul.f32 %v5745, 0.6931472
      %v5747 = vmul.f32 -0.5, %v5590
      %v5748 = vadd.f32 %v5747, 1.0
      %v5749 = vmul.f32 %v5748, %v5590
      %v5750 = vand.u32 2147483647, %v5590
      %vm5751 = vcmp.lt.f32.partialorder %v5750, 0.0004427343
      %v5752 = vsel %vm5751, %v5749, %v5746
      %v5753 = vadd.f32 %v5592, 1.0
      %v5754 = vlog2.pop %v5753
      %v5755 = vmul.f32 %v5754, 0.6931472
      %v5756 = vmul.f32 -0.5, %v5592
      %v5757 = vadd.f32 %v5756, 1.0
      %v5758 = vmul.f32 %v5757, %v5592
      %v5759 = vand.u32 2147483647, %v5592
      %vm5760 = vcmp.lt.f32.partialorder %v5759, 0.0004427343
      %v5761 = vsel %vm5760, %v5758, %v5755
      %v5762 = vadd.f32 %v5594, 1.0
      %v5763 = vlog2.pop %v5762
      %v5764 = vmul.f32 %v5763, 0.6931472
      %v5765 = vmul.f32 -0.5, %v5594
      %v5766 = vadd.f32 %v5765, 1.0
      %v5767 = vmul.f32 %v5766, %v5594
      %v5768 = vand.u32 2147483647, %v5594
      %vm5769 = vcmp.lt.f32.partialorder %v5768, 0.0004427343
      %v5770 = vsel %vm5769, %v5767, %v5764
      %v5771 = vadd.f32 %v5596, 1.0
      %v5772 = vlog2.pop %v5771
      %v5773 = vmul.f32 %v5772, 0.6931472
      %v5774 = vmul.f32 -0.5, %v5596
      %v5775 = vadd.f32 %v5774, 1.0
      %v5776 = vmul.f32 %v5775, %v5596
      %v5777 = vand.u32 2147483647, %v5596
      %vm5778 = vcmp.lt.f32.partialorder %v5777, 0.0004427343
      %v5779 = vsel %vm5778, %v5776, %v5773
      %v5780 = vadd.f32 %v5598, 1.0
      %v5781 = vlog2.pop %v5780
      %v5782 = vmul.f32 %v5781, 0.6931472
      %v5783 = vmul.f32 -0.5, %v5598
      %v5784 = vadd.f32 %v5783, 1.0
      %v5785 = vmul.f32 %v5784, %v5598
      %v5786 = vand.u32 2147483647, %v5598
      %vm5787 = vcmp.lt.f32.partialorder %v5786, 0.0004427343
      %v5788 = vsel %vm5787, %v5785, %v5782
      %v5789 = vadd.f32 %v5600, 1.0
      %v5790 = vlog2.pop %v5789
      %v5791 = vmul.f32 %v5790, 0.6931472
      %v5792 = vmul.f32 -0.5, %v5600
      %v5793 = vadd.f32 %v5792, 1.0
      %v5794 = vmul.f32 %v5793, %v5600
      %v5795 = vand.u32 2147483647, %v5600
      %vm5796 = vcmp.lt.f32.partialorder %v5795, 0.0004427343
      %v5797 = vsel %vm5796, %v5794, %v5791
      %v5798 = vadd.f32 %v5602, 1.0
      %v5799 = vlog2.pop %v5798
      %v5800 = vmul.f32 %v5799, 0.6931472
      %v5801 = vmul.f32 -0.5, %v5602
      %v5802 = vadd.f32 %v5801, 1.0
      %v5803 = vmul.f32 %v5802, %v5602
      %v5804 = vand.u32 2147483647, %v5602
      %vm5805 = vcmp.lt.f32.partialorder %v5804, 0.0004427343
      %v5806 = vsel %vm5805, %v5803, %v5800
      %v5807 = vadd.f32 %v5604, 1.0
      %v5808 = vlog2.pop %v5807
      %v5809 = vmul.f32 %v5808, 0.6931472
      %v5810 = vmul.f32 -0.5, %v5604
      %v5811 = vadd.f32 %v5810, 1.0
      %v5812 = vmul.f32 %v5811, %v5604
      %v5813 = vand.u32 2147483647, %v5604
      %vm5814 = vcmp.lt.f32.partialorder %v5813, 0.0004427343
      %v5815 = vsel %vm5814, %v5812, %v5809
      %v5816 = vadd.f32 %v5606, 1.0
      %v5817 = vlog2.pop %v5816
      %v5818 = vmul.f32 %v5817, 0.6931472
      %v5819 = vmul.f32 -0.5, %v5606
      %v5820 = vadd.f32 %v5819, 1.0
      %v5821 = vmul.f32 %v5820, %v5606
      %v5822 = vand.u32 2147483647, %v5606
      %vm5823 = vcmp.lt.f32.partialorder %v5822, 0.0004427343
      %v5824 = vsel %vm5823, %v5821, %v5818
      %v5825 = vadd.f32 %v5608, 1.0
      %v5826 = vlog2.pop %v5825
      %v5827 = vmul.f32 %v5826, 0.6931472
      %v5828 = vmul.f32 -0.5, %v5608
      %v5829 = vadd.f32 %v5828, 1.0
      %v5830 = vmul.f32 %v5829, %v5608
      %v5831 = vand.u32 2147483647, %v5608
      %vm5832 = vcmp.lt.f32.partialorder %v5831, 0.0004427343
      %v5833 = vsel %vm5832, %v5830, %v5827
      %v5834 = vadd.f32 %v5610, 1.0
      %v5835 = vlog2.pop %v5834
      %v5836 = vmul.f32 %v5835, 0.6931472
      %v5837 = vmul.f32 -0.5, %v5610
      %v5838 = vadd.f32 %v5837, 1.0
      %v5839 = vmul.f32 %v5838, %v5610
      %v5840 = vand.u32 2147483647, %v5610
      %vm5841 = vcmp.lt.f32.partialorder %v5840, 0.0004427343
      %v5842 = vsel %vm5841, %v5839, %v5836
      %v5843 = vadd.f32 %v5612, 1.0
      %v5844 = vlog2.pop %v5843
      %v5845 = vmul.f32 %v5844, 0.6931472
      %v5846 = vmul.f32 -0.5, %v5612
      %v5847 = vadd.f32 %v5846, 1.0
      %v5848 = vmul.f32 %v5847, %v5612
      %v5849 = vand.u32 2147483647, %v5612
      %vm5850 = vcmp.lt.f32.partialorder %v5849, 0.0004427343
      %v5851 = vsel %vm5850, %v5848, %v5845
      %v5852 = vadd.f32 %v5614, 1.0
      %v5853 = vlog2.pop %v5852
      %v5854 = vmul.f32 %v5853, 0.6931472
      %v5855 = vmul.f32 -0.5, %v5614
      %v5856 = vadd.f32 %v5855, 1.0
      %v5857 = vmul.f32 %v5856, %v5614
      %v5858 = vand.u32 2147483647, %v5614
      %vm5859 = vcmp.lt.f32.partialorder %v5858, 0.0004427343
      %v5860 = vsel %vm5859, %v5857, %v5854
      %v5861 = vadd.f32 %v5616, 1.0
      %v5862 = vlog2.pop %v5861
      %v5863 = vmul.f32 %v5862, 0.6931472
      %v5864 = vmul.f32 -0.5, %v5616
      %v5865 = vadd.f32 %v5864, 1.0
      %v5866 = vmul.f32 %v5865, %v5616
      %v5867 = vand.u32 2147483647, %v5616
      %vm5868 = vcmp.lt.f32.partialorder %v5867, 0.0004427343
      %v5869 = vsel %vm5868, %v5866, %v5863
      %v5870 = vadd.f32 %v5618, 1.0
      %v5871 = vlog2.pop %v5870
      %v5872 = vmul.f32 %v5871, 0.6931472
      %v5873 = vmul.f32 -0.5, %v5618
      %v5874 = vadd.f32 %v5873, 1.0
      %v5875 = vmul.f32 %v5874, %v5618
      %v5876 = vand.u32 2147483647, %v5618
      %vm5877 = vcmp.lt.f32.partialorder %v5876, 0.0004427343
      %v5878 = vsel %vm5877, %v5875, %v5872
      %v5879 = vadd.f32 %v5620, 1.0
      %v5880 = vlog2.pop %v5879
      %v5881 = vmul.f32 %v5880, 0.6931472
      %v5882 = vmul.f32 -0.5, %v5620
      %v5883 = vadd.f32 %v5882, 1.0
      %v5884 = vmul.f32 %v5883, %v5620
      %v5885 = vand.u32 2147483647, %v5620
      %vm5886 = vcmp.lt.f32.partialorder %v5885, 0.0004427343
      %v5887 = vsel %vm5886, %v5884, %v5881
      %v5888 = vadd.f32 %v5622, 1.0
      %v5889 = vlog2.pop %v5888
      %v5890 = vmul.f32 %v5889, 0.6931472
      %v5891 = vmul.f32 -0.5, %v5622
      %v5892 = vadd.f32 %v5891, 1.0
      %v5893 = vmul.f32 %v5892, %v5622
      %v5894 = vand.u32 2147483647, %v5622
      %vm5895 = vcmp.lt.f32.partialorder %v5894, 0.0004427343
      %v5896 = vsel %vm5895, %v5893, %v5890
      %v5897 = vadd.f32 %v5624, 1.0
      %v5898 = vlog2.pop %v5897
      %v5899 = vmul.f32 %v5898, 0.6931472
      %v5900 = vmul.f32 -0.5, %v5624
      %v5901 = vadd.f32 %v5900, 1.0
      %v5902 = vmul.f32 %v5901, %v5624
      %v5903 = vand.u32 2147483647, %v5624
      %vm5904 = vcmp.lt.f32.partialorder %v5903, 0.0004427343
      %v5905 = vsel %vm5904, %v5902, %v5899
      %v5906 = vadd.f32 %v5626, 1.0
      %v5907 = vlog2.pop %v5906
      %v5908 = vmul.f32 %v5907, 0.6931472
      %v5909 = vmul.f32 -0.5, %v5626
      %v5910 = vadd.f32 %v5909, 1.0
      %v5911 = vmul.f32 %v5910, %v5626
      %v5912 = vand.u32 2147483647, %v5626
      %vm5913 = vcmp.lt.f32.partialorder %v5912, 0.0004427343
      %v5914 = vsel %vm5913, %v5911, %v5908
      %v5915 = vadd.f32 %v5467, %v5635
      %v5916 = vadd.f32 %v5468, %v5644
      %v5917 = vadd.f32 %v5469, %v5653
      %v5918 = vadd.f32 %v5470, %v5662
      %v5919 = vadd.f32 %v5471, %v5671
      %v5920 = vadd.f32 %v5472, %v5680
      %v5921 = vadd.f32 %v5473, %v5689
      %v5922 = vadd.f32 %v5474, %v5698
      %v5923 = vadd.f32 %v5475, %v5707
      %v5924 = vadd.f32 %v5476, %v5716
      %v5925 = vadd.f32 %v5477, %v5725
      %v5926 = vadd.f32 %v5478, %v5734
      %v5927 = vadd.f32 %v5479, %v5743
      %v5928 = vadd.f32 %v5480, %v5752
      %v5929 = vadd.f32 %v5481, %v5761
      %v5930 = vadd.f32 %v5482, %v5770
      %v5931 = vadd.f32 %v5483, %v5779
      %v5932 = vadd.f32 %v5484, %v5788
      %v5933 = vadd.f32 %v5485, %v5797
      %v5934 = vadd.f32 %v5486, %v5806
      %v5935 = vadd.f32 %v5487, %v5815
      %v5936 = vadd.f32 %v5488, %v5824
      %v5937 = vadd.f32 %v5489, %v5833
      %v5938 = vadd.f32 %v5490, %v5842
      %v5939 = vadd.f32 %v5491, %v5851
      %v5940 = vadd.f32 %v5492, %v5860
      %v5941 = vadd.f32 %v5493, %v5869
      %v5942 = vadd.f32 %v5494, %v5878
      %v5943 = vadd.f32 %v5495, %v5887
      %v5944 = vadd.f32 %v5496, %v5896
      %v5945 = vadd.f32 %v5497, %v5905
      %v5946 = vadd.f32 %v5498, %v5914
      %v5947 = vtanh.pop %v5335
      %v5948 = vtanh.pop %v5338
      %v5949 = vtanh.pop %v5343
      %v5950 = vtanh.pop %v5346
      %v5951 = vtanh.pop %v5351
      %v5952 = vtanh.pop %v5354
      %v5953 = vtanh.pop %v5359
      %v5954 = vtanh.pop %v5362
      %v5955 = vtanh.pop %v5367
      %v5956 = vtanh.pop %v5370
      %v5957 = vtanh.pop %v5375
      %v5958 = vtanh.pop %v5378
      %v5959 = vtanh.pop %v5383
      %v5960 = vtanh.pop %v5386
      %v5961 = vtanh.pop %v5391
      %v5962 = vtanh.pop %v5394
      %v5963 = vtanh.pop %v5399
      %v5964 = vtanh.pop %v5402
      %v5965 = vtanh.pop %v5407
      %v5966 = vtanh.pop %v5410
      %v5967 = vtanh.pop %v5415
      %v5968 = vtanh.pop %v5418
      %v5969 = vtanh.pop %v5423
      %v5970 = vtanh.pop %v5426
      %v5971 = vtanh.pop %v5431
      %v5972 = vtanh.pop %v5434
      %v5973 = vtanh.pop %v5439
      %v5974 = vtanh.pop %v5442
      %v5975 = vtanh.pop %v5447
      %v5976 = vtanh.pop %v5450
      %v5977 = vtanh.pop %v5455
      %v5978 = vtanh.pop %v5458
      %v5979 = vmul.f32 %v5947, 180.0
      %v5980 = vmul.f32 %v5948, 180.0
      %v5981 = vmul.f32 %v5949, 180.0
      %v5982 = vmul.f32 %v5950, 180.0
      %v5983 = vmul.f32 %v5951, 180.0
      %v5984 = vmul.f32 %v5952, 180.0
      %v5985 = vmul.f32 %v5953, 180.0
      %v5986 = vmul.f32 %v5954, 180.0
      %v5987 = vmul.f32 %v5955, 180.0
      %v5988 = vmul.f32 %v5956, 180.0
      %v5989 = vmul.f32 %v5957, 180.0
      %v5990 = vmul.f32 %v5958, 180.0
      %v5991 = vmul.f32 %v5959, 180.0
      %v5992 = vmul.f32 %v5960, 180.0
      %v5993 = vmul.f32 %v5961, 180.0
      %v5994 = vmul.f32 %v5962, 180.0
      %v5995 = vmul.f32 %v5963, 180.0
      %v5996 = vmul.f32 %v5964, 180.0
      %v5997 = vmul.f32 %v5965, 180.0
      %v5998 = vmul.f32 %v5966, 180.0
      %v5999 = vmul.f32 %v5967, 180.0
      %v6000 = vmul.f32 %v5968, 180.0
      %v6001 = vmul.f32 %v5969, 180.0
      %v6002 = vmul.f32 %v5970, 180.0
      %v6003 = vmul.f32 %v5971, 180.0
      %v6004 = vmul.f32 %v5972, 180.0
      %v6005 = vmul.f32 %v5973, 180.0
      %v6006 = vmul.f32 %v5974, 180.0
      %v6007 = vmul.f32 %v5975, 180.0
      %v6008 = vmul.f32 %v5976, 180.0
      %v6009 = vmul.f32 %v5977, 180.0
      %v6010 = vmul.f32 %v5978, 180.0
      %v6011 = vsel %vm5463, %v5979, %v5335
      %v6012 = vsel %vm5463, %v5980, %v5338
      %v6013 = vsel %vm5463, %v5981, %v5343
      %v6014 = vsel %vm5463, %v5982, %v5346
      %v6015 = vsel %vm5463, %v5983, %v5351
      %v6016 = vsel %vm5463, %v5984, %v5354
      %v6017 = vsel %vm5463, %v5985, %v5359
      %v6018 = vsel %vm5463, %v5986, %v5362
      %v6019 = vsel %vm5463, %v5987, %v5367
      %v6020 = vsel %vm5463, %v5988, %v5370
      %v6021 = vsel %vm5463, %v5989, %v5375
      %v6022 = vsel %vm5463, %v5990, %v5378
      %v6023 = vsel %vm5463, %v5991, %v5383
      %v6024 = vsel %vm5463, %v5992, %v5386
      %v6025 = vsel %vm5463, %v5993, %v5391
      %v6026 = vsel %vm5463, %v5994, %v5394
      %v6027 = vsel %vm5463, %v5995, %v5399
      %v6028 = vsel %vm5463, %v5996, %v5402
      %v6029 = vsel %vm5463, %v5997, %v5407
      %v6030 = vsel %vm5463, %v5998, %v5410
      %v6031 = vsel %vm5463, %v5999, %v5415
      %v6032 = vsel %vm5463, %v6000, %v5418
      %v6033 = vsel %vm5463, %v6001, %v5423
      %v6034 = vsel %vm5463, %v6002, %v5426
      %v6035 = vsel %vm5463, %v6003, %v5431
      %v6036 = vsel %vm5463, %v6004, %v5434
      %v6037 = vsel %vm5463, %v6005, %v5439
      %v6038 = vsel %vm5463, %v6006, %v5442
      %v6039 = vsel %vm5463, %v6007, %v5447
      %v6040 = vsel %vm5463, %v6008, %v5450
      %v6041 = vsel %vm5463, %v6009, %v5455
      %v6042 = vsel %vm5463, %v6010, %v5458
      %v6043 = vsel %vm5466, %v5915, %v6011
      %v6044 = vsel %vm5466, %v5916, %v6012
      %v6045 = vsel %vm5466, %v5917, %v6013
      %v6046 = vsel %vm5466, %v5918, %v6014
      %v6047 = vsel %vm5466, %v5919, %v6015
      %v6048 = vsel %vm5466, %v5920, %v6016
      %v6049 = vsel %vm5466, %v5921, %v6017
      %v6050 = vsel %vm5466, %v5922, %v6018
      %v6051 = vsel %vm5466, %v5923, %v6019
      %v6052 = vsel %vm5466, %v5924, %v6020
      %v6053 = vsel %vm5466, %v5925, %v6021
      %v6054 = vsel %vm5466, %v5926, %v6022
      %v6055 = vsel %vm5466, %v5927, %v6023
      %v6056 = vsel %vm5466, %v5928, %v6024
      %v6057 = vsel %vm5466, %v5929, %v6025
      %v6058 = vsel %vm5466, %v5930, %v6026
      %v6059 = vsel %vm5466, %v5931, %v6027
      %v6060 = vsel %vm5466, %v5932, %v6028
      %v6061 = vsel %vm5466, %v5933, %v6029
      %v6062 = vsel %vm5466, %v5934, %v6030
      %v6063 = vsel %vm5466, %v5935, %v6031
      %v6064 = vsel %vm5466, %v5936, %v6032
      %v6065 = vsel %vm5466, %v5937, %v6033
      %v6066 = vsel %vm5466, %v5938, %v6034
      %v6067 = vsel %vm5466, %v5939, %v6035
      %v6068 = vsel %vm5466, %v5940, %v6036
      %v6069 = vsel %vm5466, %v5941, %v6037
      %v6070 = vsel %vm5466, %v5942, %v6038
      %v6071 = vsel %vm5466, %v5943, %v6039
      %v6072 = vsel %vm5466, %v5944, %v6040
      %v6073 = vsel %vm5466, %v5945, %v6041
      %v6074 = vsel %vm5466, %v5946, %v6042
      %6075 = vst [vmem:[%s396] sm:$0xff] %v6043
      %6076 = vst [vmem:[%s396 + $0x8] sm:$0xff] %v6044
      %6077 = vst [vmem:[%s396 + $0x10] sm:$0xff] %v6045
      %6078 = vst [vmem:[%s396 + $0x18] sm:$0xff] %v6046
      %6079 = vst [vmem:[%s396 + $0x20] sm:$0xff] %v6047
      %6080 = vst [vmem:[%s396 + $0x28] sm:$0xff] %v6048
      %6081 = vst [vmem:[%s396 + $0x30] sm:$0xff] %v6049
      %6082 = vst [vmem:[%s396 + $0x38] sm:$0xff] %v6050
      %6083 = vst [vmem:[%s396 + $0x40] sm:$0xff] %v6051
      %6084 = vst [vmem:[%s396 + $0x48] sm:$0xff] %v6052
      %6085 = vst [vmem:[%s396 + $0x50] sm:$0xff] %v6053
      %6086 = vst [vmem:[%s396 + $0x58] sm:$0xff] %v6054
      %6087 = vst [vmem:[%s396 + $0x60] sm:$0xff] %v6055
      %6088 = vst [vmem:[%s396 + $0x68] sm:$0xff] %v6056
      %6089 = vst [vmem:[%s396 + $0x70] sm:$0xff] %v6057
      %6090 = vst [vmem:[%s396 + $0x78] sm:$0xff] %v6058
      %6091 = vst [vmem:[%s396 + $0x80] sm:$0xff] %v6059
      %6092 = vst [vmem:[%s396 + $0x88] sm:$0xff] %v6060
      %6093 = vst [vmem:[%s396 + $0x90] sm:$0xff] %v6061
      %6094 = vst [vmem:[%s396 + $0x98] sm:$0xff] %v6062
      %6095 = vst [vmem:[%s396 + $0xa0] sm:$0xff] %v6063
      %6096 = vst [vmem:[%s396 + $0xa8] sm:$0xff] %v6064
      %6097 = vst [vmem:[%s396 + $0xb0] sm:$0xff] %v6065
      %6098 = vst [vmem:[%s396 + $0xb8] sm:$0xff] %v6066
      %6099 = vst [vmem:[%s396 + $0xc0] sm:$0xff] %v6067
      %6100 = vst [vmem:[%s396 + $0xc8] sm:$0xff] %v6068
      %6101 = vst [vmem:[%s396 + $0xd0] sm:$0xff] %v6069
      %6102 = vst [vmem:[%s396 + $0xd8] sm:$0xff] %v6070
      %6103 = vst [vmem:[%s396 + $0xe0] sm:$0xff] %v6071
      %6104 = vst [vmem:[%s396 + $0xe8] sm:$0xff] %v6072
      %6105 = vst [vmem:[%s396 + $0xf0] sm:$0xff] %v6073
      %6106 = vst [vmem:[%s396 + $0xf8] sm:$0xff] %v6074
      %s6107 = smul.u32 32, %s21
      %p6108 = scmp.lt.s32.totalorder %s6107, 63
      %s6109 = scalar_select %p6108, %s6107, 63
      %s6110 = smul.addr %s6109, 8
      %s6111 = scalar_lea.vmem %s10, %s6110
      // Predicated region
      $region61: #{forward.1} parent=59 // pred_check
        %p6112 = pneg %p264
      $region62: #{forward.1} parent=59 // pred_check_branch
        %6114 = sbr.rel (%p6112) target = $region64
      $region63: #{forward.1} parent=59 // pred_region
        %s6115 = smul.u32 32, %s21
      $region64: #{forward.1} parent=59 // pred_fallthru
        _
    $region60: #{forward.1} parent=5 // pred_fallthru
      _
    %p6116 = scmp.le.s32.totalorder 2, %s16
    // Predicated region
    $region65: #{forward.1} parent=5 // pred_check
      %p6117 = pneg %p6116
    $region66: #{forward.1} parent=5 // pred_check_branch
      %6119 = sbr.rel (%p6117) target = $region68
    $region67: #{forward.1} parent=5 // pred_region
      %s6120 = ssub.s32 %s16, 2
      // Predicated region
      $region69: #{forward.1} parent=67 // pred_check
        %p6121 = pneg %p270
      $region70: #{forward.1} parent=67 // pred_check_branch
        %6123 = sbr.rel (%p6121) target = $region72
      $region71: #{forward.1} parent=67 // pred_region
        %s6124 = smul.u32 32, %s22
        %p6125 = scmp.lt.s32.totalorder %s6124, 63
        %s6126 = scalar_select %p6125, %s6124, 63
        %s6127 = smul.addr %s6126, 8
        %s6128 = scalar_lea.vmem %s10, %s6127
      $region72: #{forward.1} parent=67 // pred_fallthru
        _
    $region68: #{forward.1} parent=5 // pred_fallthru
      _
  $region6: #{forward.1} parent=0 // loop_footer
    %s20 = sadd.s32 1, %s16
  $region7: #{forward.1} parent=0 // loop_footer_branch
    %15 = sbr.rel target = $region3
  $region8: #{forward.1} parent=0 // loop_exit
    _

</llo_original>
